<compile_context>
chip_gen: v6e
topology: v6e:2x2x1
jax: 0.10.0
libtpu: 0.0.40
codegen_flags: <defaults>
</compile_context>

<pallas_src>
import math
from functools import partial

import jax
import jax.numpy as jnp
from jax import lax
from jax.experimental import pallas as pl
from jax.experimental.pallas import tpu as pltpu

# ---------------- config (small, consistent with the module) ----------------
VOCAB = 64
N_POS = 16
N_EMBD = 32
N_HEAD = 4
N_LAYER = 2
HEAD_DIM = N_EMBD // N_HEAD
MLP_HIDDEN = 4 * N_EMBD
USE_WPE = True
LN_EPS = 1e-5                    # torch.nn.LayerNorm default
V_PAD = 128                      # lane-dense lm_head output width (>= VOCAB)
VEC_W = 128                      # lane width of the packed bias/LN-param slab
MXU_DTYPE = jnp.bfloat16         # MXU operand dtype; jnp.float32 for exact parity
GELU_APPROX = True               # tanh-GELU (EUP); False = exact erf (torch default)
EMB_ROWS = VOCAB + (N_POS if USE_WPE else 0)


def _layernorm(x, g, b):
    mu = jnp.mean(x, axis=-1, keepdims=True)
    var = jnp.mean((x - mu) ** 2, axis=-1, keepdims=True)
    return (x - mu) * lax.rsqrt(var + LN_EPS) * g + b


def _mm(a, w):
    """MXU matmul: activation cast to bf16, weight already pre-cast, f32 accumulate."""
    return jnp.dot(a.astype(MXU_DTYPE), w, preferred_element_type=jnp.float32)


# ----------------------- fused whole-forward kernel --------------------------
def fused_lm_kernel(ids_ref, emb_ref, wqkv_ref, wo_ref, wfc_ref, wpr_ref,
                    vec_ref, wteT_ref, out_ref, *, batch, seq):
    n = batch * seq

    # ---- fused token + positional embedding: one-hot @ [wte; wpe] (exact f32) ----
    col = lax.broadcasted_iota(jnp.int32, (batch, seq, EMB_ROWS), 2)
    onehot = (col == ids_ref[...]).astype(jnp.float32)            # token one-hot
    if USE_WPE:
        pos = lax.broadcasted_iota(jnp.int32, (batch, seq, EMB_ROWS), 1)
        onehot = onehot + (col == (VOCAB + pos)).astype(jnp.float32)   # + pos one-hot
    x = jnp.dot(onehot.reshape(n, EMB_ROWS), emb_ref[...],
                preferred_element_type=jnp.float32)               # (N, D) f32

    def vrow(r, width):                       # packed LN params / biases, (1, width) f32
        return vec_ref[pl.ds(r, 1), pl.ds(0, width)]

    # causal-mask bias: built ONCE, reused across layers & heads (scores stay f32)
    rr = lax.broadcasted_iota(jnp.int32, (seq, seq), 0)
    cc = lax.broadcasted_iota(jnp.int32, (seq, seq), 1)
    mask_bias = jnp.where(rr >= cc, 0.0, -1e30).astype(jnp.float32)[None]   # (1, T, T)
    scale = jnp.float32(1.0 / math.sqrt(HEAD_DIM))

    for l in range(N_LAYER):                                      # static unroll
        base = 8 * l
        # -------- attention sub-block (pre-LN): fused QKV + full-width c_proj ----
        h1 = _layernorm(x, vrow(base + 0, N_EMBD), vrow(base + 1, N_EMBD))
        qkv = _mm(h1, wqkv_ref[l]) + vrow(base + 2, 3 * N_EMBD)   # (N, 3D) f32
        heads = []
        for hh in range(N_HEAD):              # per-head softmax math only (Hd=8)
            q0 = hh * HEAD_DIM
            k0 = N_EMBD + hh * HEAD_DIM
            v0 = 2 * N_EMBD + hh * HEAD_DIM
            qh = qkv[:, q0:q0 + HEAD_DIM].reshape(batch, seq, HEAD_DIM)
            kh = qkv[:, k0:k0 + HEAD_DIM].reshape(batch, seq, HEAD_DIM)
            vh = qkv[:, v0:v0 + HEAD_DIM].reshape(batch, seq, HEAD_DIM)
            att = jnp.einsum('btk,bsk->bts',
                             qh.astype(MXU_DTYPE), kh.astype(MXU_DTYPE),
                             preferred_element_type=jnp.float32) * scale
            att = att + mask_bias
            att = att - jnp.max(att, axis=-1, keepdims=True)
            p = jnp.exp(att)
            p = p * pl.reciprocal(jnp.sum(p, axis=-1, keepdims=True), approx=True)
            o = jnp.einsum('bts,bsk->btk',
                           p.astype(MXU_DTYPE), vh.astype(MXU_DTYPE),
                           preferred_element_type=jnp.float32)    # (B, T, Hd)
            heads.append(o.reshape(n, HEAD_DIM))
        attn = jnp.concatenate(heads, axis=-1)                    # (N, D)
        x = x + _mm(attn, wo_ref[l]) + vrow(base + 3, N_EMBD)

        # -------- MLP sub-block (pre-LN) --------
        h2 = _layernorm(x, vrow(base + 4, N_EMBD), vrow(base + 5, N_EMBD))
        m = _mm(h2, wfc_ref[l]) + vrow(base + 6, MLP_HIDDEN)
        m = jax.nn.gelu(m, approximate=GELU_APPROX)
        x = x + _mm(m, wpr_ref[l]) + vrow(base + 7, N_EMBD)

    # -------- final LayerNorm + tied lm_head (lane-dense padded output) --------
    hf = _layernorm(x, vrow(8 * N_LAYER, N_EMBD), vrow(8 * N_LAYER + 1, N_EMBD))
    out_ref[...] = _mm(hf, wteT_ref[...]).reshape(batch, seq, V_PAD)


# ------------------------------- forward pass --------------------------------
def run_transformer_lm_head(prep, input_ids):
    B, T = input_ids.shape
    assert T <= N_POS
    ids = input_ids.astype(jnp.int32).reshape(B, T, 1)            # tiny int32 ref
    vmem = pl.BlockSpec(memory_space=pltpu.MemorySpace.VMEM)
    args = (ids, prep['emb'], prep['w_qkv'], prep['w_o'], prep['w_fc'],
            prep['w_pr'], prep['vec'], prep['wteT'])
    logits_pad = pl.pallas_call(
        partial(fused_lm_kernel, batch=B, seq=T),
        out_shape=jax.ShapeDtypeStruct((B, T, V_PAD), jnp.float32),
        in_specs=[vmem] * len(args),
        out_specs=vmem,
    )(*args)
    # padded columns are exact zeros; safe only because we slice before any consumer
    return logits_pad[..., :VOCAB]


transformer_lm_head_forward = jax.jit(run_transformer_lm_head)


# ------------------------------ parameter init -------------------------------
def init_params(key):
    ks = jax.random.split(key, 2 + 4 * N_LAYER)
    i = 0

    def nrm(k, shape, std=0.02):
        return jax.random.normal(k, shape, jnp.float32) * std

    wte = nrm(ks[i], (VOCAB, N_EMBD)); i += 1
    wpe = nrm(ks[i], (N_POS, N_EMBD)); i += 1

    c_proj_std = 0.02 / math.sqrt(2 * N_LAYER)
    layers = []
    for _ in range(N_LAYER):
        layers.append(dict(
            ln1_g=jnp.ones((1, N_EMBD), jnp.float32),
            ln1_b=jnp.zeros((1, N_EMBD), jnp.float32),
            w_qkv=nrm(ks[i], (N_EMBD, 3 * N_EMBD)),                   # (in, out)
            b_qkv=jnp.zeros((1, 3 * N_EMBD), jnp.float32),
            w_o=nrm(ks[i + 1], (N_EMBD, N_EMBD), std=c_proj_std),     # attn c_proj
            b_o=jnp.zeros((1, N_EMBD), jnp.float32),
            ln2_g=jnp.ones((1, N_EMBD), jnp.float32),
            ln2_b=jnp.zeros((1, N_EMBD), jnp.float32),
            w_fc=nrm(ks[i + 2], (N_EMBD, MLP_HIDDEN)),
            b_fc=jnp.zeros((1, MLP_HIDDEN), jnp.float32),
            w_pr=nrm(ks[i + 3], (MLP_HIDDEN, N_EMBD), std=c_proj_std),  # mlp c_proj
            b_pr=jnp.zeros((1, N_EMBD), jnp.float32),
        ))
        i += 4

    return dict(wte=wte, wpe=wpe, layers=layers,
                ln_f_g=jnp.ones((1, N_EMBD), jnp.float32),
                ln_f_b=jnp.zeros((1, N_EMBD), jnp.float32))


def prepare_params(params):
    """Host-side, one-time packing into the kernel layout:
    4 stacked bf16 weight classes, one f32 (rows,128) slab with every LN param /
    bias, combined [wte;wpe] embedding table (f32), transposed+padded bf16 lm_head."""
    layers = params['layers']
    w_qkv = jnp.stack([lp['w_qkv'] for lp in layers]).astype(MXU_DTYPE)   # (L, D, 3D)
    w_o = jnp.stack([lp['w_o'] for lp in layers]).astype(MXU_DTYPE)       # (L, D, D)
    w_fc = jnp.stack([lp['w_fc'] for lp in layers]).astype(MXU_DTYPE)     # (L, D, 4D)
    w_pr = jnp.stack([lp['w_pr'] for lp in layers]).astype(MXU_DTYPE)     # (L, 4D, D)

    def row(v):
        v = jnp.asarray(v, jnp.float32).reshape(-1)
        return jnp.pad(v, (0, VEC_W - v.shape[0]))

    rows = []
    for lp in layers:
        rows += [row(lp['ln1_g']), row(lp['ln1_b']), row(lp['b_qkv']), row(lp['b_o']),
                 row(lp['ln2_g']), row(lp['ln2_b']), row(lp['b_fc']), row(lp['b_pr'])]
    rows += [row(params['ln_f_g']), row(params['ln_f_b'])]
    vec = jnp.stack(rows)                                                 # (8L+2, 128)

    emb = params['wte']
    if USE_WPE:
        emb = jnp.concatenate([emb, params['wpe']], axis=0)               # (V+P, D)
    wteT = jnp.pad(params['wte'].T, ((0, 0), (0, V_PAD - VOCAB))).astype(MXU_DTYPE)

    return dict(emb=emb.astype(jnp.float32), w_qkv=w_qkv, w_o=w_o,
                w_fc=w_fc, w_pr=w_pr, vec=vec, wteT=wteT)


if __name__ == "__main__":
    key = jax.random.PRNGKey(0)
    pkey, dkey = jax.random.split(key)
    params = init_params(pkey)
    prep = prepare_params(params)

    B, T = 2, 8
    input_ids = jax.random.randint(dkey, (B, T), 0, VOCAB, dtype=jnp.int32)

    logits = transformer_lm_head_forward(prep, input_ids)
    jax.block_until_ready(logits)
    assert logits.shape == (B, T, VOCAB)
    assert bool(jnp.all(jnp.isfinite(logits)))
    print("KERNEL_OK")
</pallas_src>

<mosaic_0001>
module attributes {stable_mosaic.version = 11 : i64} {
  func.func @fused_lm_kernel(%arg0: memref<2x8x1xi32, #tpu.memory_space<vmem>>, %arg1: memref<80x32xf32, #tpu.memory_space<vmem>>, %arg2: memref<2x32x96xbf16, #tpu.memory_space<vmem>>, %arg3: memref<2x32x32xbf16, #tpu.memory_space<vmem>>, %arg4: memref<2x32x128xbf16, #tpu.memory_space<vmem>>, %arg5: memref<2x128x32xbf16, #tpu.memory_space<vmem>>, %arg6: memref<18x128xf32, #tpu.memory_space<vmem>>, %arg7: memref<32x128xbf16, #tpu.memory_space<vmem>>, %arg8: memref<2x8x128xf32, #tpu.memory_space<vmem>>) attributes {dimension_semantics = [], scalar_prefetch = 0 : i64, scratch_operands = 0 : i64, tpu.core_type = #tpu.core_type<tc>} {
    %0 = tpu.iota {dimensions = array<i32: 2>} : vector<2x8x80xi32>
    %c0 = arith.constant 0 : index
    %c0_0 = arith.constant 0 : index
    %c0_1 = arith.constant 0 : index
    %1 = vector.load %arg0[%c0, %c0_0, %c0_1] : memref<2x8x1xi32, #tpu.memory_space<vmem>>, vector<2x8x1xi32>
    %2 = vector.broadcast %1 : vector<2x8x1xi32> to vector<2x8x80xi32>
    %3 = arith.cmpi eq, %0, %2 : vector<2x8x80xi32>
    %4 = arith.extui %3 : vector<2x8x80xi1> to vector<2x8x80xi32>
    %5 = arith.sitofp %4 : vector<2x8x80xi32> to vector<2x8x80xf32>
    %6 = tpu.iota {dimensions = array<i32: 1>} : vector<2x8x80xi32>
    %c64_i32 = arith.constant 64 : i32
    %7 = vector.broadcast %c64_i32 : i32 to vector<2x8x80xi32>
    %8 = arith.addi %7, %6 : vector<2x8x80xi32>
    %9 = arith.cmpi eq, %0, %8 : vector<2x8x80xi32>
    %10 = arith.extui %9 : vector<2x8x80xi1> to vector<2x8x80xi32>
    %11 = arith.sitofp %10 : vector<2x8x80xi32> to vector<2x8x80xf32>
    %12 = arith.addf %5, %11 : vector<2x8x80xf32>
    %13 = vector.shape_cast %12 : vector<2x8x80xf32> to vector<16x80xf32>
    %c0_2 = arith.constant 0 : index
    %c0_3 = arith.constant 0 : index
    %14 = vector.load %arg1[%c0_2, %c0_3] : memref<80x32xf32, #tpu.memory_space<vmem>>, vector<80x32xf32>
    %cst = arith.constant dense<0.000000e+00> : vector<16x32xf32>
    %15 = tpu.matmul %13, %14, %cst {dimension_numbers = #tpu.dot_dimension_numbers<[1], [0], [0], [1], [0, 0, 1, 1], [], []>} : vector<16x80xf32>, vector<80x32xf32>, vector<16x32xf32> -> vector<16x32xf32>
    %16 = tpu.iota {dimensions = array<i32: 0>} : vector<8x8xi32>
    %17 = tpu.iota {dimensions = array<i32: 1>} : vector<8x8xi32>
    %18 = arith.cmpi sge, %16, %17 : vector<8x8xi32>
    %cst_4 = arith.constant 0.000000e+00 : f32
    %cst_5 = arith.constant -1.000000e+30 : f32
    %19 = vector.broadcast %cst_4 : f32 to vector<8x8xf32>
    %20 = vector.broadcast %cst_5 : f32 to vector<8x8xf32>
    %21 = arith.select %18, %19, %20 : vector<8x8xi1>, vector<8x8xf32>
    %22 = vector.shape_cast %21 : vector<8x8xf32> to vector<1x8x8xf32>
    %c0_6 = arith.constant 0 : index
    %c0_7 = arith.constant 0 : index
    %23 = vector.load %arg6[%c0_6, %c0_7] : memref<18x128xf32, #tpu.memory_space<vmem>>, vector<1x32xf32>
    %c1 = arith.constant 1 : index
    %c0_8 = arith.constant 0 : index
    %24 = vector.load %arg6[%c1, %c0_8] : memref<18x128xf32, #tpu.memory_space<vmem>>, vector<1x32xf32>
    %cst_9 = arith.constant dense<0.000000e+00> : vector<16xf32>
    %25 = vector.multi_reduction <add>, %15, %cst_9 [1] : vector<16x32xf32> to vector<16xf32>
    %26 = vector.shape_cast %25 : vector<16xf32> to vector<16x1xf32>
    %cst_10 = arith.constant 3.200000e+01 : f32
    %27 = vector.broadcast %cst_10 : f32 to vector<16x1xf32>
    %28 = arith.divf %26, %27 : vector<16x1xf32>
    %29 = vector.broadcast %28 : vector<16x1xf32> to vector<16x32xf32>
    %30 = arith.subf %15, %29 : vector<16x32xf32>
    %31 = arith.mulf %30, %30 : vector<16x32xf32>
    %cst_11 = arith.constant dense<0.000000e+00> : vector<16xf32>
    %32 = vector.multi_reduction <add>, %31, %cst_11 [1] : vector<16x32xf32> to vector<16xf32>
    %33 = vector.shape_cast %32 : vector<16xf32> to vector<16x1xf32>
    %cst_12 = arith.constant 3.200000e+01 : f32
    %34 = vector.broadcast %cst_12 : f32 to vector<16x1xf32>
    %35 = arith.divf %33, %34 : vector<16x1xf32>
    %36 = vector.broadcast %28 : vector<16x1xf32> to vector<16x32xf32>
    %37 = arith.subf %15, %36 : vector<16x32xf32>
    %cst_13 = arith.constant 9.99999974E-6 : f32
    %38 = vector.broadcast %cst_13 : f32 to vector<16x1xf32>
    %39 = arith.addf %35, %38 : vector<16x1xf32>
    %40 = math.rsqrt %39 : vector<16x1xf32>
    %41 = vector.broadcast %40 : vector<16x1xf32> to vector<16x32xf32>
    %42 = arith.mulf %37, %41 : vector<16x32xf32>
    %43 = vector.broadcast %23 : vector<1x32xf32> to vector<16x32xf32>
    %44 = arith.mulf %42, %43 : vector<16x32xf32>
    %45 = vector.broadcast %24 : vector<1x32xf32> to vector<16x32xf32>
    %46 = arith.addf %44, %45 : vector<16x32xf32>
    %c0_14 = arith.constant 0 : index
    %c0_15 = arith.constant 0 : index
    %c0_16 = arith.constant 0 : index
    %47 = vector.load %arg2[%c0_14, %c0_15, %c0_16] : memref<2x32x96xbf16, #tpu.memory_space<vmem>>, vector<1x32x96xbf16>
    %48 = vector.shape_cast %47 : vector<1x32x96xbf16> to vector<32x96xbf16>
    %49 = arith.truncf %46 : vector<16x32xf32> to vector<16x32xbf16>
    %cst_17 = arith.constant dense<0.000000e+00> : vector<16x96xf32>
    %50 = tpu.matmul %49, %48, %cst_17 {dimension_numbers = #tpu.dot_dimension_numbers<[1], [0], [0], [1], [0, 0, 1, 1], [], []>} : vector<16x32xbf16>, vector<32x96xbf16>, vector<16x96xf32> -> vector<16x96xf32>
    %c2 = arith.constant 2 : index
    %c0_18 = arith.constant 0 : index
    %51 = vector.load %arg6[%c2, %c0_18] : memref<18x128xf32, #tpu.memory_space<vmem>>, vector<1x96xf32>
    %52 = vector.broadcast %51 : vector<1x96xf32> to vector<16x96xf32>
    %53 = arith.addf %50, %52 : vector<16x96xf32>
    %54 = vector.extract_strided_slice %53 {offsets = [0, 0], sizes = [16, 8], strides = [1, 1]} : vector<16x96xf32> to vector<16x8xf32>
    %55 = vector.shape_cast %54 : vector<16x8xf32> to vector<2x8x8xf32>
    %56 = vector.extract_strided_slice %53 {offsets = [0, 32], sizes = [16, 8], strides = [1, 1]} : vector<16x96xf32> to vector<16x8xf32>
    %57 = vector.shape_cast %56 : vector<16x8xf32> to vector<2x8x8xf32>
    %58 = vector.extract_strided_slice %53 {offsets = [0, 64], sizes = [16, 8], strides = [1, 1]} : vector<16x96xf32> to vector<16x8xf32>
    %59 = vector.shape_cast %58 : vector<16x8xf32> to vector<2x8x8xf32>
    %60 = arith.truncf %55 : vector<2x8x8xf32> to vector<2x8x8xbf16>
    %61 = arith.truncf %57 : vector<2x8x8xf32> to vector<2x8x8xbf16>
    "tpu.trace_start"() <{level = 10 : i32, message = "btk,bsk->bts"}> : () -> ()
    %cst_19 = arith.constant dense<0.000000e+00> : vector<2x8x8xf32>
    %62 = tpu.matmul %60, %61, %cst_19 {dimension_numbers = #tpu.dot_dimension_numbers<[2], [2], [1], [1], [0, 0, 0, 1, 1, 1], [0], [0]>} : vector<2x8x8xbf16>, vector<2x8x8xbf16>, vector<2x8x8xf32> -> vector<2x8x8xf32>
    "tpu.trace_stop"() : () -> ()
    %cst_20 = arith.constant 0.353553385 : f32
    %63 = vector.broadcast %cst_20 : f32 to vector<2x8x8xf32>
    %64 = arith.mulf %62, %63 : vector<2x8x8xf32>
    %65 = vector.broadcast %22 : vector<1x8x8xf32> to vector<2x8x8xf32>
    %66 = arith.addf %64, %65 : vector<2x8x8xf32>
    %cst_21 = arith.constant dense<0xFF800000> : vector<2x8xf32>
    %67 = vector.multi_reduction <maximumf>, %66, %cst_21 [2] : vector<2x8x8xf32> to vector<2x8xf32>
    %68 = vector.shape_cast %67 : vector<2x8xf32> to vector<2x8x1xf32>
    %69 = vector.broadcast %68 : vector<2x8x1xf32> to vector<2x8x8xf32>
    %70 = arith.subf %66, %69 : vector<2x8x8xf32>
    %71 = math.exp %70 : vector<2x8x8xf32>
    %cst_22 = arith.constant dense<0.000000e+00> : vector<2x8xf32>
    %72 = vector.multi_reduction <add>, %71, %cst_22 [2] : vector<2x8x8xf32> to vector<2x8xf32>
    %73 = vector.shape_cast %72 : vector<2x8xf32> to vector<2x8x1xf32>
    %74 = tpu.reciprocal %73 {approx = true} : vector<2x8x1xf32> -> vector<2x8x1xf32>
    %75 = vector.broadcast %74 : vector<2x8x1xf32> to vector<2x8x8xf32>
    %76 = arith.mulf %71, %75 : vector<2x8x8xf32>
    %77 = arith.truncf %76 : vector<2x8x8xf32> to vector<2x8x8xbf16>
    %78 = arith.truncf %59 : vector<2x8x8xf32> to vector<2x8x8xbf16>
    "tpu.trace_start"() <{level = 10 : i32, message = "bts,bsk->btk"}> : () -> ()
    %cst_23 = arith.constant dense<0.000000e+00> : vector<2x8x8xf32>
    %79 = tpu.matmul %77, %78, %cst_23 {dimension_numbers = #tpu.dot_dimension_numbers<[2], [1], [1], [2], [0, 0, 0, 1, 1, 2], [0], [0]>} : vector<2x8x8xbf16>, vector<2x8x8xbf16>, vector<2x8x8xf32> -> vector<2x8x8xf32>
    "tpu.trace_stop"() : () -> ()
    %80 = vector.shape_cast %79 : vector<2x8x8xf32> to vector<16x8xf32>
    %81 = vector.extract_strided_slice %53 {offsets = [0, 8], sizes = [16, 8], strides = [1, 1]} : vector<16x96xf32> to vector<16x8xf32>
    %82 = vector.shape_cast %81 : vector<16x8xf32> to vector<2x8x8xf32>
    %83 = vector.extract_strided_slice %53 {offsets = [0, 40], sizes = [16, 8], strides = [1, 1]} : vector<16x96xf32> to vector<16x8xf32>
    %84 = vector.shape_cast %83 : vector<16x8xf32> to vector<2x8x8xf32>
    %85 = vector.extract_strided_slice %53 {offsets = [0, 72], sizes = [16, 8], strides = [1, 1]} : vector<16x96xf32> to vector<16x8xf32>
    %86 = vector.shape_cast %85 : vector<16x8xf32> to vector<2x8x8xf32>
    %87 = arith.truncf %82 : vector<2x8x8xf32> to vector<2x8x8xbf16>
    %88 = arith.truncf %84 : vector<2x8x8xf32> to vector<2x8x8xbf16>
    "tpu.trace_start"() <{level = 10 : i32, message = "btk,bsk->bts"}> : () -> ()
    %cst_24 = arith.constant dense<0.000000e+00> : vector<2x8x8xf32>
    %89 = tpu.matmul %87, %88, %cst_24 {dimension_numbers = #tpu.dot_dimension_numbers<[2], [2], [1], [1], [0, 0, 0, 1, 1, 1], [0], [0]>} : vector<2x8x8xbf16>, vector<2x8x8xbf16>, vector<2x8x8xf32> -> vector<2x8x8xf32>
    "tpu.trace_stop"() : () -> ()
    %cst_25 = arith.constant 0.353553385 : f32
    %90 = vector.broadcast %cst_25 : f32 to vector<2x8x8xf32>
    %91 = arith.mulf %89, %90 : vector<2x8x8xf32>
    %92 = vector.broadcast %22 : vector<1x8x8xf32> to vector<2x8x8xf32>
    %93 = arith.addf %91, %92 : vector<2x8x8xf32>
    %cst_26 = arith.constant dense<0xFF800000> : vector<2x8xf32>
    %94 = vector.multi_reduction <maximumf>, %93, %cst_26 [2] : vector<2x8x8xf32> to vector<2x8xf32>
    %95 = vector.shape_cast %94 : vector<2x8xf32> to vector<2x8x1xf32>
    %96 = vector.broadcast %95 : vector<2x8x1xf32> to vector<2x8x8xf32>
    %97 = arith.subf %93, %96 : vector<2x8x8xf32>
    %98 = math.exp %97 : vector<2x8x8xf32>
    %cst_27 = arith.constant dense<0.000000e+00> : vector<2x8xf32>
    %99 = vector.multi_reduction <add>, %98, %cst_27 [2] : vector<2x8x8xf32> to vector<2x8xf32>
    %100 = vector.shape_cast %99 : vector<2x8xf32> to vector<2x8x1xf32>
    %101 = tpu.reciprocal %100 {approx = true} : vector<2x8x1xf32> -> vector<2x8x1xf32>
    %102 = vector.broadcast %101 : vector<2x8x1xf32> to vector<2x8x8xf32>
    %103 = arith.mulf %98, %102 : vector<2x8x8xf32>
    %104 = arith.truncf %103 : vector<2x8x8xf32> to vector<2x8x8xbf16>
    %105 = arith.truncf %86 : vector<2x8x8xf32> to vector<2x8x8xbf16>
    "tpu.trace_start"() <{level = 10 : i32, message = "bts,bsk->btk"}> : () -> ()
    %cst_28 = arith.constant dense<0.000000e+00> : vector<2x8x8xf32>
    %106 = tpu.matmul %104, %105, %cst_28 {dimension_numbers = #tpu.dot_dimension_numbers<[2], [1], [1], [2], [0, 0, 0, 1, 1, 2], [0], [0]>} : vector<2x8x8xbf16>, vector<2x8x8xbf16>, vector<2x8x8xf32> -> vector<2x8x8xf32>
    "tpu.trace_stop"() : () -> ()
    %107 = vector.shape_cast %106 : vector<2x8x8xf32> to vector<16x8xf32>
    %108 = vector.extract_strided_slice %53 {offsets = [0, 16], sizes = [16, 8], strides = [1, 1]} : vector<16x96xf32> to vector<16x8xf32>
    %109 = vector.shape_cast %108 : vector<16x8xf32> to vector<2x8x8xf32>
    %110 = vector.extract_strided_slice %53 {offsets = [0, 48], sizes = [16, 8], strides = [1, 1]} : vector<16x96xf32> to vector<16x8xf32>
    %111 = vector.shape_cast %110 : vector<16x8xf32> to vector<2x8x8xf32>
    %112 = vector.extract_strided_slice %53 {offsets = [0, 80], sizes = [16, 8], strides = [1, 1]} : vector<16x96xf32> to vector<16x8xf32>
    %113 = vector.shape_cast %112 : vector<16x8xf32> to vector<2x8x8xf32>
    %114 = arith.truncf %109 : vector<2x8x8xf32> to vector<2x8x8xbf16>
    %115 = arith.truncf %111 : vector<2x8x8xf32> to vector<2x8x8xbf16>
    "tpu.trace_start"() <{level = 10 : i32, message = "btk,bsk->bts"}> : () -> ()
    %cst_29 = arith.constant dense<0.000000e+00> : vector<2x8x8xf32>
    %116 = tpu.matmul %114, %115, %cst_29 {dimension_numbers = #tpu.dot_dimension_numbers<[2], [2], [1], [1], [0, 0, 0, 1, 1, 1], [0], [0]>} : vector<2x8x8xbf16>, vector<2x8x8xbf16>, vector<2x8x8xf32> -> vector<2x8x8xf32>
    "tpu.trace_stop"() : () -> ()
    %cst_30 = arith.constant 0.353553385 : f32
    %117 = vector.broadcast %cst_30 : f32 to vector<2x8x8xf32>
    %118 = arith.mulf %116, %117 : vector<2x8x8xf32>
    %119 = vector.broadcast %22 : vector<1x8x8xf32> to vector<2x8x8xf32>
    %120 = arith.addf %118, %119 : vector<2x8x8xf32>
    %cst_31 = arith.constant dense<0xFF800000> : vector<2x8xf32>
    %121 = vector.multi_reduction <maximumf>, %120, %cst_31 [2] : vector<2x8x8xf32> to vector<2x8xf32>
    %122 = vector.shape_cast %121 : vector<2x8xf32> to vector<2x8x1xf32>
    %123 = vector.broadcast %122 : vector<2x8x1xf32> to vector<2x8x8xf32>
    %124 = arith.subf %120, %123 : vector<2x8x8xf32>
    %125 = math.exp %124 : vector<2x8x8xf32>
    %cst_32 = arith.constant dense<0.000000e+00> : vector<2x8xf32>
    %126 = vector.multi_reduction <add>, %125, %cst_32 [2] : vector<2x8x8xf32> to vector<2x8xf32>
    %127 = vector.shape_cast %126 : vector<2x8xf32> to vector<2x8x1xf32>
    %128 = tpu.reciprocal %127 {approx = true} : vector<2x8x1xf32> -> vector<2x8x1xf32>
    %129 = vector.broadcast %128 : vector<2x8x1xf32> to vector<2x8x8xf32>
    %130 = arith.mulf %125, %129 : vector<2x8x8xf32>
    %131 = arith.truncf %130 : vector<2x8x8xf32> to vector<2x8x8xbf16>
    %132 = arith.truncf %113 : vector<2x8x8xf32> to vector<2x8x8xbf16>
    "tpu.trace_start"() <{level = 10 : i32, message = "bts,bsk->btk"}> : () -> ()
    %cst_33 = arith.constant dense<0.000000e+00> : vector<2x8x8xf32>
    %133 = tpu.matmul %131, %132, %cst_33 {dimension_numbers = #tpu.dot_dimension_numbers<[2], [1], [1], [2], [0, 0, 0, 1, 1, 2], [0], [0]>} : vector<2x8x8xbf16>, vector<2x8x8xbf16>, vector<2x8x8xf32> -> vector<2x8x8xf32>
    "tpu.trace_stop"() : () -> ()
    %134 = vector.shape_cast %133 : vector<2x8x8xf32> to vector<16x8xf32>
    %135 = vector.extract_strided_slice %53 {offsets = [0, 24], sizes = [16, 8], strides = [1, 1]} : vector<16x96xf32> to vector<16x8xf32>
    %136 = vector.shape_cast %135 : vector<16x8xf32> to vector<2x8x8xf32>
    %137 = vector.extract_strided_slice %53 {offsets = [0, 56], sizes = [16, 8], strides = [1, 1]} : vector<16x96xf32> to vector<16x8xf32>
    %138 = vector.shape_cast %137 : vector<16x8xf32> to vector<2x8x8xf32>
    %139 = vector.extract_strided_slice %53 {offsets = [0, 88], sizes = [16, 8], strides = [1, 1]} : vector<16x96xf32> to vector<16x8xf32>
    %140 = vector.shape_cast %139 : vector<16x8xf32> to vector<2x8x8xf32>
    %141 = arith.truncf %136 : vector<2x8x8xf32> to vector<2x8x8xbf16>
    %142 = arith.truncf %138 : vector<2x8x8xf32> to vector<2x8x8xbf16>
    "tpu.trace_start"() <{level = 10 : i32, message = "btk,bsk->bts"}> : () -> ()
    %cst_34 = arith.constant dense<0.000000e+00> : vector<2x8x8xf32>
    %143 = tpu.matmul %141, %142, %cst_34 {dimension_numbers = #tpu.dot_dimension_numbers<[2], [2], [1], [1], [0, 0, 0, 1, 1, 1], [0], [0]>} : vector<2x8x8xbf16>, vector<2x8x8xbf16>, vector<2x8x8xf32> -> vector<2x8x8xf32>
    "tpu.trace_stop"() : () -> ()
    %cst_35 = arith.constant 0.353553385 : f32
    %144 = vector.broadcast %cst_35 : f32 to vector<2x8x8xf32>
    %145 = arith.mulf %143, %144 : vector<2x8x8xf32>
    %146 = vector.broadcast %22 : vector<1x8x8xf32> to vector<2x8x8xf32>
    %147 = arith.addf %145, %146 : vector<2x8x8xf32>
    %cst_36 = arith.constant dense<0xFF800000> : vector<2x8xf32>
    %148 = vector.multi_reduction <maximumf>, %147, %cst_36 [2] : vector<2x8x8xf32> to vector<2x8xf32>
    %149 = vector.shape_cast %148 : vector<2x8xf32> to vector<2x8x1xf32>
    %150 = vector.broadcast %149 : vector<2x8x1xf32> to vector<2x8x8xf32>
    %151 = arith.subf %147, %150 : vector<2x8x8xf32>
    %152 = math.exp %151 : vector<2x8x8xf32>
    %cst_37 = arith.constant dense<0.000000e+00> : vector<2x8xf32>
    %153 = vector.multi_reduction <add>, %152, %cst_37 [2] : vector<2x8x8xf32> to vector<2x8xf32>
    %154 = vector.shape_cast %153 : vector<2x8xf32> to vector<2x8x1xf32>
    %155 = tpu.reciprocal %154 {approx = true} : vector<2x8x1xf32> -> vector<2x8x1xf32>
    %156 = vector.broadcast %155 : vector<2x8x1xf32> to vector<2x8x8xf32>
    %157 = arith.mulf %152, %156 : vector<2x8x8xf32>
    %158 = arith.truncf %157 : vector<2x8x8xf32> to vector<2x8x8xbf16>
    %159 = arith.truncf %140 : vector<2x8x8xf32> to vector<2x8x8xbf16>
    "tpu.trace_start"() <{level = 10 : i32, message = "bts,bsk->btk"}> : () -> ()
    %cst_38 = arith.constant dense<0.000000e+00> : vector<2x8x8xf32>
    %160 = tpu.matmul %158, %159, %cst_38 {dimension_numbers = #tpu.dot_dimension_numbers<[2], [1], [1], [2], [0, 0, 0, 1, 1, 2], [0], [0]>} : vector<2x8x8xbf16>, vector<2x8x8xbf16>, vector<2x8x8xf32> -> vector<2x8x8xf32>
    "tpu.trace_stop"() : () -> ()
    %161 = vector.shape_cast %160 : vector<2x8x8xf32> to vector<16x8xf32>
    %162 = tpu.concatenate %80, %107, %134, %161 in 1 : vector<16x8xf32>, vector<16x8xf32>, vector<16x8xf32>, vector<16x8xf32> -> vector<16x32xf32>
    %c0_39 = arith.constant 0 : index
    %c0_40 = arith.constant 0 : index
    %c0_41 = arith.constant 0 : index
    %163 = vector.load %arg3[%c0_39, %c0_40, %c0_41] : memref<2x32x32xbf16, #tpu.memory_space<vmem>>, vector<1x32x32xbf16>
    %164 = vector.shape_cast %163 : vector<1x32x32xbf16> to vector<32x32xbf16>
    %165 = arith.truncf %162 : vector<16x32xf32> to vector<16x32xbf16>
    %cst_42 = arith.constant dense<0.000000e+00> : vector<16x32xf32>
    %166 = tpu.matmul %165, %164, %cst_42 {dimension_numbers = #tpu.dot_dimension_numbers<[1], [0], [0], [1], [0, 0, 1, 1], [], []>} : vector<16x32xbf16>, vector<32x32xbf16>, vector<16x32xf32> -> vector<16x32xf32>
    %167 = arith.addf %15, %166 : vector<16x32xf32>
    %c3 = arith.constant 3 : index
    %c0_43 = arith.constant 0 : index
    %168 = vector.load %arg6[%c3, %c0_43] : memref<18x128xf32, #tpu.memory_space<vmem>>, vector<1x32xf32>
    %169 = vector.broadcast %168 : vector<1x32xf32> to vector<16x32xf32>
    %170 = arith.addf %167, %169 : vector<16x32xf32>
    %c4 = arith.constant 4 : index
    %c0_44 = arith.constant 0 : index
    %171 = vector.load %arg6[%c4, %c0_44] : memref<18x128xf32, #tpu.memory_space<vmem>>, vector<1x32xf32>
    %c5 = arith.constant 5 : index
    %c0_45 = arith.constant 0 : index
    %172 = vector.load %arg6[%c5, %c0_45] : memref<18x128xf32, #tpu.memory_space<vmem>>, vector<1x32xf32>
    %cst_46 = arith.constant dense<0.000000e+00> : vector<16xf32>
    %173 = vector.multi_reduction <add>, %170, %cst_46 [1] : vector<16x32xf32> to vector<16xf32>
    %174 = vector.shape_cast %173 : vector<16xf32> to vector<16x1xf32>
    %cst_47 = arith.constant 3.200000e+01 : f32
    %175 = vector.broadcast %cst_47 : f32 to vector<16x1xf32>
    %176 = arith.divf %174, %175 : vector<16x1xf32>
    %177 = vector.broadcast %176 : vector<16x1xf32> to vector<16x32xf32>
    %178 = arith.subf %170, %177 : vector<16x32xf32>
    %179 = arith.mulf %178, %178 : vector<16x32xf32>
    %cst_48 = arith.constant dense<0.000000e+00> : vector<16xf32>
    %180 = vector.multi_reduction <add>, %179, %cst_48 [1] : vector<16x32xf32> to vector<16xf32>
    %181 = vector.shape_cast %180 : vector<16xf32> to vector<16x1xf32>
    %cst_49 = arith.constant 3.200000e+01 : f32
    %182 = vector.broadcast %cst_49 : f32 to vector<16x1xf32>
    %183 = arith.divf %181, %182 : vector<16x1xf32>
    %184 = vector.broadcast %176 : vector<16x1xf32> to vector<16x32xf32>
    %185 = arith.subf %170, %184 : vector<16x32xf32>
    %cst_50 = arith.constant 9.99999974E-6 : f32
    %186 = vector.broadcast %cst_50 : f32 to vector<16x1xf32>
    %187 = arith.addf %183, %186 : vector<16x1xf32>
    %188 = math.rsqrt %187 : vector<16x1xf32>
    %189 = vector.broadcast %188 : vector<16x1xf32> to vector<16x32xf32>
    %190 = arith.mulf %185, %189 : vector<16x32xf32>
    %191 = vector.broadcast %171 : vector<1x32xf32> to vector<16x32xf32>
    %192 = arith.mulf %190, %191 : vector<16x32xf32>
    %193 = vector.broadcast %172 : vector<1x32xf32> to vector<16x32xf32>
    %194 = arith.addf %192, %193 : vector<16x32xf32>
    %c0_51 = arith.constant 0 : index
    %c0_52 = arith.constant 0 : index
    %c0_53 = arith.constant 0 : index
    %195 = vector.load %arg4[%c0_51, %c0_52, %c0_53] : memref<2x32x128xbf16, #tpu.memory_space<vmem>>, vector<1x32x128xbf16>
    %196 = vector.shape_cast %195 : vector<1x32x128xbf16> to vector<32x128xbf16>
    %197 = arith.truncf %194 : vector<16x32xf32> to vector<16x32xbf16>
    %cst_54 = arith.constant dense<0.000000e+00> : vector<16x128xf32>
    %198 = tpu.matmul %197, %196, %cst_54 {dimension_numbers = #tpu.dot_dimension_numbers<[1], [0], [0], [1], [0, 0, 1, 1], [], []>} : vector<16x32xbf16>, vector<32x128xbf16>, vector<16x128xf32> -> vector<16x128xf32>
    %c6 = arith.constant 6 : index
    %c0_55 = arith.constant 0 : index
    %199 = vector.load %arg6[%c6, %c0_55] : memref<18x128xf32, #tpu.memory_space<vmem>>, vector<1x128xf32>
    %200 = vector.broadcast %199 : vector<1x128xf32> to vector<16x128xf32>
    %201 = arith.addf %198, %200 : vector<16x128xf32>
    %202 = arith.mulf %201, %201 : vector<16x128xf32>
    %203 = arith.mulf %201, %202 : vector<16x128xf32>
    %cst_56 = arith.constant 4.471500e-02 : f32
    %204 = vector.broadcast %cst_56 : f32 to vector<16x128xf32>
    %205 = arith.mulf %204, %203 : vector<16x128xf32>
    %206 = arith.addf %201, %205 : vector<16x128xf32>
    %cst_57 = arith.constant 0.797884583 : f32
    %207 = vector.broadcast %cst_57 : f32 to vector<16x128xf32>
    %208 = arith.mulf %207, %206 : vector<16x128xf32>
    %209 = math.tanh %208 : vector<16x128xf32>
    %cst_58 = arith.constant 1.000000e+00 : f32
    %210 = vector.broadcast %cst_58 : f32 to vector<16x128xf32>
    %211 = arith.addf %210, %209 : vector<16x128xf32>
    %cst_59 = arith.constant 5.000000e-01 : f32
    %212 = vector.broadcast %cst_59 : f32 to vector<16x128xf32>
    %213 = arith.mulf %212, %211 : vector<16x128xf32>
    %214 = arith.mulf %201, %213 : vector<16x128xf32>
    %c0_60 = arith.constant 0 : index
    %c0_61 = arith.constant 0 : index
    %c0_62 = arith.constant 0 : index
    %215 = vector.load %arg5[%c0_60, %c0_61, %c0_62] : memref<2x128x32xbf16, #tpu.memory_space<vmem>>, vector<1x128x32xbf16>
    %216 = vector.shape_cast %215 : vector<1x128x32xbf16> to vector<128x32xbf16>
    %217 = arith.truncf %214 : vector<16x128xf32> to vector<16x128xbf16>
    %cst_63 = arith.constant dense<0.000000e+00> : vector<16x32xf32>
    %218 = tpu.matmul %217, %216, %cst_63 {dimension_numbers = #tpu.dot_dimension_numbers<[1], [0], [0], [1], [0, 0, 1, 1], [], []>} : vector<16x128xbf16>, vector<128x32xbf16>, vector<16x32xf32> -> vector<16x32xf32>
    %219 = arith.addf %170, %218 : vector<16x32xf32>
    %c7 = arith.constant 7 : index
    %c0_64 = arith.constant 0 : index
    %220 = vector.load %arg6[%c7, %c0_64] : memref<18x128xf32, #tpu.memory_space<vmem>>, vector<1x32xf32>
    %221 = vector.broadcast %220 : vector<1x32xf32> to vector<16x32xf32>
    %222 = arith.addf %219, %221 : vector<16x32xf32>
    %c8 = arith.constant 8 : index
    %c0_65 = arith.constant 0 : index
    %223 = vector.load %arg6[%c8, %c0_65] : memref<18x128xf32, #tpu.memory_space<vmem>>, vector<1x32xf32>
    %c9 = arith.constant 9 : index
    %c0_66 = arith.constant 0 : index
    %224 = vector.load %arg6[%c9, %c0_66] : memref<18x128xf32, #tpu.memory_space<vmem>>, vector<1x32xf32>
    %cst_67 = arith.constant dense<0.000000e+00> : vector<16xf32>
    %225 = vector.multi_reduction <add>, %222, %cst_67 [1] : vector<16x32xf32> to vector<16xf32>
    %226 = vector.shape_cast %225 : vector<16xf32> to vector<16x1xf32>
    %cst_68 = arith.constant 3.200000e+01 : f32
    %227 = vector.broadcast %cst_68 : f32 to vector<16x1xf32>
    %228 = arith.divf %226, %227 : vector<16x1xf32>
    %229 = vector.broadcast %228 : vector<16x1xf32> to vector<16x32xf32>
    %230 = arith.subf %222, %229 : vector<16x32xf32>
    %231 = arith.mulf %230, %230 : vector<16x32xf32>
    %cst_69 = arith.constant dense<0.000000e+00> : vector<16xf32>
    %232 = vector.multi_reduction <add>, %231, %cst_69 [1] : vector<16x32xf32> to vector<16xf32>
    %233 = vector.shape_cast %232 : vector<16xf32> to vector<16x1xf32>
    %cst_70 = arith.constant 3.200000e+01 : f32
    %234 = vector.broadcast %cst_70 : f32 to vector<16x1xf32>
    %235 = arith.divf %233, %234 : vector<16x1xf32>
    %236 = vector.broadcast %228 : vector<16x1xf32> to vector<16x32xf32>
    %237 = arith.subf %222, %236 : vector<16x32xf32>
    %cst_71 = arith.constant 9.99999974E-6 : f32
    %238 = vector.broadcast %cst_71 : f32 to vector<16x1xf32>
    %239 = arith.addf %235, %238 : vector<16x1xf32>
    %240 = math.rsqrt %239 : vector<16x1xf32>
    %241 = vector.broadcast %240 : vector<16x1xf32> to vector<16x32xf32>
    %242 = arith.mulf %237, %241 : vector<16x32xf32>
    %243 = vector.broadcast %223 : vector<1x32xf32> to vector<16x32xf32>
    %244 = arith.mulf %242, %243 : vector<16x32xf32>
    %245 = vector.broadcast %224 : vector<1x32xf32> to vector<16x32xf32>
    %246 = arith.addf %244, %245 : vector<16x32xf32>
    %c1_72 = arith.constant 1 : index
    %c0_73 = arith.constant 0 : index
    %c0_74 = arith.constant 0 : index
    %247 = vector.load %arg2[%c1_72, %c0_73, %c0_74] : memref<2x32x96xbf16, #tpu.memory_space<vmem>>, vector<1x32x96xbf16>
    %248 = vector.shape_cast %247 : vector<1x32x96xbf16> to vector<32x96xbf16>
    %249 = arith.truncf %246 : vector<16x32xf32> to vector<16x32xbf16>
    %cst_75 = arith.constant dense<0.000000e+00> : vector<16x96xf32>
    %250 = tpu.matmul %249, %248, %cst_75 {dimension_numbers = #tpu.dot_dimension_numbers<[1], [0], [0], [1], [0, 0, 1, 1], [], []>} : vector<16x32xbf16>, vector<32x96xbf16>, vector<16x96xf32> -> vector<16x96xf32>
    %c10 = arith.constant 10 : index
    %c0_76 = arith.constant 0 : index
    %251 = vector.load %arg6[%c10, %c0_76] : memref<18x128xf32, #tpu.memory_space<vmem>>, vector<1x96xf32>
    %252 = vector.broadcast %251 : vector<1x96xf32> to vector<16x96xf32>
    %253 = arith.addf %250, %252 : vector<16x96xf32>
    %254 = vector.extract_strided_slice %253 {offsets = [0, 0], sizes = [16, 8], strides = [1, 1]} : vector<16x96xf32> to vector<16x8xf32>
    %255 = vector.shape_cast %254 : vector<16x8xf32> to vector<2x8x8xf32>
    %256 = vector.extract_strided_slice %253 {offsets = [0, 32], sizes = [16, 8], strides = [1, 1]} : vector<16x96xf32> to vector<16x8xf32>
    %257 = vector.shape_cast %256 : vector<16x8xf32> to vector<2x8x8xf32>
    %258 = vector.extract_strided_slice %253 {offsets = [0, 64], sizes = [16, 8], strides = [1, 1]} : vector<16x96xf32> to vector<16x8xf32>
    %259 = vector.shape_cast %258 : vector<16x8xf32> to vector<2x8x8xf32>
    %260 = arith.truncf %255 : vector<2x8x8xf32> to vector<2x8x8xbf16>
    %261 = arith.truncf %257 : vector<2x8x8xf32> to vector<2x8x8xbf16>
    "tpu.trace_start"() <{level = 10 : i32, message = "btk,bsk->bts"}> : () -> ()
    %cst_77 = arith.constant dense<0.000000e+00> : vector<2x8x8xf32>
    %262 = tpu.matmul %260, %261, %cst_77 {dimension_numbers = #tpu.dot_dimension_numbers<[2], [2], [1], [1], [0, 0, 0, 1, 1, 1], [0], [0]>} : vector<2x8x8xbf16>, vector<2x8x8xbf16>, vector<2x8x8xf32> -> vector<2x8x8xf32>
    "tpu.trace_stop"() : () -> ()
    %cst_78 = arith.constant 0.353553385 : f32
    %263 = vector.broadcast %cst_78 : f32 to vector<2x8x8xf32>
    %264 = arith.mulf %262, %263 : vector<2x8x8xf32>
    %265 = vector.broadcast %22 : vector<1x8x8xf32> to vector<2x8x8xf32>
    %266 = arith.addf %264, %265 : vector<2x8x8xf32>
    %cst_79 = arith.constant dense<0xFF800000> : vector<2x8xf32>
    %267 = vector.multi_reduction <maximumf>, %266, %cst_79 [2] : vector<2x8x8xf32> to vector<2x8xf32>
    %268 = vector.shape_cast %267 : vector<2x8xf32> to vector<2x8x1xf32>
    %269 = vector.broadcast %268 : vector<2x8x1xf32> to vector<2x8x8xf32>
    %270 = arith.subf %266, %269 : vector<2x8x8xf32>
    %271 = math.exp %270 : vector<2x8x8xf32>
    %cst_80 = arith.constant dense<0.000000e+00> : vector<2x8xf32>
    %272 = vector.multi_reduction <add>, %271, %cst_80 [2] : vector<2x8x8xf32> to vector<2x8xf32>
    %273 = vector.shape_cast %272 : vector<2x8xf32> to vector<2x8x1xf32>
    %274 = tpu.reciprocal %273 {approx = true} : vector<2x8x1xf32> -> vector<2x8x1xf32>
    %275 = vector.broadcast %274 : vector<2x8x1xf32> to vector<2x8x8xf32>
    %276 = arith.mulf %271, %275 : vector<2x8x8xf32>
    %277 = arith.truncf %276 : vector<2x8x8xf32> to vector<2x8x8xbf16>
    %278 = arith.truncf %259 : vector<2x8x8xf32> to vector<2x8x8xbf16>
    "tpu.trace_start"() <{level = 10 : i32, message = "bts,bsk->btk"}> : () -> ()
    %cst_81 = arith.constant dense<0.000000e+00> : vector<2x8x8xf32>
    %279 = tpu.matmul %277, %278, %cst_81 {dimension_numbers = #tpu.dot_dimension_numbers<[2], [1], [1], [2], [0, 0, 0, 1, 1, 2], [0], [0]>} : vector<2x8x8xbf16>, vector<2x8x8xbf16>, vector<2x8x8xf32> -> vector<2x8x8xf32>
    "tpu.trace_stop"() : () -> ()
    %280 = vector.shape_cast %279 : vector<2x8x8xf32> to vector<16x8xf32>
    %281 = vector.extract_strided_slice %253 {offsets = [0, 8], sizes = [16, 8], strides = [1, 1]} : vector<16x96xf32> to vector<16x8xf32>
    %282 = vector.shape_cast %281 : vector<16x8xf32> to vector<2x8x8xf32>
    %283 = vector.extract_strided_slice %253 {offsets = [0, 40], sizes = [16, 8], strides = [1, 1]} : vector<16x96xf32> to vector<16x8xf32>
    %284 = vector.shape_cast %283 : vector<16x8xf32> to vector<2x8x8xf32>
    %285 = vector.extract_strided_slice %253 {offsets = [0, 72], sizes = [16, 8], strides = [1, 1]} : vector<16x96xf32> to vector<16x8xf32>
    %286 = vector.shape_cast %285 : vector<16x8xf32> to vector<2x8x8xf32>
    %287 = arith.truncf %282 : vector<2x8x8xf32> to vector<2x8x8xbf16>
    %288 = arith.truncf %284 : vector<2x8x8xf32> to vector<2x8x8xbf16>
    "tpu.trace_start"() <{level = 10 : i32, message = "btk,bsk->bts"}> : () -> ()
    %cst_82 = arith.constant dense<0.000000e+00> : vector<2x8x8xf32>
    %289 = tpu.matmul %287, %288, %cst_82 {dimension_numbers = #tpu.dot_dimension_numbers<[2], [2], [1], [1], [0, 0, 0, 1, 1, 1], [0], [0]>} : vector<2x8x8xbf16>, vector<2x8x8xbf16>, vector<2x8x8xf32> -> vector<2x8x8xf32>
    "tpu.trace_stop"() : () -> ()
    %cst_83 = arith.constant 0.353553385 : f32
    %290 = vector.broadcast %cst_83 : f32 to vector<2x8x8xf32>
    %291 = arith.mulf %289, %290 : vector<2x8x8xf32>
    %292 = vector.broadcast %22 : vector<1x8x8xf32> to vector<2x8x8xf32>
    %293 = arith.addf %291, %292 : vector<2x8x8xf32>
    %cst_84 = arith.constant dense<0xFF800000> : vector<2x8xf32>
    %294 = vector.multi_reduction <maximumf>, %293, %cst_84 [2] : vector<2x8x8xf32> to vector<2x8xf32>
    %295 = vector.shape_cast %294 : vector<2x8xf32> to vector<2x8x1xf32>
    %296 = vector.broadcast %295 : vector<2x8x1xf32> to vector<2x8x8xf32>
    %297 = arith.subf %293, %296 : vector<2x8x8xf32>
    %298 = math.exp %297 : vector<2x8x8xf32>
    %cst_85 = arith.constant dense<0.000000e+00> : vector<2x8xf32>
    %299 = vector.multi_reduction <add>, %298, %cst_85 [2] : vector<2x8x8xf32> to vector<2x8xf32>
    %300 = vector.shape_cast %299 : vector<2x8xf32> to vector<2x8x1xf32>
    %301 = tpu.reciprocal %300 {approx = true} : vector<2x8x1xf32> -> vector<2x8x1xf32>
    %302 = vector.broadcast %301 : vector<2x8x1xf32> to vector<2x8x8xf32>
    %303 = arith.mulf %298, %302 : vector<2x8x8xf32>
    %304 = arith.truncf %303 : vector<2x8x8xf32> to vector<2x8x8xbf16>
    %305 = arith.truncf %286 : vector<2x8x8xf32> to vector<2x8x8xbf16>
    "tpu.trace_start"() <{level = 10 : i32, message = "bts,bsk->btk"}> : () -> ()
    %cst_86 = arith.constant dense<0.000000e+00> : vector<2x8x8xf32>
    %306 = tpu.matmul %304, %305, %cst_86 {dimension_numbers = #tpu.dot_dimension_numbers<[2], [1], [1], [2], [0, 0, 0, 1, 1, 2], [0], [0]>} : vector<2x8x8xbf16>, vector<2x8x8xbf16>, vector<2x8x8xf32> -> vector<2x8x8xf32>
    "tpu.trace_stop"() : () -> ()
    %307 = vector.shape_cast %306 : vector<2x8x8xf32> to vector<16x8xf32>
    %308 = vector.extract_strided_slice %253 {offsets = [0, 16], sizes = [16, 8], strides = [1, 1]} : vector<16x96xf32> to vector<16x8xf32>
    %309 = vector.shape_cast %308 : vector<16x8xf32> to vector<2x8x8xf32>
    %310 = vector.extract_strided_slice %253 {offsets = [0, 48], sizes = [16, 8], strides = [1, 1]} : vector<16x96xf32> to vector<16x8xf32>
    %311 = vector.shape_cast %310 : vector<16x8xf32> to vector<2x8x8xf32>
    %312 = vector.extract_strided_slice %253 {offsets = [0, 80], sizes = [16, 8], strides = [1, 1]} : vector<16x96xf32> to vector<16x8xf32>
    %313 = vector.shape_cast %312 : vector<16x8xf32> to vector<2x8x8xf32>
    %314 = arith.truncf %309 : vector<2x8x8xf32> to vector<2x8x8xbf16>
    %315 = arith.truncf %311 : vector<2x8x8xf32> to vector<2x8x8xbf16>
    "tpu.trace_start"() <{level = 10 : i32, message = "btk,bsk->bts"}> : () -> ()
    %cst_87 = arith.constant dense<0.000000e+00> : vector<2x8x8xf32>
    %316 = tpu.matmul %314, %315, %cst_87 {dimension_numbers = #tpu.dot_dimension_numbers<[2], [2], [1], [1], [0, 0, 0, 1, 1, 1], [0], [0]>} : vector<2x8x8xbf16>, vector<2x8x8xbf16>, vector<2x8x8xf32> -> vector<2x8x8xf32>
    "tpu.trace_stop"() : () -> ()
    %cst_88 = arith.constant 0.353553385 : f32
    %317 = vector.broadcast %cst_88 : f32 to vector<2x8x8xf32>
    %318 = arith.mulf %316, %317 : vector<2x8x8xf32>
    %319 = vector.broadcast %22 : vector<1x8x8xf32> to vector<2x8x8xf32>
    %320 = arith.addf %318, %319 : vector<2x8x8xf32>
    %cst_89 = arith.constant dense<0xFF800000> : vector<2x8xf32>
    %321 = vector.multi_reduction <maximumf>, %320, %cst_89 [2] : vector<2x8x8xf32> to vector<2x8xf32>
    %322 = vector.shape_cast %321 : vector<2x8xf32> to vector<2x8x1xf32>
    %323 = vector.broadcast %322 : vector<2x8x1xf32> to vector<2x8x8xf32>
    %324 = arith.subf %320, %323 : vector<2x8x8xf32>
    %325 = math.exp %324 : vector<2x8x8xf32>
    %cst_90 = arith.constant dense<0.000000e+00> : vector<2x8xf32>
    %326 = vector.multi_reduction <add>, %325, %cst_90 [2] : vector<2x8x8xf32> to vector<2x8xf32>
    %327 = vector.shape_cast %326 : vector<2x8xf32> to vector<2x8x1xf32>
    %328 = tpu.reciprocal %327 {approx = true} : vector<2x8x1xf32> -> vector<2x8x1xf32>
    %329 = vector.broadcast %328 : vector<2x8x1xf32> to vector<2x8x8xf32>
    %330 = arith.mulf %325, %329 : vector<2x8x8xf32>
    %331 = arith.truncf %330 : vector<2x8x8xf32> to vector<2x8x8xbf16>
    %332 = arith.truncf %313 : vector<2x8x8xf32> to vector<2x8x8xbf16>
    "tpu.trace_start"() <{level = 10 : i32, message = "bts,bsk->btk"}> : () -> ()
    %cst_91 = arith.constant dense<0.000000e+00> : vector<2x8x8xf32>
    %333 = tpu.matmul %331, %332, %cst_91 {dimension_numbers = #tpu.dot_dimension_numbers<[2], [1], [1], [2], [0, 0, 0, 1, 1, 2], [0], [0]>} : vector<2x8x8xbf16>, vector<2x8x8xbf16>, vector<2x8x8xf32> -> vector<2x8x8xf32>
    "tpu.trace_stop"() : () -> ()
    %334 = vector.shape_cast %333 : vector<2x8x8xf32> to vector<16x8xf32>
    %335 = vector.extract_strided_slice %253 {offsets = [0, 24], sizes = [16, 8], strides = [1, 1]} : vector<16x96xf32> to vector<16x8xf32>
    %336 = vector.shape_cast %335 : vector<16x8xf32> to vector<2x8x8xf32>
    %337 = vector.extract_strided_slice %253 {offsets = [0, 56], sizes = [16, 8], strides = [1, 1]} : vector<16x96xf32> to vector<16x8xf32>
    %338 = vector.shape_cast %337 : vector<16x8xf32> to vector<2x8x8xf32>
    %339 = vector.extract_strided_slice %253 {offsets = [0, 88], sizes = [16, 8], strides = [1, 1]} : vector<16x96xf32> to vector<16x8xf32>
    %340 = vector.shape_cast %339 : vector<16x8xf32> to vector<2x8x8xf32>
    %341 = arith.truncf %336 : vector<2x8x8xf32> to vector<2x8x8xbf16>
    %342 = arith.truncf %338 : vector<2x8x8xf32> to vector<2x8x8xbf16>
    "tpu.trace_start"() <{level = 10 : i32, message = "btk,bsk->bts"}> : () -> ()
    %cst_92 = arith.constant dense<0.000000e+00> : vector<2x8x8xf32>
    %343 = tpu.matmul %341, %342, %cst_92 {dimension_numbers = #tpu.dot_dimension_numbers<[2], [2], [1], [1], [0, 0, 0, 1, 1, 1], [0], [0]>} : vector<2x8x8xbf16>, vector<2x8x8xbf16>, vector<2x8x8xf32> -> vector<2x8x8xf32>
    "tpu.trace_stop"() : () -> ()
    %cst_93 = arith.constant 0.353553385 : f32
    %344 = vector.broadcast %cst_93 : f32 to vector<2x8x8xf32>
    %345 = arith.mulf %343, %344 : vector<2x8x8xf32>
    %346 = vector.broadcast %22 : vector<1x8x8xf32> to vector<2x8x8xf32>
    %347 = arith.addf %345, %346 : vector<2x8x8xf32>
    %cst_94 = arith.constant dense<0xFF800000> : vector<2x8xf32>
    %348 = vector.multi_reduction <maximumf>, %347, %cst_94 [2] : vector<2x8x8xf32> to vector<2x8xf32>
    %349 = vector.shape_cast %348 : vector<2x8xf32> to vector<2x8x1xf32>
    %350 = vector.broadcast %349 : vector<2x8x1xf32> to vector<2x8x8xf32>
    %351 = arith.subf %347, %350 : vector<2x8x8xf32>
    %352 = math.exp %351 : vector<2x8x8xf32>
    %cst_95 = arith.constant dense<0.000000e+00> : vector<2x8xf32>
    %353 = vector.multi_reduction <add>, %352, %cst_95 [2] : vector<2x8x8xf32> to vector<2x8xf32>
    %354 = vector.shape_cast %353 : vector<2x8xf32> to vector<2x8x1xf32>
    %355 = tpu.reciprocal %354 {approx = true} : vector<2x8x1xf32> -> vector<2x8x1xf32>
    %356 = vector.broadcast %355 : vector<2x8x1xf32> to vector<2x8x8xf32>
    %357 = arith.mulf %352, %356 : vector<2x8x8xf32>
    %358 = arith.truncf %357 : vector<2x8x8xf32> to vector<2x8x8xbf16>
    %359 = arith.truncf %340 : vector<2x8x8xf32> to vector<2x8x8xbf16>
    "tpu.trace_start"() <{level = 10 : i32, message = "bts,bsk->btk"}> : () -> ()
    %cst_96 = arith.constant dense<0.000000e+00> : vector<2x8x8xf32>
    %360 = tpu.matmul %358, %359, %cst_96 {dimension_numbers = #tpu.dot_dimension_numbers<[2], [1], [1], [2], [0, 0, 0, 1, 1, 2], [0], [0]>} : vector<2x8x8xbf16>, vector<2x8x8xbf16>, vector<2x8x8xf32> -> vector<2x8x8xf32>
    "tpu.trace_stop"() : () -> ()
    %361 = vector.shape_cast %360 : vector<2x8x8xf32> to vector<16x8xf32>
    %362 = tpu.concatenate %280, %307, %334, %361 in 1 : vector<16x8xf32>, vector<16x8xf32>, vector<16x8xf32>, vector<16x8xf32> -> vector<16x32xf32>
    %c1_97 = arith.constant 1 : index
    %c0_98 = arith.constant 0 : index
    %c0_99 = arith.constant 0 : index
    %363 = vector.load %arg3[%c1_97, %c0_98, %c0_99] : memref<2x32x32xbf16, #tpu.memory_space<vmem>>, vector<1x32x32xbf16>
    %364 = vector.shape_cast %363 : vector<1x32x32xbf16> to vector<32x32xbf16>
    %365 = arith.truncf %362 : vector<16x32xf32> to vector<16x32xbf16>
    %cst_100 = arith.constant dense<0.000000e+00> : vector<16x32xf32>
    %366 = tpu.matmul %365, %364, %cst_100 {dimension_numbers = #tpu.dot_dimension_numbers<[1], [0], [0], [1], [0, 0, 1, 1], [], []>} : vector<16x32xbf16>, vector<32x32xbf16>, vector<16x32xf32> -> vector<16x32xf32>
    %367 = arith.addf %222, %366 : vector<16x32xf32>
    %c11 = arith.constant 11 : index
    %c0_101 = arith.constant 0 : index
    %368 = vector.load %arg6[%c11, %c0_101] : memref<18x128xf32, #tpu.memory_space<vmem>>, vector<1x32xf32>
    %369 = vector.broadcast %368 : vector<1x32xf32> to vector<16x32xf32>
    %370 = arith.addf %367, %369 : vector<16x32xf32>
    %c12 = arith.constant 12 : index
    %c0_102 = arith.constant 0 : index
    %371 = vector.load %arg6[%c12, %c0_102] : memref<18x128xf32, #tpu.memory_space<vmem>>, vector<1x32xf32>
    %c13 = arith.constant 13 : index
    %c0_103 = arith.constant 0 : index
    %372 = vector.load %arg6[%c13, %c0_103] : memref<18x128xf32, #tpu.memory_space<vmem>>, vector<1x32xf32>
    %cst_104 = arith.constant dense<0.000000e+00> : vector<16xf32>
    %373 = vector.multi_reduction <add>, %370, %cst_104 [1] : vector<16x32xf32> to vector<16xf32>
    %374 = vector.shape_cast %373 : vector<16xf32> to vector<16x1xf32>
    %cst_105 = arith.constant 3.200000e+01 : f32
    %375 = vector.broadcast %cst_105 : f32 to vector<16x1xf32>
    %376 = arith.divf %374, %375 : vector<16x1xf32>
    %377 = vector.broadcast %376 : vector<16x1xf32> to vector<16x32xf32>
    %378 = arith.subf %370, %377 : vector<16x32xf32>
    %379 = arith.mulf %378, %378 : vector<16x32xf32>
    %cst_106 = arith.constant dense<0.000000e+00> : vector<16xf32>
    %380 = vector.multi_reduction <add>, %379, %cst_106 [1] : vector<16x32xf32> to vector<16xf32>
    %381 = vector.shape_cast %380 : vector<16xf32> to vector<16x1xf32>
    %cst_107 = arith.constant 3.200000e+01 : f32
    %382 = vector.broadcast %cst_107 : f32 to vector<16x1xf32>
    %383 = arith.divf %381, %382 : vector<16x1xf32>
    %384 = vector.broadcast %376 : vector<16x1xf32> to vector<16x32xf32>
    %385 = arith.subf %370, %384 : vector<16x32xf32>
    %cst_108 = arith.constant 9.99999974E-6 : f32
    %386 = vector.broadcast %cst_108 : f32 to vector<16x1xf32>
    %387 = arith.addf %383, %386 : vector<16x1xf32>
    %388 = math.rsqrt %387 : vector<16x1xf32>
    %389 = vector.broadcast %388 : vector<16x1xf32> to vector<16x32xf32>
    %390 = arith.mulf %385, %389 : vector<16x32xf32>
    %391 = vector.broadcast %371 : vector<1x32xf32> to vector<16x32xf32>
    %392 = arith.mulf %390, %391 : vector<16x32xf32>
    %393 = vector.broadcast %372 : vector<1x32xf32> to vector<16x32xf32>
    %394 = arith.addf %392, %393 : vector<16x32xf32>
    %c1_109 = arith.constant 1 : index
    %c0_110 = arith.constant 0 : index
    %c0_111 = arith.constant 0 : index
    %395 = vector.load %arg4[%c1_109, %c0_110, %c0_111] : memref<2x32x128xbf16, #tpu.memory_space<vmem>>, vector<1x32x128xbf16>
    %396 = vector.shape_cast %395 : vector<1x32x128xbf16> to vector<32x128xbf16>
    %397 = arith.truncf %394 : vector<16x32xf32> to vector<16x32xbf16>
    %cst_112 = arith.constant dense<0.000000e+00> : vector<16x128xf32>
    %398 = tpu.matmul %397, %396, %cst_112 {dimension_numbers = #tpu.dot_dimension_numbers<[1], [0], [0], [1], [0, 0, 1, 1], [], []>} : vector<16x32xbf16>, vector<32x128xbf16>, vector<16x128xf32> -> vector<16x128xf32>
    %c14 = arith.constant 14 : index
    %c0_113 = arith.constant 0 : index
    %399 = vector.load %arg6[%c14, %c0_113] : memref<18x128xf32, #tpu.memory_space<vmem>>, vector<1x128xf32>
    %400 = vector.broadcast %399 : vector<1x128xf32> to vector<16x128xf32>
    %401 = arith.addf %398, %400 : vector<16x128xf32>
    %402 = arith.mulf %401, %401 : vector<16x128xf32>
    %403 = arith.mulf %401, %402 : vector<16x128xf32>
    %cst_114 = arith.constant 4.471500e-02 : f32
    %404 = vector.broadcast %cst_114 : f32 to vector<16x128xf32>
    %405 = arith.mulf %404, %403 : vector<16x128xf32>
    %406 = arith.addf %401, %405 : vector<16x128xf32>
    %cst_115 = arith.constant 0.797884583 : f32
    %407 = vector.broadcast %cst_115 : f32 to vector<16x128xf32>
    %408 = arith.mulf %407, %406 : vector<16x128xf32>
    %409 = math.tanh %408 : vector<16x128xf32>
    %cst_116 = arith.constant 1.000000e+00 : f32
    %410 = vector.broadcast %cst_116 : f32 to vector<16x128xf32>
    %411 = arith.addf %410, %409 : vector<16x128xf32>
    %cst_117 = arith.constant 5.000000e-01 : f32
    %412 = vector.broadcast %cst_117 : f32 to vector<16x128xf32>
    %413 = arith.mulf %412, %411 : vector<16x128xf32>
    %414 = arith.mulf %401, %413 : vector<16x128xf32>
    %c1_118 = arith.constant 1 : index
    %c0_119 = arith.constant 0 : index
    %c0_120 = arith.constant 0 : index
    %415 = vector.load %arg5[%c1_118, %c0_119, %c0_120] : memref<2x128x32xbf16, #tpu.memory_space<vmem>>, vector<1x128x32xbf16>
    %416 = vector.shape_cast %415 : vector<1x128x32xbf16> to vector<128x32xbf16>
    %417 = arith.truncf %414 : vector<16x128xf32> to vector<16x128xbf16>
    %cst_121 = arith.constant dense<0.000000e+00> : vector<16x32xf32>
    %418 = tpu.matmul %417, %416, %cst_121 {dimension_numbers = #tpu.dot_dimension_numbers<[1], [0], [0], [1], [0, 0, 1, 1], [], []>} : vector<16x128xbf16>, vector<128x32xbf16>, vector<16x32xf32> -> vector<16x32xf32>
    %419 = arith.addf %370, %418 : vector<16x32xf32>
    %c15 = arith.constant 15 : index
    %c0_122 = arith.constant 0 : index
    %420 = vector.load %arg6[%c15, %c0_122] : memref<18x128xf32, #tpu.memory_space<vmem>>, vector<1x32xf32>
    %421 = vector.broadcast %420 : vector<1x32xf32> to vector<16x32xf32>
    %422 = arith.addf %419, %421 : vector<16x32xf32>
    %c16 = arith.constant 16 : index
    %c0_123 = arith.constant 0 : index
    %423 = vector.load %arg6[%c16, %c0_123] : memref<18x128xf32, #tpu.memory_space<vmem>>, vector<1x32xf32>
    %c17 = arith.constant 17 : index
    %c0_124 = arith.constant 0 : index
    %424 = vector.load %arg6[%c17, %c0_124] : memref<18x128xf32, #tpu.memory_space<vmem>>, vector<1x32xf32>
    %cst_125 = arith.constant dense<0.000000e+00> : vector<16xf32>
    %425 = vector.multi_reduction <add>, %422, %cst_125 [1] : vector<16x32xf32> to vector<16xf32>
    %426 = vector.shape_cast %425 : vector<16xf32> to vector<16x1xf32>
    %cst_126 = arith.constant 3.200000e+01 : f32
    %427 = vector.broadcast %cst_126 : f32 to vector<16x1xf32>
    %428 = arith.divf %426, %427 : vector<16x1xf32>
    %429 = vector.broadcast %428 : vector<16x1xf32> to vector<16x32xf32>
    %430 = arith.subf %422, %429 : vector<16x32xf32>
    %431 = arith.mulf %430, %430 : vector<16x32xf32>
    %cst_127 = arith.constant dense<0.000000e+00> : vector<16xf32>
    %432 = vector.multi_reduction <add>, %431, %cst_127 [1] : vector<16x32xf32> to vector<16xf32>
    %433 = vector.shape_cast %432 : vector<16xf32> to vector<16x1xf32>
    %cst_128 = arith.constant 3.200000e+01 : f32
    %434 = vector.broadcast %cst_128 : f32 to vector<16x1xf32>
    %435 = arith.divf %433, %434 : vector<16x1xf32>
    %436 = vector.broadcast %428 : vector<16x1xf32> to vector<16x32xf32>
    %437 = arith.subf %422, %436 : vector<16x32xf32>
    %cst_129 = arith.constant 9.99999974E-6 : f32
    %438 = vector.broadcast %cst_129 : f32 to vector<16x1xf32>
    %439 = arith.addf %435, %438 : vector<16x1xf32>
    %440 = math.rsqrt %439 : vector<16x1xf32>
    %441 = vector.broadcast %440 : vector<16x1xf32> to vector<16x32xf32>
    %442 = arith.mulf %437, %441 : vector<16x32xf32>
    %443 = vector.broadcast %423 : vector<1x32xf32> to vector<16x32xf32>
    %444 = arith.mulf %442, %443 : vector<16x32xf32>
    %445 = vector.broadcast %424 : vector<1x32xf32> to vector<16x32xf32>
    %446 = arith.addf %444, %445 : vector<16x32xf32>
    %c0_130 = arith.constant 0 : index
    %c0_131 = arith.constant 0 : index
    %447 = vector.load %arg7[%c0_130, %c0_131] : memref<32x128xbf16, #tpu.memory_space<vmem>>, vector<32x128xbf16>
    %448 = arith.truncf %446 : vector<16x32xf32> to vector<16x32xbf16>
    %cst_132 = arith.constant dense<0.000000e+00> : vector<16x128xf32>
    %449 = tpu.matmul %448, %447, %cst_132 {dimension_numbers = #tpu.dot_dimension_numbers<[1], [0], [0], [1], [0, 0, 1, 1], [], []>} : vector<16x32xbf16>, vector<32x128xbf16>, vector<16x128xf32> -> vector<16x128xf32>
    %450 = vector.shape_cast %449 : vector<16x128xf32> to vector<2x8x128xf32>
    %c0_133 = arith.constant 0 : index
    %c0_134 = arith.constant 0 : index
    %c0_135 = arith.constant 0 : index
    %451 = vector.load %arg8[%c0_133, %c0_134, %c0_135] : memref<2x8x128xf32, #tpu.memory_space<vmem>>, vector<2x8x128xf32>
    tpu.vector_store %arg8[%c0_133, %c0_134, %c0_135], %450 {strides = array<i32>} : memref<2x8x128xf32, #tpu.memory_space<vmem>>, vector<2x8x128xf32>,
    return
  }
}

</mosaic_0001>

<llo_original>
// kernel: run_transformer_lm_head.1
$region0: #{run_transformer_lm_head.1}
  #allocation0 [shape = 'u32[]', space=smem, size = 0x4, offset = 0x4, fixed_abs, tag = 'smem constant byte address 0x4 - core index']
  #allocation1 [shape = 'u32[144,128]{1,0:T(1,128)}', space=vmem, size = 0x12000, scoped, tag = 'internal scratch']
  %s0 = inlined_call_operand.vmem [shape: s32[2,8,1], index: 0, kind: input, shape index: {}]
  %s1 = inlined_call_operand.vmem [shape: f32[80,32], index: 1, kind: input, shape index: {}]
  %s2 = inlined_call_operand.vmem [shape: bf16[2,32,96], index: 2, kind: input, shape index: {}]
  %s3 = inlined_call_operand.vmem [shape: bf16[2,32,32], index: 3, kind: input, shape index: {}]
  %s4 = inlined_call_operand.vmem [shape: bf16[2,32,128], index: 4, kind: input, shape index: {}]
  %s5 = inlined_call_operand.vmem [shape: bf16[2,128,32], index: 5, kind: input, shape index: {}]
  %s6 = inlined_call_operand.vmem [shape: f32[18,128], index: 6, kind: input, shape index: {}]
  %s7 = inlined_call_operand.vmem [shape: bf16[32,128], index: 7, kind: input, shape index: {}]
  %s8 = inlined_call_operand.hbm [shape: f32[2,8,128], index: 8, kind: output, shape index: {}]
  %s9 = sld [smem:[#allocation0]]
  $region42: #{run_transformer_lm_head.1} parent=0
    _
  %s11 = ssub.s32 1, %s9
  %s12 = scalar_select 0, %s11, %s9
  $region1: #{run_transformer_lm_head.1} parent=0
    #allocation2 [shape = 'u8[8192]{0}', space=vmem, size = 0x2000, scoped, tag = 'output window, operand 0, single buffered']
    #allocation3 [shape = 's32[1]{0}', space=sflag, size = 0x4, scoped, tag = 'scoped memory for run_transformer_lm_head.1']
    %13 = vsyncpa [#allocation3], 0
    // Predicated region
    $region2: #{run_transformer_lm_head.1} parent=1 // pred_check
      _
    $region3: #{run_transformer_lm_head.1} parent=1 // pred_check_branch
      %15 = sbr.rel (0) target = $region5
    $region4: #{run_transformer_lm_head.1} parent=1 // pred_region
      _
    $region5: #{run_transformer_lm_head.1} parent=1 // pred_fallthru
      _
    // Predicated region
    $region6: #{run_transformer_lm_head.1} parent=1 // pred_check
      _
    $region7: #{run_transformer_lm_head.1} parent=1 // pred_check_branch
      %17 = sbr.rel (0) target = $region9
    $region8: #{run_transformer_lm_head.1} parent=1 // pred_region
      _
    $region9: #{run_transformer_lm_head.1} parent=1 // pred_fallthru
      _
    // Predicated region
    $region10: #{run_transformer_lm_head.1} parent=1 // pred_check
      _
    $region11: #{run_transformer_lm_head.1} parent=1 // pred_check_branch
      %19 = sbr.rel (0) target = $region13
    $region12: #{run_transformer_lm_head.1} parent=1 // pred_region
      _
    $region13: #{run_transformer_lm_head.1} parent=1 // pred_fallthru
      _
    // Predicated region
    $region14: #{run_transformer_lm_head.1} parent=1 // pred_check
      _
    $region15: #{run_transformer_lm_head.1} parent=1 // pred_check_branch
      %21 = sbr.rel (0) target = $region17
    $region16: #{run_transformer_lm_head.1} parent=1 // pred_region
      _
    $region17: #{run_transformer_lm_head.1} parent=1 // pred_fallthru
      _
    // Predicated region
    $region18: #{run_transformer_lm_head.1} parent=1 // pred_check
      _
    $region19: #{run_transformer_lm_head.1} parent=1 // pred_check_branch
      %23 = sbr.rel (0) target = $region21
    $region20: #{run_transformer_lm_head.1} parent=1 // pred_region
      _
    $region21: #{run_transformer_lm_head.1} parent=1 // pred_fallthru
      _
    // Predicated region
    $region22: #{run_transformer_lm_head.1} parent=1 // pred_check
      _
    $region23: #{run_transformer_lm_head.1} parent=1 // pred_check_branch
      %25 = sbr.rel (0) target = $region25
    $region24: #{run_transformer_lm_head.1} parent=1 // pred_region
      _
    $region25: #{run_transformer_lm_head.1} parent=1 // pred_fallthru
      _
    // Predicated region
    $region26: #{run_transformer_lm_head.1} parent=1 // pred_check
      _
    $region27: #{run_transformer_lm_head.1} parent=1 // pred_check_branch
      %27 = sbr.rel (0) target = $region29
    $region28: #{run_transformer_lm_head.1} parent=1 // pred_region
      _
    $region29: #{run_transformer_lm_head.1} parent=1 // pred_fallthru
      _
    // Predicated region
    $region30: #{run_transformer_lm_head.1} parent=1 // pred_check
      _
    $region31: #{run_transformer_lm_head.1} parent=1 // pred_check_branch
      %29 = sbr.rel (0) target = $region33
    $region32: #{run_transformer_lm_head.1} parent=1 // pred_region
      _
    $region33: #{run_transformer_lm_head.1} parent=1 // pred_fallthru
      _
    %v31 = vlaneseq
    %v32 = vand.u32 %v31, 127
    %v33 = vld [vmem:[%s0] sm:$0xff]
    %v34 = vld [vmem:[%s0 + $0x8] sm:$0xff]
    %35 = vset.pattern.permute.xlu0 0
    %36 = vperm.xlu0 %35, %v33
    %v37 = vpop.permute.xlu0 %36
    %38 = vset.pattern.permute.xlu0 0
    %39 = vperm.xlu0 %38, %v34
    %v40 = vpop.permute.xlu0 %39
    %vm41 = vcmp.eq.s32.totalorder %v32, %v37
    %vm42 = vcmp.eq.s32.totalorder %v32, %v40
    %v43 = vsel %vm41, 1, 0
    %v44 = vsel %vm42, 1, 0
    %v45 = vcvt.s32.f32 %v43
    %v46 = vcvt.s32.f32 %v44
    %v47 = vlaneseq
    %v48 = vshrl.u32 %v47, 7
    %v49 = vadd.s32 %v48, 64
    %vm50 = vcmp.eq.s32.totalorder %v32, %v49
    %v51 = vsel %vm50, 1, 0
    %v52 = vcvt.s32.f32 %v51
    %v53 = vadd.f32 %v45, %v52
    %v54 = vadd.f32 %v46, %v52
    %v55 = vld [vmem:[%s1] sm:$0xff]
    %v56 = vld [vmem:[%s1 + $0x8] sm:$0xff]
    %v57 = vld [vmem:[%s1 + $0x10] sm:$0xff]
    %v58 = vld [vmem:[%s1 + $0x18] sm:$0xff]
    %v59 = vld [vmem:[%s1 + $0x20] sm:$0xff]
    %v60 = vld [vmem:[%s1 + $0x28] sm:$0xff]
    %v61 = vld [vmem:[%s1 + $0x30] sm:$0xff]
    %v62 = vld [vmem:[%s1 + $0x38] sm:$0xff]
    %v63 = vld [vmem:[%s1 + $0x40] sm:$0xff]
    %v64 = vld [vmem:[%s1 + $0x48] sm:$0xff]
    %vm65 = vcmask 654336
    %v67 = vsel %vm65, %v53, 0
    %v70 = vsel %vm65, %v54, 0
    %72 = vmatprep.subr.mxu0 0.0
    %73 = vmatpush1.msra.mxu0 0.0
    %74 = vmatprep.subr.mxu0 0.0
    %75 = vmatpush1.msra.mxu0 0.0
    %76 = vmatprep.subr.mxu0 0.0
    %77 = vmatpush1.msra.mxu0 0.0
    %78 = vmatprep.subr.mxu0 0.0
    %79 = vmatpush1.msra.mxu0 0.0
    %80 = vmatprep.subr.mxu0 0.0
    %81 = vmatpush1.msra.mxu0 0.0
    %82 = vmatprep.subr.mxu0 0.0
    %83 = vmatpush1.msra.mxu0 0.0
    %84 = vmatprep.subr.mxu0 0.0
    %85 = vmatpush1.msra.mxu0 %v64
    %86 = vmatprep.subr.mxu0 0.0
    %87 = vmatpush1.msra.mxu0 %v63
    %88 = vmatprep.subr.mxu0 0.0
    %89 = vmatpush1.msra.mxu0 %v62
    %90 = vmatprep.subr.mxu0 0.0
    %91 = vmatpush1.msra.mxu0 %v61
    %92 = vmatprep.subr.mxu0 0.0
    %93 = vmatpush1.msra.mxu0 %v60
    %94 = vmatprep.subr.mxu0 0.0
    %95 = vmatpush1.msra.mxu0 %v59
    %96 = vmatprep.subr.mxu0 0.0
    %97 = vmatpush1.msra.mxu0 %v58
    %98 = vmatprep.subr.mxu0 0.0
    %99 = vmatpush1.msra.mxu0 %v57
    %100 = vmatprep.subr.mxu0 0.0
    %101 = vmatpush1.msra.mxu0 %v56
    %102 = vmatprep.subr.mxu0 0.0
    %103 = vmatpush1.msra.mxu0 %v55
    %104 = vmatprep.subr.mxu0 0.0
    %105 = vmatpush2.msra.mxu0 0.0
    %106 = vmatprep.subr.mxu0 0.0
    %107 = vmatpush2.msra.mxu0 0.0
    %108 = vmatprep.subr.mxu0 0.0
    %109 = vmatpush2.msra.mxu0 0.0
    %110 = vmatprep.subr.mxu0 0.0
    %111 = vmatpush2.msra.mxu0 0.0
    %112 = vmatprep.subr.mxu0 0.0
    %113 = vmatpush2.msra.mxu0 0.0
    %114 = vmatprep.subr.mxu0 0.0
    %115 = vmatpush2.msra.mxu0 0.0
    %116 = vmatprep.subr.mxu0 0.0
    %117 = vmatpush2.msra.mxu0 0.0
    %118 = vmatprep.subr.mxu0 0.0
    %119 = vmatpush2.msra.mxu0 0.0
    %120 = vmatprep.subr.mxu0 0.0
    %121 = vmatpush2.msra.mxu0 0.0
    %122 = vmatprep.subr.mxu0 0.0
    %123 = vmatpush2.msra.mxu0 0.0
    %124 = vmatprep.subr.mxu0 0.0
    %125 = vmatpush2.msra.mxu0 0.0
    %126 = vmatprep.subr.mxu0 0.0
    %127 = vmatpush2.msra.mxu0 0.0
    %128 = vmatprep.subr.mxu0 0.0
    %129 = vmatpush2.msra.mxu0 0.0
    %130 = vmatprep.subr.mxu0 0.0
    %131 = vmatpush2.msra.mxu0 0.0
    %132 = vmatprep.subr.mxu0 0.0
    %133 = vmatpush2.msra.mxu0 0.0
    %134 = vmatprep.subr.mxu0 0.0
    %135 = vmatpush2.msra.mxu0 0.0
    %136 = vmatprep.mubr.f32.mxu0 0.0
    %137 = vmatmul.mubr.f32.gmra.mxu0 %v67
    %v138 = vpop.f32.mrf.mxu0
    %v139 = vadd.f32 0.0, %v138
    %v140 = vpop.f32.mrf.mxu0
    %141 = vmatprep.mubr.f32.mxu0 0.0
    %142 = vmatmul.mubr.f32.gmra.mxu0 %v70
    %v143 = vpop.f32.mrf.mxu0
    %v144 = vadd.f32 0.0, %v143
    %v145 = vpop.f32.mrf.mxu0
    %146 = vdwg.mxu0
    %vm147 = vcmp.ge.s32.totalorder %v48, %v32
    %v148 = vsel %vm147, 0.0, -1e+30
    %v149 = vld [vmem:[%s6] sm:$0x1]
    %v150 = vld [vmem:[%s6 + $0x1] sm:$0x1]
    %vm151 = vcmask 261120
    %v152 = vsel %vm151, %v139, 0.0
    %153 = vadd.xlane.f32.xlu0 %v152
    %v154 = vpop.xlane.xlu0 %153
    %v155 = vsel %vm151, %v144, 0.0
    %156 = vadd.xlane.f32.xlu0 %v155
    %v157 = vpop.xlane.xlu0 %156
    %v158 = vrcp.pop 32.0
    %v159 = vmul.f32 %v154, %v158
    %v160 = vmul.f32 %v157, %v158
    %v161 = vsub.f32 %v139, %v159
    %v162 = vsub.f32 %v144, %v160
    %v163 = vmul.f32 %v161, %v161
    %v164 = vmul.f32 %v162, %v162
    %v165 = vsel %vm151, %v163, 0.0
    %166 = vadd.xlane.f32.xlu0 %v165
    %v167 = vpop.xlane.xlu0 %166
    %v168 = vsel %vm151, %v164, 0.0
    %169 = vadd.xlane.f32.xlu0 %v168
    %v170 = vpop.xlane.xlu0 %169
    %v171 = vmul.f32 %v167, %v158
    %v172 = vmul.f32 %v170, %v158
    %v173 = vadd.f32 %v171, 1e-05
    %v174 = vadd.f32 %v172, 1e-05
    %v175 = vrsqrt.pop %v173
    %v176 = vrsqrt.pop %v174
    %v177 = vmul.f32 %v161, %v175
    %v178 = vmul.f32 %v162, %v176
    %v179 = vlaneseq
    %v180 = vshrl.u32 %v179, 7
    %v181 = vsub.s32 0, %v180
    %v182 = vrot.slane %v149, %v181
    %v183 = vmul.f32 %v177, %v182
    %v184 = vmul.f32 %v178, %v182
    %v185 = vlaneseq
    %v186 = vshrl.u32 %v185, 7
    %v187 = vsub.s32 0, %v186
    %v188 = vrot.slane %v150, %v187
    %v189 = vadd.f32 %v183, %v188
    %v190 = vadd.f32 %v184, %v188
    %v191 = vld [vmem:[%s2] sm:$0xf]
    %v192 = vld [vmem:[%s2 + $0x4] sm:$0xf]
    %v193 = vld [vmem:[%s2 + $0x8] sm:$0xf]
    %v194 = vld [vmem:[%s2 + $0xc] sm:$0xf]
    %v195 = vpack.c.bf16 %v190, %v189
    %v196 = vld [vmem:[%s6 + $0x2] sm:$0x1]
    %v197 = vlaneseq
    %v198 = vshrl.u32 %v197, 7
    %v199 = vsub.s32 0, %v198
    %v200 = vrot.slane %v196, %v199
    %v205 = vunpack.c.l.b16 %v191
    %v206 = vunpack.c.l.b16 %v192
    %v207 = vunpack.c.l.b16 %v193
    %v208 = vunpack.c.l.b16 %v194
    %v209 = vpack.c.b16 %v206, %v205
    %v210 = vpack.c.b16 %v208, %v207
    %v214 = vsel %vm151, %v195, 0
    %216 = vmatprep.subr.bf16.mxu0 0
    %217 = vmatpush1.bf16.msra.mxu0 0
    %218 = vmatprep.subr.bf16.mxu0 0
    %219 = vmatpush1.bf16.msra.mxu0 0
    %220 = vmatprep.subr.bf16.mxu0 0
    %221 = vmatpush1.bf16.msra.mxu0 0
    %222 = vmatprep.subr.bf16.mxu0 0
    %223 = vmatpush1.bf16.msra.mxu0 0
    %224 = vmatprep.subr.bf16.mxu0 0
    %225 = vmatpush1.bf16.msra.mxu0 0
    %226 = vmatprep.subr.bf16.mxu0 0
    %227 = vmatpush1.bf16.msra.mxu0 0
    %228 = vmatprep.subr.bf16.mxu0 0
    %229 = vmatpush1.bf16.msra.mxu0 %v210
    %230 = vmatprep.subr.bf16.mxu0 0
    %231 = vmatpush1.bf16.msra.mxu0 %v209
    %232 = vmatprep.subr.bf16.mxu0 0
    %233 = vmatpush2.bf16.msra.mxu0 0
    %234 = vmatprep.subr.bf16.mxu0 0
    %235 = vmatpush2.bf16.msra.mxu0 0
    %236 = vmatprep.subr.bf16.mxu0 0
    %237 = vmatpush2.bf16.msra.mxu0 0
    %238 = vmatprep.subr.bf16.mxu0 0
    %239 = vmatpush2.bf16.msra.mxu0 0
    %240 = vmatprep.subr.bf16.mxu0 0
    %241 = vmatpush2.bf16.msra.mxu0 0
    %242 = vmatprep.subr.bf16.mxu0 0
    %243 = vmatpush2.bf16.msra.mxu0 0
    %244 = vmatprep.subr.bf16.mxu0 0
    %245 = vmatpush2.bf16.msra.mxu0 0
    %246 = vmatprep.subr.bf16.mxu0 0
    %247 = vmatpush2.bf16.msra.mxu0 0
    %248 = vmatprep.mubr.bf16.mxu0 0
    %249 = vmatmul.mubr.bf16.gmra.mxu0 %v214
    %v250 = vpop.f32.mrf.mxu0
    %v251 = vadd.f32 %v200, %v250
    %v252 = vpop.f32.mrf.mxu0
    %v253 = vpop.f32.mrf.mxu0
    %v254 = vadd.f32 %v200, %v253
    %v255 = vpop.f32.mrf.mxu0
    %256 = vdwg.mxu0
    %v257 = vpack.c.bf16 %v251, %v251
    %v258 = vpack.c.bf16 %v254, %v254
    %260 = vrot.lane.b32.xlu0 %v257, 96
    %v261 = vpop.permute.xlu0 %260
    %vm262 = vcmask 64512
    %v264 = vsel %vm262, %v257, 0
    %v267 = vsel %vm262, %v261, 0
    %269 = vmatprep.subr.bf16.mxu0 0
    %270 = vmatpush1.bf16.xpose.msra.mxu0 0
    %271 = vmatprep.subr.bf16.mxu0 0
    %272 = vmatpush1.bf16.xpose.msra.mxu0 0
    %273 = vmatprep.subr.bf16.mxu0 0
    %274 = vmatpush1.bf16.xpose.msra.mxu0 0
    %275 = vmatprep.subr.bf16.mxu0 0
    %276 = vmatpush1.bf16.xpose.msra.mxu0 0
    %277 = vmatprep.subr.bf16.mxu0 0
    %278 = vmatpush1.bf16.xpose.msra.mxu0 0
    %279 = vmatprep.subr.bf16.mxu0 0
    %280 = vmatpush1.bf16.xpose.msra.mxu0 0
    %281 = vmatprep.subr.bf16.mxu0 0
    %282 = vmatpush1.bf16.xpose.msra.mxu0 0
    %283 = vmatprep.subr.bf16.mxu0 0
    %284 = vmatpush1.bf16.xpose.msra.mxu0 %v267
    %285 = vmatprep.subr.bf16.mxu0 0
    %286 = vmatpush2.bf16.xpose.msra.mxu0 0
    %287 = vmatprep.subr.bf16.mxu0 0
    %288 = vmatpush2.bf16.xpose.msra.mxu0 0
    %289 = vmatprep.subr.bf16.mxu0 0
    %290 = vmatpush2.bf16.xpose.msra.mxu0 0
    %291 = vmatprep.subr.bf16.mxu0 0
    %292 = vmatpush2.bf16.xpose.msra.mxu0 0
    %293 = vmatprep.subr.bf16.mxu0 0
    %294 = vmatpush2.bf16.xpose.msra.mxu0 0
    %295 = vmatprep.subr.bf16.mxu0 0
    %296 = vmatpush2.bf16.xpose.msra.mxu0 0
    %297 = vmatprep.subr.bf16.mxu0 0
    %298 = vmatpush2.bf16.xpose.msra.mxu0 0
    %299 = vmatprep.subr.bf16.mxu0 0
    %300 = vmatpush2.bf16.xpose.msra.mxu0 0
    %301 = vmatprep.mubr.bf16.mxu0 0
    %302 = vmatmul.mubr.bf16.gmra.mxu0 %v264
    %v303 = vpop.f32.mrf.mxu0
    %v304 = vadd.f32 0.0, %v303
    %v305 = vpop.f32.mrf.mxu0
    %v306 = vpop.f32.mrf.mxu0
    %v307 = vpop.f32.mrf.mxu0
    %308 = vdwg.mxu0
    %310 = vrot.lane.b32.xlu0 %v258, 96
    %v311 = vpop.permute.xlu0 %310
    %v313 = vsel %vm262, %v258, 0
    %v316 = vsel %vm262, %v311, 0
    %318 = vmatprep.subr.bf16.mxu0 0
    %319 = vmatpush1.bf16.xpose.msra.mxu0 0
    %320 = vmatprep.subr.bf16.mxu0 0
    %321 = vmatpush1.bf16.xpose.msra.mxu0 0
    %322 = vmatprep.subr.bf16.mxu0 0
    %323 = vmatpush1.bf16.xpose.msra.mxu0 0
    %324 = vmatprep.subr.bf16.mxu0 0
    %325 = vmatpush1.bf16.xpose.msra.mxu0 0
    %326 = vmatprep.subr.bf16.mxu0 0
    %327 = vmatpush1.bf16.xpose.msra.mxu0 0
    %328 = vmatprep.subr.bf16.mxu0 0
    %329 = vmatpush1.bf16.xpose.msra.mxu0 0
    %330 = vmatprep.subr.bf16.mxu0 0
    %331 = vmatpush1.bf16.xpose.msra.mxu0 0
    %332 = vmatprep.subr.bf16.mxu0 0
    %333 = vmatpush1.bf16.xpose.msra.mxu0 %v316
    %334 = vmatprep.subr.bf16.mxu0 0
    %335 = vmatpush2.bf16.xpose.msra.mxu0 0
    %336 = vmatprep.subr.bf16.mxu0 0
    %337 = vmatpush2.bf16.xpose.msra.mxu0 0
    %338 = vmatprep.subr.bf16.mxu0 0
    %339 = vmatpush2.bf16.xpose.msra.mxu0 0
    %340 = vmatprep.subr.bf16.mxu0 0
    %341 = vmatpush2.bf16.xpose.msra.mxu0 0
    %342 = vmatprep.subr.bf16.mxu0 0
    %343 = vmatpush2.bf16.xpose.msra.mxu0 0
    %344 = vmatprep.subr.bf16.mxu0 0
    %345 = vmatpush2.bf16.xpose.msra.mxu0 0
    %346 = vmatprep.subr.bf16.mxu0 0
    %347 = vmatpush2.bf16.xpose.msra.mxu0 0
    %348 = vmatprep.subr.bf16.mxu0 0
    %349 = vmatpush2.bf16.xpose.msra.mxu0 0
    %350 = vmatprep.mubr.bf16.mxu0 0
    %351 = vmatmul.mubr.bf16.gmra.mxu0 %v313
    %v352 = vpop.f32.mrf.mxu0
    %v353 = vadd.f32 0.0, %v352
    %v354 = vpop.f32.mrf.mxu0
    %v355 = vpop.f32.mrf.mxu0
    %v356 = vpop.f32.mrf.mxu0
    %357 = vdwg.mxu0
    %v358 = vmul.f32 %v304, 0.35355338
    %v359 = vmul.f32 %v353, 0.35355338
    %v360 = vadd.f32 %v358, %v148
    %v361 = vadd.f32 %v359, %v148
    %v362 = vsel %vm262, %v360, -inf
    %363 = vmax.xlane.f32.xlu0 %v362
    %v364 = vpop.xlane.xlu0 %363
    %v365 = vsel %vm262, %v361, -inf
    %366 = vmax.xlane.f32.xlu0 %v365
    %v367 = vpop.xlane.xlu0 %366
    %v368 = vsub.f32 %v360, %v364
    %v369 = vsub.f32 %v361, %v367
    %v370 = vmul.f32 %v368, 1.442695
    %v371 = vpow.pop %v370
    %v372 = vmul.f32 %v369, 1.442695
    %v373 = vpow.pop %v372
    %v374 = vsel %vm262, %v371, 0.0
    %375 = vadd.xlane.f32.xlu0 %v374
    %v376 = vpop.xlane.xlu0 %375
    %v377 = vsel %vm262, %v373, 0.0
    %378 = vadd.xlane.f32.xlu0 %v377
    %v379 = vpop.xlane.xlu0 %378
    %v380 = vrcp.pop %v376
    %v381 = vrcp.pop %v379
    %v382 = vmul.f32 %v371, %v380
    %v383 = vmul.f32 %v373, %v381
    %v384 = vpack.c.bf16 %v382, %v382
    %v385 = vpack.c.bf16 %v383, %v383
    %386 = vrot.lane.b32.xlu0 %v257, 64
    %v387 = vpop.permute.xlu0 %386
    %v389 = vsel %vm262, %v384, 0
    %vm391 = vcmask 1043456
    %v393 = vsel %vm391, %v387, 0
    %395 = vmatprep.subr.bf16.mxu0 0
    %396 = vmatpush1.bf16.msra.mxu0 0
    %397 = vmatprep.subr.bf16.mxu0 0
    %398 = vmatpush1.bf16.msra.mxu0 0
    %399 = vmatprep.subr.bf16.mxu0 0
    %400 = vmatpush1.bf16.msra.mxu0 0
    %401 = vmatprep.subr.bf16.mxu0 0
    %402 = vmatpush1.bf16.msra.mxu0 0
    %403 = vmatprep.subr.bf16.mxu0 0
    %404 = vmatpush1.bf16.msra.mxu0 0
    %405 = vmatprep.subr.bf16.mxu0 0
    %406 = vmatpush1.bf16.msra.mxu0 0
    %407 = vmatprep.subr.bf16.mxu0 0
    %408 = vmatpush1.bf16.msra.mxu0 0
    %409 = vmatprep.subr.bf16.mxu0 0
    %410 = vmatpush1.bf16.msra.mxu0 %v393
    %411 = vmatprep.subr.bf16.mxu0 0
    %412 = vmatpush2.bf16.msra.mxu0 0
    %413 = vmatprep.subr.bf16.mxu0 0
    %414 = vmatpush2.bf16.msra.mxu0 0
    %415 = vmatprep.subr.bf16.mxu0 0
    %416 = vmatpush2.bf16.msra.mxu0 0
    %417 = vmatprep.subr.bf16.mxu0 0
    %418 = vmatpush2.bf16.msra.mxu0 0
    %419 = vmatprep.subr.bf16.mxu0 0
    %420 = vmatpush2.bf16.msra.mxu0 0
    %421 = vmatprep.subr.bf16.mxu0 0
    %422 = vmatpush2.bf16.msra.mxu0 0
    %423 = vmatprep.subr.bf16.mxu0 0
    %424 = vmatpush2.bf16.msra.mxu0 0
    %425 = vmatprep.subr.bf16.mxu0 0
    %426 = vmatpush2.bf16.msra.mxu0 0
    %427 = vmatprep.mubr.bf16.mxu0 0
    %428 = vmatmul.mubr.bf16.gmra.mxu0 %v389
    %v429 = vpop.f32.mrf.mxu0
    %v430 = vadd.f32 0.0, %v429
    %v431 = vpop.f32.mrf.mxu0
    %v432 = vpop.f32.mrf.mxu0
    %v433 = vpop.f32.mrf.mxu0
    %434 = vdwg.mxu0
    %435 = vrot.lane.b32.xlu0 %v258, 64
    %v436 = vpop.permute.xlu0 %435
    %v438 = vsel %vm262, %v385, 0
    %v441 = vsel %vm391, %v436, 0
    %443 = vmatprep.subr.bf16.mxu0 0
    %444 = vmatpush1.bf16.msra.mxu0 0
    %445 = vmatprep.subr.bf16.mxu0 0
    %446 = vmatpush1.bf16.msra.mxu0 0
    %447 = vmatprep.subr.bf16.mxu0 0
    %448 = vmatpush1.bf16.msra.mxu0 0
    %449 = vmatprep.subr.bf16.mxu0 0
    %450 = vmatpush1.bf16.msra.mxu0 0
    %451 = vmatprep.subr.bf16.mxu0 0
    %452 = vmatpush1.bf16.msra.mxu0 0
    %453 = vmatprep.subr.bf16.mxu0 0
    %454 = vmatpush1.bf16.msra.mxu0 0
    %455 = vmatprep.subr.bf16.mxu0 0
    %456 = vmatpush1.bf16.msra.mxu0 0
    %457 = vmatprep.subr.bf16.mxu0 0
    %458 = vmatpush1.bf16.msra.mxu0 %v441
    %459 = vmatprep.subr.bf16.mxu0 0
    %460 = vmatpush2.bf16.msra.mxu0 0
    %461 = vmatprep.subr.bf16.mxu0 0
    %462 = vmatpush2.bf16.msra.mxu0 0
    %463 = vmatprep.subr.bf16.mxu0 0
    %464 = vmatpush2.bf16.msra.mxu0 0
    %465 = vmatprep.subr.bf16.mxu0 0
    %466 = vmatpush2.bf16.msra.mxu0 0
    %467 = vmatprep.subr.bf16.mxu0 0
    %468 = vmatpush2.bf16.msra.mxu0 0
    %469 = vmatprep.subr.bf16.mxu0 0
    %470 = vmatpush2.bf16.msra.mxu0 0
    %471 = vmatprep.subr.bf16.mxu0 0
    %472 = vmatpush2.bf16.msra.mxu0 0
    %473 = vmatprep.subr.bf16.mxu0 0
    %474 = vmatpush2.bf16.msra.mxu0 0
    %475 = vmatprep.mubr.bf16.mxu0 0
    %476 = vmatmul.mubr.bf16.gmra.mxu0 %v438
    %v477 = vpop.f32.mrf.mxu0
    %v478 = vadd.f32 0.0, %v477
    %v479 = vpop.f32.mrf.mxu0
    %v480 = vpop.f32.mrf.mxu0
    %v481 = vpop.f32.mrf.mxu0
    %482 = vdwg.mxu0
    %483 = vrot.lane.b32.xlu0 %v257, 120
    %v484 = vpop.permute.xlu0 %483
    %485 = vrot.lane.b32.xlu0 %v257, 88
    %v486 = vpop.permute.xlu0 %485
    %v488 = vsel %vm262, %v484, 0
    %v491 = vsel %vm262, %v486, 0
    %493 = vmatprep.subr.bf16.mxu0 0
    %494 = vmatpush1.bf16.xpose.msra.mxu0 0
    %495 = vmatprep.subr.bf16.mxu0 0
    %496 = vmatpush1.bf16.xpose.msra.mxu0 0
    %497 = vmatprep.subr.bf16.mxu0 0
    %498 = vmatpush1.bf16.xpose.msra.mxu0 0
    %499 = vmatprep.subr.bf16.mxu0 0
    %500 = vmatpush1.bf16.xpose.msra.mxu0 0
    %501 = vmatprep.subr.bf16.mxu0 0
    %502 = vmatpush1.bf16.xpose.msra.mxu0 0
    %503 = vmatprep.subr.bf16.mxu0 0
    %504 = vmatpush1.bf16.xpose.msra.mxu0 0
    %505 = vmatprep.subr.bf16.mxu0 0
    %506 = vmatpush1.bf16.xpose.msra.mxu0 0
    %507 = vmatprep.subr.bf16.mxu0 0
    %508 = vmatpush1.bf16.xpose.msra.mxu0 %v491
    %509 = vmatprep.subr.bf16.mxu0 0
    %510 = vmatpush2.bf16.xpose.msra.mxu0 0
    %511 = vmatprep.subr.bf16.mxu0 0
    %512 = vmatpush2.bf16.xpose.msra.mxu0 0
    %513 = vmatprep.subr.bf16.mxu0 0
    %514 = vmatpush2.bf16.xpose.msra.mxu0 0
    %515 = vmatprep.subr.bf16.mxu0 0
    %516 = vmatpush2.bf16.xpose.msra.mxu0 0
    %517 = vmatprep.subr.bf16.mxu0 0
    %518 = vmatpush2.bf16.xpose.msra.mxu0 0
    %519 = vmatprep.subr.bf16.mxu0 0
    %520 = vmatpush2.bf16.xpose.msra.mxu0 0
    %521 = vmatprep.subr.bf16.mxu0 0
    %522 = vmatpush2.bf16.xpose.msra.mxu0 0
    %523 = vmatprep.subr.bf16.mxu0 0
    %524 = vmatpush2.bf16.xpose.msra.mxu0 0
    %525 = vmatprep.mubr.bf16.mxu0 0
    %526 = vmatmul.mubr.bf16.gmra.mxu0 %v488
    %v527 = vpop.f32.mrf.mxu0
    %v528 = vadd.f32 0.0, %v527
    %v529 = vpop.f32.mrf.mxu0
    %v530 = vpop.f32.mrf.mxu0
    %v531 = vpop.f32.mrf.mxu0
    %532 = vdwg.mxu0
    %533 = vrot.lane.b32.xlu0 %v258, 120
    %v534 = vpop.permute.xlu0 %533
    %535 = vrot.lane.b32.xlu0 %v258, 88
    %v536 = vpop.permute.xlu0 %535
    %v538 = vsel %vm262, %v534, 0
    %v541 = vsel %vm262, %v536, 0
    %543 = vmatprep.subr.bf16.mxu0 0
    %544 = vmatpush1.bf16.xpose.msra.mxu0 0
    %545 = vmatprep.subr.bf16.mxu0 0
    %546 = vmatpush1.bf16.xpose.msra.mxu0 0
    %547 = vmatprep.subr.bf16.mxu0 0
    %548 = vmatpush1.bf16.xpose.msra.mxu0 0
    %549 = vmatprep.subr.bf16.mxu0 0
    %550 = vmatpush1.bf16.xpose.msra.mxu0 0
    %551 = vmatprep.subr.bf16.mxu0 0
    %552 = vmatpush1.bf16.xpose.msra.mxu0 0
    %553 = vmatprep.subr.bf16.mxu0 0
    %554 = vmatpush1.bf16.xpose.msra.mxu0 0
    %555 = vmatprep.subr.bf16.mxu0 0
    %556 = vmatpush1.bf16.xpose.msra.mxu0 0
    %557 = vmatprep.subr.bf16.mxu0 0
    %558 = vmatpush1.bf16.xpose.msra.mxu0 %v541
    %559 = vmatprep.subr.bf16.mxu0 0
    %560 = vmatpush2.bf16.xpose.msra.mxu0 0
    %561 = vmatprep.subr.bf16.mxu0 0
    %562 = vmatpush2.bf16.xpose.msra.mxu0 0
    %563 = vmatprep.subr.bf16.mxu0 0
    %564 = vmatpush2.bf16.xpose.msra.mxu0 0
    %565 = vmatprep.subr.bf16.mxu0 0
    %566 = vmatpush2.bf16.xpose.msra.mxu0 0
    %567 = vmatprep.subr.bf16.mxu0 0
    %568 = vmatpush2.bf16.xpose.msra.mxu0 0
    %569 = vmatprep.subr.bf16.mxu0 0
    %570 = vmatpush2.bf16.xpose.msra.mxu0 0
    %571 = vmatprep.subr.bf16.mxu0 0
    %572 = vmatpush2.bf16.xpose.msra.mxu0 0
    %573 = vmatprep.subr.bf16.mxu0 0
    %574 = vmatpush2.bf16.xpose.msra.mxu0 0
    %575 = vmatprep.mubr.bf16.mxu0 0
    %576 = vmatmul.mubr.bf16.gmra.mxu0 %v538
    %v577 = vpop.f32.mrf.mxu0
    %v578 = vadd.f32 0.0, %v577
    %v579 = vpop.f32.mrf.mxu0
    %v580 = vpop.f32.mrf.mxu0
    %v581 = vpop.f32.mrf.mxu0
    %582 = vdwg.mxu0
    %v583 = vmul.f32 %v528, 0.35355338
    %v584 = vmul.f32 %v578, 0.35355338
    %v585 = vadd.f32 %v583, %v148
    %v586 = vadd.f32 %v584, %v148
    %v587 = vsel %vm262, %v585, -inf
    %588 = vmax.xlane.f32.xlu0 %v587
    %v589 = vpop.xlane.xlu0 %588
    %v590 = vsel %vm262, %v586, -inf
    %591 = vmax.xlane.f32.xlu0 %v590
    %v592 = vpop.xlane.xlu0 %591
    %v593 = vsub.f32 %v585, %v589
    %v594 = vsub.f32 %v586, %v592
    %v595 = vmul.f32 %v593, 1.442695
    %v596 = vpow.pop %v595
    %v597 = vmul.f32 %v594, 1.442695
    %v598 = vpow.pop %v597
    %v599 = vsel %vm262, %v596, 0.0
    %600 = vadd.xlane.f32.xlu0 %v599
    %v601 = vpop.xlane.xlu0 %600
    %v602 = vsel %vm262, %v598, 0.0
    %603 = vadd.xlane.f32.xlu0 %v602
    %v604 = vpop.xlane.xlu0 %603
    %v605 = vrcp.pop %v601
    %v606 = vrcp.pop %v604
    %v607 = vmul.f32 %v596, %v605
    %v608 = vmul.f32 %v598, %v606
    %v609 = vpack.c.bf16 %v607, %v607
    %v610 = vpack.c.bf16 %v608, %v608
    %611 = vrot.lane.b32.xlu0 %v257, 56
    %v612 = vpop.permute.xlu0 %611
    %v614 = vsel %vm262, %v609, 0
    %v617 = vsel %vm391, %v612, 0
    %619 = vmatprep.subr.bf16.mxu0 0
    %620 = vmatpush1.bf16.msra.mxu0 0
    %621 = vmatprep.subr.bf16.mxu0 0
    %622 = vmatpush1.bf16.msra.mxu0 0
    %623 = vmatprep.subr.bf16.mxu0 0
    %624 = vmatpush1.bf16.msra.mxu0 0
    %625 = vmatprep.subr.bf16.mxu0 0
    %626 = vmatpush1.bf16.msra.mxu0 0
    %627 = vmatprep.subr.bf16.mxu0 0
    %628 = vmatpush1.bf16.msra.mxu0 0
    %629 = vmatprep.subr.bf16.mxu0 0
    %630 = vmatpush1.bf16.msra.mxu0 0
    %631 = vmatprep.subr.bf16.mxu0 0
    %632 = vmatpush1.bf16.msra.mxu0 0
    %633 = vmatprep.subr.bf16.mxu0 0
    %634 = vmatpush1.bf16.msra.mxu0 %v617
    %635 = vmatprep.subr.bf16.mxu0 0
    %636 = vmatpush2.bf16.msra.mxu0 0
    %637 = vmatprep.subr.bf16.mxu0 0
    %638 = vmatpush2.bf16.msra.mxu0 0
    %639 = vmatprep.subr.bf16.mxu0 0
    %640 = vmatpush2.bf16.msra.mxu0 0
    %641 = vmatprep.subr.bf16.mxu0 0
    %642 = vmatpush2.bf16.msra.mxu0 0
    %643 = vmatprep.subr.bf16.mxu0 0
    %644 = vmatpush2.bf16.msra.mxu0 0
    %645 = vmatprep.subr.bf16.mxu0 0
    %646 = vmatpush2.bf16.msra.mxu0 0
    %647 = vmatprep.subr.bf16.mxu0 0
    %648 = vmatpush2.bf16.msra.mxu0 0
    %649 = vmatprep.subr.bf16.mxu0 0
    %650 = vmatpush2.bf16.msra.mxu0 0
    %651 = vmatprep.mubr.bf16.mxu0 0
    %652 = vmatmul.mubr.bf16.gmra.mxu0 %v614
    %v653 = vpop.f32.mrf.mxu0
    %v654 = vadd.f32 0.0, %v653
    %v655 = vpop.f32.mrf.mxu0
    %v656 = vpop.f32.mrf.mxu0
    %v657 = vpop.f32.mrf.mxu0
    %658 = vdwg.mxu0
    %659 = vrot.lane.b32.xlu0 %v258, 56
    %v660 = vpop.permute.xlu0 %659
    %v662 = vsel %vm262, %v610, 0
    %v665 = vsel %vm391, %v660, 0
    %667 = vmatprep.subr.bf16.mxu0 0
    %668 = vmatpush1.bf16.msra.mxu0 0
    %669 = vmatprep.subr.bf16.mxu0 0
    %670 = vmatpush1.bf16.msra.mxu0 0
    %671 = vmatprep.subr.bf16.mxu0 0
    %672 = vmatpush1.bf16.msra.mxu0 0
    %673 = vmatprep.subr.bf16.mxu0 0
    %674 = vmatpush1.bf16.msra.mxu0 0
    %675 = vmatprep.subr.bf16.mxu0 0
    %676 = vmatpush1.bf16.msra.mxu0 0
    %677 = vmatprep.subr.bf16.mxu0 0
    %678 = vmatpush1.bf16.msra.mxu0 0
    %679 = vmatprep.subr.bf16.mxu0 0
    %680 = vmatpush1.bf16.msra.mxu0 0
    %681 = vmatprep.subr.bf16.mxu0 0
    %682 = vmatpush1.bf16.msra.mxu0 %v665
    %683 = vmatprep.subr.bf16.mxu0 0
    %684 = vmatpush2.bf16.msra.mxu0 0
    %685 = vmatprep.subr.bf16.mxu0 0
    %686 = vmatpush2.bf16.msra.mxu0 0
    %687 = vmatprep.subr.bf16.mxu0 0
    %688 = vmatpush2.bf16.msra.mxu0 0
    %689 = vmatprep.subr.bf16.mxu0 0
    %690 = vmatpush2.bf16.msra.mxu0 0
    %691 = vmatprep.subr.bf16.mxu0 0
    %692 = vmatpush2.bf16.msra.mxu0 0
    %693 = vmatprep.subr.bf16.mxu0 0
    %694 = vmatpush2.bf16.msra.mxu0 0
    %695 = vmatprep.subr.bf16.mxu0 0
    %696 = vmatpush2.bf16.msra.mxu0 0
    %697 = vmatprep.subr.bf16.mxu0 0
    %698 = vmatpush2.bf16.msra.mxu0 0
    %699 = vmatprep.mubr.bf16.mxu0 0
    %700 = vmatmul.mubr.bf16.gmra.mxu0 %v662
    %v701 = vpop.f32.mrf.mxu0
    %v702 = vadd.f32 0.0, %v701
    %v703 = vpop.f32.mrf.mxu0
    %v704 = vpop.f32.mrf.mxu0
    %v705 = vpop.f32.mrf.mxu0
    %706 = vdwg.mxu0
    %707 = vrot.lane.b32.xlu0 %v257, 112
    %v708 = vpop.permute.xlu0 %707
    %709 = vrot.lane.b32.xlu0 %v257, 80
    %v710 = vpop.permute.xlu0 %709
    %v712 = vsel %vm262, %v708, 0
    %v715 = vsel %vm262, %v710, 0
    %717 = vmatprep.subr.bf16.mxu0 0
    %718 = vmatpush1.bf16.xpose.msra.mxu0 0
    %719 = vmatprep.subr.bf16.mxu0 0
    %720 = vmatpush1.bf16.xpose.msra.mxu0 0
    %721 = vmatprep.subr.bf16.mxu0 0
    %722 = vmatpush1.bf16.xpose.msra.mxu0 0
    %723 = vmatprep.subr.bf16.mxu0 0
    %724 = vmatpush1.bf16.xpose.msra.mxu0 0
    %725 = vmatprep.subr.bf16.mxu0 0
    %726 = vmatpush1.bf16.xpose.msra.mxu0 0
    %727 = vmatprep.subr.bf16.mxu0 0
    %728 = vmatpush1.bf16.xpose.msra.mxu0 0
    %729 = vmatprep.subr.bf16.mxu0 0
    %730 = vmatpush1.bf16.xpose.msra.mxu0 0
    %731 = vmatprep.subr.bf16.mxu0 0
    %732 = vmatpush1.bf16.xpose.msra.mxu0 %v715
    %733 = vmatprep.subr.bf16.mxu0 0
    %734 = vmatpush2.bf16.xpose.msra.mxu0 0
    %735 = vmatprep.subr.bf16.mxu0 0
    %736 = vmatpush2.bf16.xpose.msra.mxu0 0
    %737 = vmatprep.subr.bf16.mxu0 0
    %738 = vmatpush2.bf16.xpose.msra.mxu0 0
    %739 = vmatprep.subr.bf16.mxu0 0
    %740 = vmatpush2.bf16.xpose.msra.mxu0 0
    %741 = vmatprep.subr.bf16.mxu0 0
    %742 = vmatpush2.bf16.xpose.msra.mxu0 0
    %743 = vmatprep.subr.bf16.mxu0 0
    %744 = vmatpush2.bf16.xpose.msra.mxu0 0
    %745 = vmatprep.subr.bf16.mxu0 0
    %746 = vmatpush2.bf16.xpose.msra.mxu0 0
    %747 = vmatprep.subr.bf16.mxu0 0
    %748 = vmatpush2.bf16.xpose.msra.mxu0 0
    %749 = vmatprep.mubr.bf16.mxu0 0
    %750 = vmatmul.mubr.bf16.gmra.mxu0 %v712
    %v751 = vpop.f32.mrf.mxu0
    %v752 = vadd.f32 0.0, %v751
    %v753 = vpop.f32.mrf.mxu0
    %v754 = vpop.f32.mrf.mxu0
    %v755 = vpop.f32.mrf.mxu0
    %756 = vdwg.mxu0
    %757 = vrot.lane.b32.xlu0 %v258, 112
    %v758 = vpop.permute.xlu0 %757
    %759 = vrot.lane.b32.xlu0 %v258, 80
    %v760 = vpop.permute.xlu0 %759
    %v762 = vsel %vm262, %v758, 0
    %v765 = vsel %vm262, %v760, 0
    %767 = vmatprep.subr.bf16.mxu0 0
    %768 = vmatpush1.bf16.xpose.msra.mxu0 0
    %769 = vmatprep.subr.bf16.mxu0 0
    %770 = vmatpush1.bf16.xpose.msra.mxu0 0
    %771 = vmatprep.subr.bf16.mxu0 0
    %772 = vmatpush1.bf16.xpose.msra.mxu0 0
    %773 = vmatprep.subr.bf16.mxu0 0
    %774 = vmatpush1.bf16.xpose.msra.mxu0 0
    %775 = vmatprep.subr.bf16.mxu0 0
    %776 = vmatpush1.bf16.xpose.msra.mxu0 0
    %777 = vmatprep.subr.bf16.mxu0 0
    %778 = vmatpush1.bf16.xpose.msra.mxu0 0
    %779 = vmatprep.subr.bf16.mxu0 0
    %780 = vmatpush1.bf16.xpose.msra.mxu0 0
    %781 = vmatprep.subr.bf16.mxu0 0
    %782 = vmatpush1.bf16.xpose.msra.mxu0 %v765
    %783 = vmatprep.subr.bf16.mxu0 0
    %784 = vmatpush2.bf16.xpose.msra.mxu0 0
    %785 = vmatprep.subr.bf16.mxu0 0
    %786 = vmatpush2.bf16.xpose.msra.mxu0 0
    %787 = vmatprep.subr.bf16.mxu0 0
    %788 = vmatpush2.bf16.xpose.msra.mxu0 0
    %789 = vmatprep.subr.bf16.mxu0 0
    %790 = vmatpush2.bf16.xpose.msra.mxu0 0
    %791 = vmatprep.subr.bf16.mxu0 0
    %792 = vmatpush2.bf16.xpose.msra.mxu0 0
    %793 = vmatprep.subr.bf16.mxu0 0
    %794 = vmatpush2.bf16.xpose.msra.mxu0 0
    %795 = vmatprep.subr.bf16.mxu0 0
    %796 = vmatpush2.bf16.xpose.msra.mxu0 0
    %797 = vmatprep.subr.bf16.mxu0 0
    %798 = vmatpush2.bf16.xpose.msra.mxu0 0
    %799 = vmatprep.mubr.bf16.mxu0 0
    %800 = vmatmul.mubr.bf16.gmra.mxu0 %v762
    %v801 = vpop.f32.mrf.mxu0
    %v802 = vadd.f32 0.0, %v801
    %v803 = vpop.f32.mrf.mxu0
    %v804 = vpop.f32.mrf.mxu0
    %v805 = vpop.f32.mrf.mxu0
    %806 = vdwg.mxu0
    %v807 = vmul.f32 %v752, 0.35355338
    %v808 = vmul.f32 %v802, 0.35355338
    %v809 = vadd.f32 %v807, %v148
    %v810 = vadd.f32 %v808, %v148
    %v811 = vsel %vm262, %v809, -inf
    %812 = vmax.xlane.f32.xlu0 %v811
    %v813 = vpop.xlane.xlu0 %812
    %v814 = vsel %vm262, %v810, -inf
    %815 = vmax.xlane.f32.xlu0 %v814
    %v816 = vpop.xlane.xlu0 %815
    %v817 = vsub.f32 %v809, %v813
    %v818 = vsub.f32 %v810, %v816
    %v819 = vmul.f32 %v817, 1.442695
    %v820 = vpow.pop %v819
    %v821 = vmul.f32 %v818, 1.442695
    %v822 = vpow.pop %v821
    %v823 = vsel %vm262, %v820, 0.0
    %824 = vadd.xlane.f32.xlu0 %v823
    %v825 = vpop.xlane.xlu0 %824
    %v826 = vsel %vm262, %v822, 0.0
    %827 = vadd.xlane.f32.xlu0 %v826
    %v828 = vpop.xlane.xlu0 %827
    %v829 = vrcp.pop %v825
    %v830 = vrcp.pop %v828
    %v831 = vmul.f32 %v820, %v829
    %v832 = vmul.f32 %v822, %v830
    %v833 = vpack.c.bf16 %v831, %v831
    %v834 = vpack.c.bf16 %v832, %v832
    %835 = vrot.lane.b32.xlu0 %v257, 48
    %v836 = vpop.permute.xlu0 %835
    %v838 = vsel %vm262, %v833, 0
    %v841 = vsel %vm391, %v836, 0
    %843 = vmatprep.subr.bf16.mxu0 0
    %844 = vmatpush1.bf16.msra.mxu0 0
    %845 = vmatprep.subr.bf16.mxu0 0
    %846 = vmatpush1.bf16.msra.mxu0 0
    %847 = vmatprep.subr.bf16.mxu0 0
    %848 = vmatpush1.bf16.msra.mxu0 0
    %849 = vmatprep.subr.bf16.mxu0 0
    %850 = vmatpush1.bf16.msra.mxu0 0
    %851 = vmatprep.subr.bf16.mxu0 0
    %852 = vmatpush1.bf16.msra.mxu0 0
    %853 = vmatprep.subr.bf16.mxu0 0
    %854 = vmatpush1.bf16.msra.mxu0 0
    %855 = vmatprep.subr.bf16.mxu0 0
    %856 = vmatpush1.bf16.msra.mxu0 0
    %857 = vmatprep.subr.bf16.mxu0 0
    %858 = vmatpush1.bf16.msra.mxu0 %v841
    %859 = vmatprep.subr.bf16.mxu0 0
    %860 = vmatpush2.bf16.msra.mxu0 0
    %861 = vmatprep.subr.bf16.mxu0 0
    %862 = vmatpush2.bf16.msra.mxu0 0
    %863 = vmatprep.subr.bf16.mxu0 0
    %864 = vmatpush2.bf16.msra.mxu0 0
    %865 = vmatprep.subr.bf16.mxu0 0
    %866 = vmatpush2.bf16.msra.mxu0 0
    %867 = vmatprep.subr.bf16.mxu0 0
    %868 = vmatpush2.bf16.msra.mxu0 0
    %869 = vmatprep.subr.bf16.mxu0 0
    %870 = vmatpush2.bf16.msra.mxu0 0
    %871 = vmatprep.subr.bf16.mxu0 0
    %872 = vmatpush2.bf16.msra.mxu0 0
    %873 = vmatprep.subr.bf16.mxu0 0
    %874 = vmatpush2.bf16.msra.mxu0 0
    %875 = vmatprep.mubr.bf16.mxu0 0
    %876 = vmatmul.mubr.bf16.gmra.mxu0 %v838
    %v877 = vpop.f32.mrf.mxu0
    %v878 = vadd.f32 0.0, %v877
    %v879 = vpop.f32.mrf.mxu0
    %v880 = vpop.f32.mrf.mxu0
    %v881 = vpop.f32.mrf.mxu0
    %882 = vdwg.mxu0
    %883 = vrot.lane.b32.xlu0 %v258, 48
    %v884 = vpop.permute.xlu0 %883
    %v886 = vsel %vm262, %v834, 0
    %v889 = vsel %vm391, %v884, 0
    %891 = vmatprep.subr.bf16.mxu0 0
    %892 = vmatpush1.bf16.msra.mxu0 0
    %893 = vmatprep.subr.bf16.mxu0 0
    %894 = vmatpush1.bf16.msra.mxu0 0
    %895 = vmatprep.subr.bf16.mxu0 0
    %896 = vmatpush1.bf16.msra.mxu0 0
    %897 = vmatprep.subr.bf16.mxu0 0
    %898 = vmatpush1.bf16.msra.mxu0 0
    %899 = vmatprep.subr.bf16.mxu0 0
    %900 = vmatpush1.bf16.msra.mxu0 0
    %901 = vmatprep.subr.bf16.mxu0 0
    %902 = vmatpush1.bf16.msra.mxu0 0
    %903 = vmatprep.subr.bf16.mxu0 0
    %904 = vmatpush1.bf16.msra.mxu0 0
    %905 = vmatprep.subr.bf16.mxu0 0
    %906 = vmatpush1.bf16.msra.mxu0 %v889
    %907 = vmatprep.subr.bf16.mxu0 0
    %908 = vmatpush2.bf16.msra.mxu0 0
    %909 = vmatprep.subr.bf16.mxu0 0
    %910 = vmatpush2.bf16.msra.mxu0 0
    %911 = vmatprep.subr.bf16.mxu0 0
    %912 = vmatpush2.bf16.msra.mxu0 0
    %913 = vmatprep.subr.bf16.mxu0 0
    %914 = vmatpush2.bf16.msra.mxu0 0
    %915 = vmatprep.subr.bf16.mxu0 0
    %916 = vmatpush2.bf16.msra.mxu0 0
    %917 = vmatprep.subr.bf16.mxu0 0
    %918 = vmatpush2.bf16.msra.mxu0 0
    %919 = vmatprep.subr.bf16.mxu0 0
    %920 = vmatpush2.bf16.msra.mxu0 0
    %921 = vmatprep.subr.bf16.mxu0 0
    %922 = vmatpush2.bf16.msra.mxu0 0
    %923 = vmatprep.mubr.bf16.mxu0 0
    %924 = vmatmul.mubr.bf16.gmra.mxu0 %v886
    %v925 = vpop.f32.mrf.mxu0
    %v926 = vadd.f32 0.0, %v925
    %v927 = vpop.f32.mrf.mxu0
    %v928 = vpop.f32.mrf.mxu0
    %v929 = vpop.f32.mrf.mxu0
    %930 = vdwg.mxu0
    %931 = vrot.lane.b32.xlu0 %v257, 104
    %v932 = vpop.permute.xlu0 %931
    %933 = vrot.lane.b32.xlu0 %v257, 72
    %v934 = vpop.permute.xlu0 %933
    %v936 = vsel %vm262, %v932, 0
    %v939 = vsel %vm262, %v934, 0
    %941 = vmatprep.subr.bf16.mxu0 0
    %942 = vmatpush1.bf16.xpose.msra.mxu0 0
    %943 = vmatprep.subr.bf16.mxu0 0
    %944 = vmatpush1.bf16.xpose.msra.mxu0 0
    %945 = vmatprep.subr.bf16.mxu0 0
    %946 = vmatpush1.bf16.xpose.msra.mxu0 0
    %947 = vmatprep.subr.bf16.mxu0 0
    %948 = vmatpush1.bf16.xpose.msra.mxu0 0
    %949 = vmatprep.subr.bf16.mxu0 0
    %950 = vmatpush1.bf16.xpose.msra.mxu0 0
    %951 = vmatprep.subr.bf16.mxu0 0
    %952 = vmatpush1.bf16.xpose.msra.mxu0 0
    %953 = vmatprep.subr.bf16.mxu0 0
    %954 = vmatpush1.bf16.xpose.msra.mxu0 0
    %955 = vmatprep.subr.bf16.mxu0 0
    %956 = vmatpush1.bf16.xpose.msra.mxu0 %v939
    %957 = vmatprep.subr.bf16.mxu0 0
    %958 = vmatpush2.bf16.xpose.msra.mxu0 0
    %959 = vmatprep.subr.bf16.mxu0 0
    %960 = vmatpush2.bf16.xpose.msra.mxu0 0
    %961 = vmatprep.subr.bf16.mxu0 0
    %962 = vmatpush2.bf16.xpose.msra.mxu0 0
    %963 = vmatprep.subr.bf16.mxu0 0
    %964 = vmatpush2.bf16.xpose.msra.mxu0 0
    %965 = vmatprep.subr.bf16.mxu0 0
    %966 = vmatpush2.bf16.xpose.msra.mxu0 0
    %967 = vmatprep.subr.bf16.mxu0 0
    %968 = vmatpush2.bf16.xpose.msra.mxu0 0
    %969 = vmatprep.subr.bf16.mxu0 0
    %970 = vmatpush2.bf16.xpose.msra.mxu0 0
    %971 = vmatprep.subr.bf16.mxu0 0
    %972 = vmatpush2.bf16.xpose.msra.mxu0 0
    %973 = vmatprep.mubr.bf16.mxu0 0
    %974 = vmatmul.mubr.bf16.gmra.mxu0 %v936
    %v975 = vpop.f32.mrf.mxu0
    %v976 = vadd.f32 0.0, %v975
    %v977 = vpop.f32.mrf.mxu0
    %v978 = vpop.f32.mrf.mxu0
    %v979 = vpop.f32.mrf.mxu0
    %980 = vdwg.mxu0
    %981 = vrot.lane.b32.xlu0 %v258, 104
    %v982 = vpop.permute.xlu0 %981
    %983 = vrot.lane.b32.xlu0 %v258, 72
    %v984 = vpop.permute.xlu0 %983
    %v986 = vsel %vm262, %v982, 0
    %v989 = vsel %vm262, %v984, 0
    %991 = vmatprep.subr.bf16.mxu0 0
    %992 = vmatpush1.bf16.xpose.msra.mxu0 0
    %993 = vmatprep.subr.bf16.mxu0 0
    %994 = vmatpush1.bf16.xpose.msra.mxu0 0
    %995 = vmatprep.subr.bf16.mxu0 0
    %996 = vmatpush1.bf16.xpose.msra.mxu0 0
    %997 = vmatprep.subr.bf16.mxu0 0
    %998 = vmatpush1.bf16.xpose.msra.mxu0 0
    %999 = vmatprep.subr.bf16.mxu0 0
    %1000 = vmatpush1.bf16.xpose.msra.mxu0 0
    %1001 = vmatprep.subr.bf16.mxu0 0
    %1002 = vmatpush1.bf16.xpose.msra.mxu0 0
    %1003 = vmatprep.subr.bf16.mxu0 0
    %1004 = vmatpush1.bf16.xpose.msra.mxu0 0
    %1005 = vmatprep.subr.bf16.mxu0 0
    %1006 = vmatpush1.bf16.xpose.msra.mxu0 %v989
    %1007 = vmatprep.subr.bf16.mxu0 0
    %1008 = vmatpush2.bf16.xpose.msra.mxu0 0
    %1009 = vmatprep.subr.bf16.mxu0 0
    %1010 = vmatpush2.bf16.xpose.msra.mxu0 0
    %1011 = vmatprep.subr.bf16.mxu0 0
    %1012 = vmatpush2.bf16.xpose.msra.mxu0 0
    %1013 = vmatprep.subr.bf16.mxu0 0
    %1014 = vmatpush2.bf16.xpose.msra.mxu0 0
    %1015 = vmatprep.subr.bf16.mxu0 0
    %1016 = vmatpush2.bf16.xpose.msra.mxu0 0
    %1017 = vmatprep.subr.bf16.mxu0 0
    %1018 = vmatpush2.bf16.xpose.msra.mxu0 0
    %1019 = vmatprep.subr.bf16.mxu0 0
    %1020 = vmatpush2.bf16.xpose.msra.mxu0 0
    %1021 = vmatprep.subr.bf16.mxu0 0
    %1022 = vmatpush2.bf16.xpose.msra.mxu0 0
    %1023 = vmatprep.mubr.bf16.mxu0 0
    %1024 = vmatmul.mubr.bf16.gmra.mxu0 %v986
    %v1025 = vpop.f32.mrf.mxu0
    %v1026 = vadd.f32 0.0, %v1025
    %v1027 = vpop.f32.mrf.mxu0
    %v1028 = vpop.f32.mrf.mxu0
    %v1029 = vpop.f32.mrf.mxu0
    %1030 = vdwg.mxu0
    %v1031 = vmul.f32 %v976, 0.35355338
    %v1032 = vmul.f32 %v1026, 0.35355338
    %v1033 = vadd.f32 %v1031, %v148
    %v1034 = vadd.f32 %v1032, %v148
    %v1035 = vsel %vm262, %v1033, -inf
    %1036 = vmax.xlane.f32.xlu0 %v1035
    %v1037 = vpop.xlane.xlu0 %1036
    %v1038 = vsel %vm262, %v1034, -inf
    %1039 = vmax.xlane.f32.xlu0 %v1038
    %v1040 = vpop.xlane.xlu0 %1039
    %v1041 = vsub.f32 %v1033, %v1037
    %v1042 = vsub.f32 %v1034, %v1040
    %v1043 = vmul.f32 %v1041, 1.442695
    %v1044 = vpow.pop %v1043
    %v1045 = vmul.f32 %v1042, 1.442695
    %v1046 = vpow.pop %v1045
    %v1047 = vsel %vm262, %v1044, 0.0
    %1048 = vadd.xlane.f32.xlu0 %v1047
    %v1049 = vpop.xlane.xlu0 %1048
    %v1050 = vsel %vm262, %v1046, 0.0
    %1051 = vadd.xlane.f32.xlu0 %v1050
    %v1052 = vpop.xlane.xlu0 %1051
    %v1053 = vrcp.pop %v1049
    %v1054 = vrcp.pop %v1052
    %v1055 = vmul.f32 %v1044, %v1053
    %v1056 = vmul.f32 %v1046, %v1054
    %v1057 = vpack.c.bf16 %v1055, %v1055
    %v1058 = vpack.c.bf16 %v1056, %v1056
    %1059 = vrot.lane.b32.xlu0 %v257, 40
    %v1060 = vpop.permute.xlu0 %1059
    %v1062 = vsel %vm262, %v1057, 0
    %v1065 = vsel %vm391, %v1060, 0
    %1067 = vmatprep.subr.bf16.mxu0 0
    %1068 = vmatpush1.bf16.msra.mxu0 0
    %1069 = vmatprep.subr.bf16.mxu0 0
    %1070 = vmatpush1.bf16.msra.mxu0 0
    %1071 = vmatprep.subr.bf16.mxu0 0
    %1072 = vmatpush1.bf16.msra.mxu0 0
    %1073 = vmatprep.subr.bf16.mxu0 0
    %1074 = vmatpush1.bf16.msra.mxu0 0
    %1075 = vmatprep.subr.bf16.mxu0 0
    %1076 = vmatpush1.bf16.msra.mxu0 0
    %1077 = vmatprep.subr.bf16.mxu0 0
    %1078 = vmatpush1.bf16.msra.mxu0 0
    %1079 = vmatprep.subr.bf16.mxu0 0
    %1080 = vmatpush1.bf16.msra.mxu0 0
    %1081 = vmatprep.subr.bf16.mxu0 0
    %1082 = vmatpush1.bf16.msra.mxu0 %v1065
    %1083 = vmatprep.subr.bf16.mxu0 0
    %1084 = vmatpush2.bf16.msra.mxu0 0
    %1085 = vmatprep.subr.bf16.mxu0 0
    %1086 = vmatpush2.bf16.msra.mxu0 0
    %1087 = vmatprep.subr.bf16.mxu0 0
    %1088 = vmatpush2.bf16.msra.mxu0 0
    %1089 = vmatprep.subr.bf16.mxu0 0
    %1090 = vmatpush2.bf16.msra.mxu0 0
    %1091 = vmatprep.subr.bf16.mxu0 0
    %1092 = vmatpush2.bf16.msra.mxu0 0
    %1093 = vmatprep.subr.bf16.mxu0 0
    %1094 = vmatpush2.bf16.msra.mxu0 0
    %1095 = vmatprep.subr.bf16.mxu0 0
    %1096 = vmatpush2.bf16.msra.mxu0 0
    %1097 = vmatprep.subr.bf16.mxu0 0
    %1098 = vmatpush2.bf16.msra.mxu0 0
    %1099 = vmatprep.mubr.bf16.mxu0 0
    %1100 = vmatmul.mubr.bf16.gmra.mxu0 %v1062
    %v1101 = vpop.f32.mrf.mxu0
    %v1102 = vadd.f32 0.0, %v1101
    %v1103 = vpop.f32.mrf.mxu0
    %v1104 = vpop.f32.mrf.mxu0
    %v1105 = vpop.f32.mrf.mxu0
    %1106 = vdwg.mxu0
    %1107 = vrot.lane.b32.xlu0 %v258, 40
    %v1108 = vpop.permute.xlu0 %1107
    %v1110 = vsel %vm262, %v1058, 0
    %v1113 = vsel %vm391, %v1108, 0
    %1115 = vmatprep.subr.bf16.mxu0 0
    %1116 = vmatpush1.bf16.msra.mxu0 0
    %1117 = vmatprep.subr.bf16.mxu0 0
    %1118 = vmatpush1.bf16.msra.mxu0 0
    %1119 = vmatprep.subr.bf16.mxu0 0
    %1120 = vmatpush1.bf16.msra.mxu0 0
    %1121 = vmatprep.subr.bf16.mxu0 0
    %1122 = vmatpush1.bf16.msra.mxu0 0
    %1123 = vmatprep.subr.bf16.mxu0 0
    %1124 = vmatpush1.bf16.msra.mxu0 0
    %1125 = vmatprep.subr.bf16.mxu0 0
    %1126 = vmatpush1.bf16.msra.mxu0 0
    %1127 = vmatprep.subr.bf16.mxu0 0
    %1128 = vmatpush1.bf16.msra.mxu0 0
    %1129 = vmatprep.subr.bf16.mxu0 0
    %1130 = vmatpush1.bf16.msra.mxu0 %v1113
    %1131 = vmatprep.subr.bf16.mxu0 0
    %1132 = vmatpush2.bf16.msra.mxu0 0
    %1133 = vmatprep.subr.bf16.mxu0 0
    %1134 = vmatpush2.bf16.msra.mxu0 0
    %1135 = vmatprep.subr.bf16.mxu0 0
    %1136 = vmatpush2.bf16.msra.mxu0 0
    %1137 = vmatprep.subr.bf16.mxu0 0
    %1138 = vmatpush2.bf16.msra.mxu0 0
    %1139 = vmatprep.subr.bf16.mxu0 0
    %1140 = vmatpush2.bf16.msra.mxu0 0
    %1141 = vmatprep.subr.bf16.mxu0 0
    %1142 = vmatpush2.bf16.msra.mxu0 0
    %1143 = vmatprep.subr.bf16.mxu0 0
    %1144 = vmatpush2.bf16.msra.mxu0 0
    %1145 = vmatprep.subr.bf16.mxu0 0
    %1146 = vmatpush2.bf16.msra.mxu0 0
    %1147 = vmatprep.mubr.bf16.mxu0 0
    %1148 = vmatmul.mubr.bf16.gmra.mxu0 %v1110
    %v1149 = vpop.f32.mrf.mxu0
    %v1150 = vadd.f32 0.0, %v1149
    %v1151 = vpop.f32.mrf.mxu0
    %v1152 = vpop.f32.mrf.mxu0
    %v1153 = vpop.f32.mrf.mxu0
    %1154 = vdwg.mxu0
    %1157 = vrot.lane.b32.xlu0 %v654, 8
    %v1158 = vpop.permute.xlu0 %1157
    %1159 = vrot.lane.b32.xlu0 %v702, 8
    %v1160 = vpop.permute.xlu0 %1159
    %1165 = vrot.lane.b32.xlu0 %v878, 16
    %v1166 = vpop.permute.xlu0 %1165
    %1167 = vrot.lane.b32.xlu0 %v926, 16
    %v1168 = vpop.permute.xlu0 %1167
    %1173 = vrot.lane.b32.xlu0 %v1102, 24
    %v1174 = vpop.permute.xlu0 %1173
    %1175 = vrot.lane.b32.xlu0 %v1150, 24
    %v1176 = vpop.permute.xlu0 %1175
    %v1179 = vsel %vm262, %v430, %v1158
    %v1180 = vsel %vm262, %v478, %v1160
    %vm1181 = vcmask 130048
    %v1182 = vsel %vm1181, %v1179, %v1166
    %v1183 = vsel %vm1181, %v1180, %v1168
    %vm1184 = vcmask 195584
    %v1185 = vsel %vm1184, %v1182, %v1174
    %v1186 = vsel %vm1184, %v1183, %v1176
    %v1187 = vld [vmem:[%s3] sm:$0xf]
    %v1188 = vld [vmem:[%s3 + $0x4] sm:$0xf]
    %v1189 = vld [vmem:[%s3 + $0x8] sm:$0xf]
    %v1190 = vld [vmem:[%s3 + $0xc] sm:$0xf]
    %v1191 = vpack.c.bf16 %v1186, %v1185
    %v1196 = vunpack.c.l.b16 %v1187
    %v1197 = vunpack.c.l.b16 %v1188
    %v1198 = vunpack.c.l.b16 %v1189
    %v1199 = vunpack.c.l.b16 %v1190
    %v1200 = vpack.c.b16 %v1197, %v1196
    %v1201 = vpack.c.b16 %v1199, %v1198
    %v1205 = vsel %vm151, %v1191, 0
    %1207 = vmatprep.subr.bf16.mxu0 0
    %1208 = vmatpush1.bf16.msra.mxu0 0
    %1209 = vmatprep.subr.bf16.mxu0 0
    %1210 = vmatpush1.bf16.msra.mxu0 0
    %1211 = vmatprep.subr.bf16.mxu0 0
    %1212 = vmatpush1.bf16.msra.mxu0 0
    %1213 = vmatprep.subr.bf16.mxu0 0
    %1214 = vmatpush1.bf16.msra.mxu0 0
    %1215 = vmatprep.subr.bf16.mxu0 0
    %1216 = vmatpush1.bf16.msra.mxu0 0
    %1217 = vmatprep.subr.bf16.mxu0 0
    %1218 = vmatpush1.bf16.msra.mxu0 0
    %1219 = vmatprep.subr.bf16.mxu0 0
    %1220 = vmatpush1.bf16.msra.mxu0 %v1201
    %1221 = vmatprep.subr.bf16.mxu0 0
    %1222 = vmatpush1.bf16.msra.mxu0 %v1200
    %1223 = vmatprep.subr.bf16.mxu0 0
    %1224 = vmatpush2.bf16.msra.mxu0 0
    %1225 = vmatprep.subr.bf16.mxu0 0
    %1226 = vmatpush2.bf16.msra.mxu0 0
    %1227 = vmatprep.subr.bf16.mxu0 0
    %1228 = vmatpush2.bf16.msra.mxu0 0
    %1229 = vmatprep.subr.bf16.mxu0 0
    %1230 = vmatpush2.bf16.msra.mxu0 0
    %1231 = vmatprep.subr.bf16.mxu0 0
    %1232 = vmatpush2.bf16.msra.mxu0 0
    %1233 = vmatprep.subr.bf16.mxu0 0
    %1234 = vmatpush2.bf16.msra.mxu0 0
    %1235 = vmatprep.subr.bf16.mxu0 0
    %1236 = vmatpush2.bf16.msra.mxu0 0
    %1237 = vmatprep.subr.bf16.mxu0 0
    %1238 = vmatpush2.bf16.msra.mxu0 0
    %1239 = vmatprep.mubr.bf16.mxu0 0
    %1240 = vmatmul.mubr.bf16.gmra.mxu0 %v1205
    %v1241 = vpop.f32.mrf.mxu0
    %v1242 = vadd.f32 0.0, %v1241
    %v1243 = vpop.f32.mrf.mxu0
    %v1244 = vpop.f32.mrf.mxu0
    %v1245 = vadd.f32 0.0, %v1244
    %v1246 = vpop.f32.mrf.mxu0
    %1247 = vdwg.mxu0
    %v1248 = vadd.f32 %v139, %v1242
    %v1249 = vadd.f32 %v144, %v1245
    %v1250 = vld [vmem:[%s6 + $0x3] sm:$0x1]
    %v1251 = vlaneseq
    %v1252 = vshrl.u32 %v1251, 7
    %v1253 = vsub.s32 0, %v1252
    %v1254 = vrot.slane %v1250, %v1253
    %v1255 = vadd.f32 %v1248, %v1254
    %v1256 = vadd.f32 %v1249, %v1254
    %v1257 = vld [vmem:[%s6 + $0x4] sm:$0x1]
    %v1258 = vld [vmem:[%s6 + $0x5] sm:$0x1]
    %v1259 = vsel %vm151, %v1255, 0.0
    %1260 = vadd.xlane.f32.xlu0 %v1259
    %v1261 = vpop.xlane.xlu0 %1260
    %v1262 = vsel %vm151, %v1256, 0.0
    %1263 = vadd.xlane.f32.xlu0 %v1262
    %v1264 = vpop.xlane.xlu0 %1263
    %v1265 = vmul.f32 %v1261, %v158
    %v1266 = vmul.f32 %v1264, %v158
    %v1267 = vsub.f32 %v1255, %v1265
    %v1268 = vsub.f32 %v1256, %v1266
    %v1269 = vmul.f32 %v1267, %v1267
    %v1270 = vmul.f32 %v1268, %v1268
    %v1271 = vsel %vm151, %v1269, 0.0
    %1272 = vadd.xlane.f32.xlu0 %v1271
    %v1273 = vpop.xlane.xlu0 %1272
    %v1274 = vsel %vm151, %v1270, 0.0
    %1275 = vadd.xlane.f32.xlu0 %v1274
    %v1276 = vpop.xlane.xlu0 %1275
    %v1277 = vmul.f32 %v1273, %v158
    %v1278 = vmul.f32 %v1276, %v158
    %v1279 = vadd.f32 %v1277, 1e-05
    %v1280 = vadd.f32 %v1278, 1e-05
    %v1281 = vrsqrt.pop %v1279
    %v1282 = vrsqrt.pop %v1280
    %v1283 = vmul.f32 %v1267, %v1281
    %v1284 = vmul.f32 %v1268, %v1282
    %v1285 = vlaneseq
    %v1286 = vshrl.u32 %v1285, 7
    %v1287 = vsub.s32 0, %v1286
    %v1288 = vrot.slane %v1257, %v1287
    %v1289 = vmul.f32 %v1283, %v1288
    %v1290 = vmul.f32 %v1284, %v1288
    %v1291 = vlaneseq
    %v1292 = vshrl.u32 %v1291, 7
    %v1293 = vsub.s32 0, %v1292
    %v1294 = vrot.slane %v1258, %v1293
    %v1295 = vadd.f32 %v1289, %v1294
    %v1296 = vadd.f32 %v1290, %v1294
    %v1297 = vld [vmem:[%s4] sm:$0xf]
    %v1298 = vld [vmem:[%s4 + $0x4] sm:$0xf]
    %v1299 = vld [vmem:[%s4 + $0x8] sm:$0xf]
    %v1300 = vld [vmem:[%s4 + $0xc] sm:$0xf]
    %v1301 = vpack.c.bf16 %v1296, %v1295
    %v1302 = vld [vmem:[%s6 + $0x6] sm:$0x1]
    %v1303 = vlaneseq
    %v1304 = vshrl.u32 %v1303, 7
    %v1305 = vsub.s32 0, %v1304
    %v1306 = vrot.slane %v1302, %v1305
    %v1311 = vunpack.c.l.b16 %v1297
    %v1312 = vunpack.c.l.b16 %v1298
    %v1313 = vunpack.c.l.b16 %v1299
    %v1314 = vunpack.c.l.b16 %v1300
    %v1315 = vpack.c.b16 %v1312, %v1311
    %v1316 = vpack.c.b16 %v1314, %v1313
    %v1320 = vsel %vm151, %v1301, 0
    %1322 = vmatprep.subr.bf16.mxu0 0
    %1323 = vmatpush1.bf16.msra.mxu0 0
    %1324 = vmatprep.subr.bf16.mxu0 0
    %1325 = vmatpush1.bf16.msra.mxu0 0
    %1326 = vmatprep.subr.bf16.mxu0 0
    %1327 = vmatpush1.bf16.msra.mxu0 0
    %1328 = vmatprep.subr.bf16.mxu0 0
    %1329 = vmatpush1.bf16.msra.mxu0 0
    %1330 = vmatprep.subr.bf16.mxu0 0
    %1331 = vmatpush1.bf16.msra.mxu0 0
    %1332 = vmatprep.subr.bf16.mxu0 0
    %1333 = vmatpush1.bf16.msra.mxu0 0
    %1334 = vmatprep.subr.bf16.mxu0 0
    %1335 = vmatpush1.bf16.msra.mxu0 %v1316
    %1336 = vmatprep.subr.bf16.mxu0 0
    %1337 = vmatpush1.bf16.msra.mxu0 %v1315
    %1338 = vmatprep.subr.bf16.mxu0 0
    %1339 = vmatpush2.bf16.msra.mxu0 0
    %1340 = vmatprep.subr.bf16.mxu0 0
    %1341 = vmatpush2.bf16.msra.mxu0 0
    %1342 = vmatprep.subr.bf16.mxu0 0
    %1343 = vmatpush2.bf16.msra.mxu0 0
    %1344 = vmatprep.subr.bf16.mxu0 0
    %1345 = vmatpush2.bf16.msra.mxu0 0
    %1346 = vmatprep.subr.bf16.mxu0 0
    %1347 = vmatpush2.bf16.msra.mxu0 0
    %1348 = vmatprep.subr.bf16.mxu0 0
    %1349 = vmatpush2.bf16.msra.mxu0 0
    %1350 = vmatprep.subr.bf16.mxu0 0
    %1351 = vmatpush2.bf16.msra.mxu0 0
    %1352 = vmatprep.subr.bf16.mxu0 0
    %1353 = vmatpush2.bf16.msra.mxu0 0
    %1354 = vmatprep.mubr.bf16.mxu0 0
    %1355 = vmatmul.mubr.bf16.gmra.mxu0 %v1320
    %v1356 = vpop.f32.mrf.mxu0
    %v1357 = vadd.f32 %v1306, %v1356
    %v1358 = vpop.f32.mrf.mxu0
    %v1359 = vpop.f32.mrf.mxu0
    %v1360 = vadd.f32 %v1306, %v1359
    %v1361 = vpop.f32.mrf.mxu0
    %1362 = vdwg.mxu0
    %v1363 = vmul.f32 %v1357, %v1357
    %v1364 = vmul.f32 %v1360, %v1360
    %v1365 = vmul.f32 %v1357, %v1363
    %v1366 = vmul.f32 %v1360, %v1364
    %v1367 = vmul.f32 %v1365, 0.044715
    %v1368 = vmul.f32 %v1366, 0.044715
    %v1369 = vadd.f32 %v1357, %v1367
    %v1370 = vadd.f32 %v1360, %v1368
    %v1371 = vmul.f32 %v1369, 0.7978846
    %v1372 = vmul.f32 %v1370, 0.7978846
    %v1373 = vtanh.pop %v1371
    %v1374 = vtanh.pop %v1372
    %v1375 = vadd.f32 %v1373, 1.0
    %v1376 = vadd.f32 %v1374, 1.0
    %v1377 = vmul.f32 %v1375, 0.5
    %v1378 = vmul.f32 %v1376, 0.5
    %v1379 = vmul.f32 %v1357, %v1377
    %v1380 = vmul.f32 %v1360, %v1378
    %v1381 = vld [vmem:[%s5] sm:$0xf]
    %v1382 = vld [vmem:[%s5 + $0x4] sm:$0xf]
    %v1383 = vld [vmem:[%s5 + $0x8] sm:$0xf]
    %v1384 = vld [vmem:[%s5 + $0xc] sm:$0xf]
    %v1385 = vld [vmem:[%s5 + $0x10] sm:$0xf]
    %v1386 = vld [vmem:[%s5 + $0x14] sm:$0xf]
    %v1387 = vld [vmem:[%s5 + $0x18] sm:$0xf]
    %v1388 = vld [vmem:[%s5 + $0x1c] sm:$0xf]
    %v1389 = vld [vmem:[%s5 + $0x20] sm:$0xf]
    %v1390 = vld [vmem:[%s5 + $0x24] sm:$0xf]
    %v1391 = vld [vmem:[%s5 + $0x28] sm:$0xf]
    %v1392 = vld [vmem:[%s5 + $0x2c] sm:$0xf]
    %v1393 = vld [vmem:[%s5 + $0x30] sm:$0xf]
    %v1394 = vld [vmem:[%s5 + $0x34] sm:$0xf]
    %v1395 = vld [vmem:[%s5 + $0x38] sm:$0xf]
    %v1396 = vld [vmem:[%s5 + $0x3c] sm:$0xf]
    %v1397 = vpack.c.bf16 %v1380, %v1379
    %v1414 = vunpack.c.l.b16 %v1381
    %v1415 = vunpack.c.l.b16 %v1382
    %v1416 = vunpack.c.l.b16 %v1383
    %v1417 = vunpack.c.l.b16 %v1384
    %v1418 = vunpack.c.l.b16 %v1385
    %v1419 = vunpack.c.l.b16 %v1386
    %v1420 = vunpack.c.l.b16 %v1387
    %v1421 = vunpack.c.l.b16 %v1388
    %v1422 = vunpack.c.l.b16 %v1389
    %v1423 = vunpack.c.l.b16 %v1390
    %v1424 = vunpack.c.l.b16 %v1391
    %v1425 = vunpack.c.l.b16 %v1392
    %v1426 = vunpack.c.l.b16 %v1393
    %v1427 = vunpack.c.l.b16 %v1394
    %v1428 = vunpack.c.l.b16 %v1395
    %v1429 = vunpack.c.l.b16 %v1396
    %v1430 = vpack.c.b16 %v1415, %v1414
    %v1431 = vpack.c.b16 %v1417, %v1416
    %v1432 = vpack.c.b16 %v1419, %v1418
    %v1433 = vpack.c.b16 %v1421, %v1420
    %v1434 = vpack.c.b16 %v1423, %v1422
    %v1435 = vpack.c.b16 %v1425, %v1424
    %v1436 = vpack.c.b16 %v1427, %v1426
    %v1437 = vpack.c.b16 %v1429, %v1428
    %1446 = vmatprep.subr.bf16.mxu0 0
    %1447 = vmatpush1.bf16.msra.mxu0 %v1437
    %1448 = vmatprep.subr.bf16.mxu0 0
    %1449 = vmatpush1.bf16.msra.mxu0 %v1436
    %1450 = vmatprep.subr.bf16.mxu0 0
    %1451 = vmatpush1.bf16.msra.mxu0 %v1435
    %1452 = vmatprep.subr.bf16.mxu0 0
    %1453 = vmatpush1.bf16.msra.mxu0 %v1434
    %1454 = vmatprep.subr.bf16.mxu0 0
    %1455 = vmatpush1.bf16.msra.mxu0 %v1433
    %1456 = vmatprep.subr.bf16.mxu0 0
    %1457 = vmatpush1.bf16.msra.mxu0 %v1432
    %1458 = vmatprep.subr.bf16.mxu0 0
    %1459 = vmatpush1.bf16.msra.mxu0 %v1431
    %1460 = vmatprep.subr.bf16.mxu0 0
    %1461 = vmatpush1.bf16.msra.mxu0 %v1430
    %1462 = vmatprep.subr.bf16.mxu0 0
    %1463 = vmatpush2.bf16.msra.mxu0 0
    %1464 = vmatprep.subr.bf16.mxu0 0
    %1465 = vmatpush2.bf16.msra.mxu0 0
    %1466 = vmatprep.subr.bf16.mxu0 0
    %1467 = vmatpush2.bf16.msra.mxu0 0
    %1468 = vmatprep.subr.bf16.mxu0 0
    %1469 = vmatpush2.bf16.msra.mxu0 0
    %1470 = vmatprep.subr.bf16.mxu0 0
    %1471 = vmatpush2.bf16.msra.mxu0 0
    %1472 = vmatprep.subr.bf16.mxu0 0
    %1473 = vmatpush2.bf16.msra.mxu0 0
    %1474 = vmatprep.subr.bf16.mxu0 0
    %1475 = vmatpush2.bf16.msra.mxu0 0
    %1476 = vmatprep.subr.bf16.mxu0 0
    %1477 = vmatpush2.bf16.msra.mxu0 0
    %1478 = vmatprep.mubr.bf16.mxu0 0
    %1479 = vmatmul.mubr.bf16.gmra.mxu0 %v1397
    %v1480 = vpop.f32.mrf.mxu0
    %v1481 = vadd.f32 0.0, %v1480
    %v1482 = vpop.f32.mrf.mxu0
    %v1483 = vpop.f32.mrf.mxu0
    %v1484 = vadd.f32 0.0, %v1483
    %v1485 = vpop.f32.mrf.mxu0
    %1486 = vdwg.mxu0
    %v1487 = vadd.f32 %v1255, %v1481
    %v1488 = vadd.f32 %v1256, %v1484
    %v1489 = vld [vmem:[%s6 + $0x7] sm:$0x1]
    %v1490 = vlaneseq
    %v1491 = vshrl.u32 %v1490, 7
    %v1492 = vsub.s32 0, %v1491
    %v1493 = vrot.slane %v1489, %v1492
    %v1494 = vadd.f32 %v1487, %v1493
    %v1495 = vadd.f32 %v1488, %v1493
    %v1496 = vld [vmem:[%s6 + $0x8] sm:$0x1]
    %v1497 = vld [vmem:[%s6 + $0x9] sm:$0x1]
    %v1498 = vsel %vm151, %v1494, 0.0
    %1499 = vadd.xlane.f32.xlu0 %v1498
    %v1500 = vpop.xlane.xlu0 %1499
    %v1501 = vsel %vm151, %v1495, 0.0
    %1502 = vadd.xlane.f32.xlu0 %v1501
    %v1503 = vpop.xlane.xlu0 %1502
    %v1504 = vmul.f32 %v1500, %v158
    %v1505 = vmul.f32 %v1503, %v158
    %v1506 = vsub.f32 %v1494, %v1504
    %v1507 = vsub.f32 %v1495, %v1505
    %v1508 = vmul.f32 %v1506, %v1506
    %v1509 = vmul.f32 %v1507, %v1507
    %v1510 = vsel %vm151, %v1508, 0.0
    %1511 = vadd.xlane.f32.xlu0 %v1510
    %v1512 = vpop.xlane.xlu0 %1511
    %v1513 = vsel %vm151, %v1509, 0.0
    %1514 = vadd.xlane.f32.xlu0 %v1513
    %v1515 = vpop.xlane.xlu0 %1514
    %v1516 = vmul.f32 %v1512, %v158
    %v1517 = vmul.f32 %v1515, %v158
    %v1518 = vadd.f32 %v1516, 1e-05
    %v1519 = vadd.f32 %v1517, 1e-05
    %v1520 = vrsqrt.pop %v1518
    %v1521 = vrsqrt.pop %v1519
    %v1522 = vmul.f32 %v1506, %v1520
    %v1523 = vmul.f32 %v1507, %v1521
    %v1524 = vlaneseq
    %v1525 = vshrl.u32 %v1524, 7
    %v1526 = vsub.s32 0, %v1525
    %v1527 = vrot.slane %v1496, %v1526
    %v1528 = vmul.f32 %v1522, %v1527
    %v1529 = vmul.f32 %v1523, %v1527
    %v1530 = vlaneseq
    %v1531 = vshrl.u32 %v1530, 7
    %v1532 = vsub.s32 0, %v1531
    %v1533 = vrot.slane %v1497, %v1532
    %v1534 = vadd.f32 %v1528, %v1533
    %v1535 = vadd.f32 %v1529, %v1533
    %s1536 = scalar_lea.vmem %s2, 16
    %v1537 = vld [vmem:[%s1536] sm:$0xf]
    %v1538 = vld [vmem:[%s1536 + $0x4] sm:$0xf]
    %v1539 = vld [vmem:[%s1536 + $0x8] sm:$0xf]
    %v1540 = vld [vmem:[%s1536 + $0xc] sm:$0xf]
    %v1541 = vpack.c.bf16 %v1535, %v1534
    %v1542 = vld [vmem:[%s6 + $0xa] sm:$0x1]
    %v1543 = vlaneseq
    %v1544 = vshrl.u32 %v1543, 7
    %v1545 = vsub.s32 0, %v1544
    %v1546 = vrot.slane %v1542, %v1545
    %v1551 = vunpack.c.l.b16 %v1537
    %v1552 = vunpack.c.l.b16 %v1538
    %v1553 = vunpack.c.l.b16 %v1539
    %v1554 = vunpack.c.l.b16 %v1540
    %v1555 = vpack.c.b16 %v1552, %v1551
    %v1556 = vpack.c.b16 %v1554, %v1553
    %v1560 = vsel %vm151, %v1541, 0
    %1562 = vmatprep.subr.bf16.mxu0 0
    %1563 = vmatpush1.bf16.msra.mxu0 0
    %1564 = vmatprep.subr.bf16.mxu0 0
    %1565 = vmatpush1.bf16.msra.mxu0 0
    %1566 = vmatprep.subr.bf16.mxu0 0
    %1567 = vmatpush1.bf16.msra.mxu0 0
    %1568 = vmatprep.subr.bf16.mxu0 0
    %1569 = vmatpush1.bf16.msra.mxu0 0
    %1570 = vmatprep.subr.bf16.mxu0 0
    %1571 = vmatpush1.bf16.msra.mxu0 0
    %1572 = vmatprep.subr.bf16.mxu0 0
    %1573 = vmatpush1.bf16.msra.mxu0 0
    %1574 = vmatprep.subr.bf16.mxu0 0
    %1575 = vmatpush1.bf16.msra.mxu0 %v1556
    %1576 = vmatprep.subr.bf16.mxu0 0
    %1577 = vmatpush1.bf16.msra.mxu0 %v1555
    %1578 = vmatprep.subr.bf16.mxu0 0
    %1579 = vmatpush2.bf16.msra.mxu0 0
    %1580 = vmatprep.subr.bf16.mxu0 0
    %1581 = vmatpush2.bf16.msra.mxu0 0
    %1582 = vmatprep.subr.bf16.mxu0 0
    %1583 = vmatpush2.bf16.msra.mxu0 0
    %1584 = vmatprep.subr.bf16.mxu0 0
    %1585 = vmatpush2.bf16.msra.mxu0 0
    %1586 = vmatprep.subr.bf16.mxu0 0
    %1587 = vmatpush2.bf16.msra.mxu0 0
    %1588 = vmatprep.subr.bf16.mxu0 0
    %1589 = vmatpush2.bf16.msra.mxu0 0
    %1590 = vmatprep.subr.bf16.mxu0 0
    %1591 = vmatpush2.bf16.msra.mxu0 0
    %1592 = vmatprep.subr.bf16.mxu0 0
    %1593 = vmatpush2.bf16.msra.mxu0 0
    %1594 = vmatprep.mubr.bf16.mxu0 0
    %1595 = vmatmul.mubr.bf16.gmra.mxu0 %v1560
    %v1596 = vpop.f32.mrf.mxu0
    %v1597 = vadd.f32 %v1546, %v1596
    %v1598 = vpop.f32.mrf.mxu0
    %v1599 = vpop.f32.mrf.mxu0
    %v1600 = vadd.f32 %v1546, %v1599
    %v1601 = vpop.f32.mrf.mxu0
    %1602 = vdwg.mxu0
    %v1603 = vpack.c.bf16 %v1597, %v1597
    %v1604 = vpack.c.bf16 %v1600, %v1600
    %1606 = vrot.lane.b32.xlu0 %v1603, 96
    %v1607 = vpop.permute.xlu0 %1606
    %v1609 = vsel %vm262, %v1603, 0
    %v1612 = vsel %vm262, %v1607, 0
    %1614 = vmatprep.subr.bf16.mxu0 0
    %1615 = vmatpush1.bf16.xpose.msra.mxu0 0
    %1616 = vmatprep.subr.bf16.mxu0 0
    %1617 = vmatpush1.bf16.xpose.msra.mxu0 0
    %1618 = vmatprep.subr.bf16.mxu0 0
    %1619 = vmatpush1.bf16.xpose.msra.mxu0 0
    %1620 = vmatprep.subr.bf16.mxu0 0
    %1621 = vmatpush1.bf16.xpose.msra.mxu0 0
    %1622 = vmatprep.subr.bf16.mxu0 0
    %1623 = vmatpush1.bf16.xpose.msra.mxu0 0
    %1624 = vmatprep.subr.bf16.mxu0 0
    %1625 = vmatpush1.bf16.xpose.msra.mxu0 0
    %1626 = vmatprep.subr.bf16.mxu0 0
    %1627 = vmatpush1.bf16.xpose.msra.mxu0 0
    %1628 = vmatprep.subr.bf16.mxu0 0
    %1629 = vmatpush1.bf16.xpose.msra.mxu0 %v1612
    %1630 = vmatprep.subr.bf16.mxu0 0
    %1631 = vmatpush2.bf16.xpose.msra.mxu0 0
    %1632 = vmatprep.subr.bf16.mxu0 0
    %1633 = vmatpush2.bf16.xpose.msra.mxu0 0
    %1634 = vmatprep.subr.bf16.mxu0 0
    %1635 = vmatpush2.bf16.xpose.msra.mxu0 0
    %1636 = vmatprep.subr.bf16.mxu0 0
    %1637 = vmatpush2.bf16.xpose.msra.mxu0 0
    %1638 = vmatprep.subr.bf16.mxu0 0
    %1639 = vmatpush2.bf16.xpose.msra.mxu0 0
    %1640 = vmatprep.subr.bf16.mxu0 0
    %1641 = vmatpush2.bf16.xpose.msra.mxu0 0
    %1642 = vmatprep.subr.bf16.mxu0 0
    %1643 = vmatpush2.bf16.xpose.msra.mxu0 0
    %1644 = vmatprep.subr.bf16.mxu0 0
    %1645 = vmatpush2.bf16.xpose.msra.mxu0 0
    %1646 = vmatprep.mubr.bf16.mxu0 0
    %1647 = vmatmul.mubr.bf16.gmra.mxu0 %v1609
    %v1648 = vpop.f32.mrf.mxu0
    %v1649 = vadd.f32 0.0, %v1648
    %v1650 = vpop.f32.mrf.mxu0
    %v1651 = vpop.f32.mrf.mxu0
    %v1652 = vpop.f32.mrf.mxu0
    %1653 = vdwg.mxu0
    %1655 = vrot.lane.b32.xlu0 %v1604, 96
    %v1656 = vpop.permute.xlu0 %1655
    %v1658 = vsel %vm262, %v1604, 0
    %v1661 = vsel %vm262, %v1656, 0
    %1663 = vmatprep.subr.bf16.mxu0 0
    %1664 = vmatpush1.bf16.xpose.msra.mxu0 0
    %1665 = vmatprep.subr.bf16.mxu0 0
    %1666 = vmatpush1.bf16.xpose.msra.mxu0 0
    %1667 = vmatprep.subr.bf16.mxu0 0
    %1668 = vmatpush1.bf16.xpose.msra.mxu0 0
    %1669 = vmatprep.subr.bf16.mxu0 0
    %1670 = vmatpush1.bf16.xpose.msra.mxu0 0
    %1671 = vmatprep.subr.bf16.mxu0 0
    %1672 = vmatpush1.bf16.xpose.msra.mxu0 0
    %1673 = vmatprep.subr.bf16.mxu0 0
    %1674 = vmatpush1.bf16.xpose.msra.mxu0 0
    %1675 = vmatprep.subr.bf16.mxu0 0
    %1676 = vmatpush1.bf16.xpose.msra.mxu0 0
    %1677 = vmatprep.subr.bf16.mxu0 0
    %1678 = vmatpush1.bf16.xpose.msra.mxu0 %v1661
    %1679 = vmatprep.subr.bf16.mxu0 0
    %1680 = vmatpush2.bf16.xpose.msra.mxu0 0
    %1681 = vmatprep.subr.bf16.mxu0 0
    %1682 = vmatpush2.bf16.xpose.msra.mxu0 0
    %1683 = vmatprep.subr.bf16.mxu0 0
    %1684 = vmatpush2.bf16.xpose.msra.mxu0 0
    %1685 = vmatprep.subr.bf16.mxu0 0
    %1686 = vmatpush2.bf16.xpose.msra.mxu0 0
    %1687 = vmatprep.subr.bf16.mxu0 0
    %1688 = vmatpush2.bf16.xpose.msra.mxu0 0
    %1689 = vmatprep.subr.bf16.mxu0 0
    %1690 = vmatpush2.bf16.xpose.msra.mxu0 0
    %1691 = vmatprep.subr.bf16.mxu0 0
    %1692 = vmatpush2.bf16.xpose.msra.mxu0 0
    %1693 = vmatprep.subr.bf16.mxu0 0
    %1694 = vmatpush2.bf16.xpose.msra.mxu0 0
    %1695 = vmatprep.mubr.bf16.mxu0 0
    %1696 = vmatmul.mubr.bf16.gmra.mxu0 %v1658
    %v1697 = vpop.f32.mrf.mxu0
    %v1698 = vadd.f32 0.0, %v1697
    %v1699 = vpop.f32.mrf.mxu0
    %v1700 = vpop.f32.mrf.mxu0
    %v1701 = vpop.f32.mrf.mxu0
    %1702 = vdwg.mxu0
    %v1703 = vmul.f32 %v1649, 0.35355338
    %v1704 = vmul.f32 %v1698, 0.35355338
    %v1705 = vadd.f32 %v1703, %v148
    %v1706 = vadd.f32 %v1704, %v148
    %v1707 = vsel %vm262, %v1705, -inf
    %1708 = vmax.xlane.f32.xlu0 %v1707
    %v1709 = vpop.xlane.xlu0 %1708
    %v1710 = vsel %vm262, %v1706, -inf
    %1711 = vmax.xlane.f32.xlu0 %v1710
    %v1712 = vpop.xlane.xlu0 %1711
    %v1713 = vsub.f32 %v1705, %v1709
    %v1714 = vsub.f32 %v1706, %v1712
    %v1715 = vmul.f32 %v1713, 1.442695
    %v1716 = vpow.pop %v1715
    %v1717 = vmul.f32 %v1714, 1.442695
    %v1718 = vpow.pop %v1717
    %v1719 = vsel %vm262, %v1716, 0.0
    %1720 = vadd.xlane.f32.xlu0 %v1719
    %v1721 = vpop.xlane.xlu0 %1720
    %v1722 = vsel %vm262, %v1718, 0.0
    %1723 = vadd.xlane.f32.xlu0 %v1722
    %v1724 = vpop.xlane.xlu0 %1723
    %v1725 = vrcp.pop %v1721
    %v1726 = vrcp.pop %v1724
    %v1727 = vmul.f32 %v1716, %v1725
    %v1728 = vmul.f32 %v1718, %v1726
    %v1729 = vpack.c.bf16 %v1727, %v1727
    %v1730 = vpack.c.bf16 %v1728, %v1728
    %1731 = vrot.lane.b32.xlu0 %v1603, 64
    %v1732 = vpop.permute.xlu0 %1731
    %v1734 = vsel %vm262, %v1729, 0
    %v1737 = vsel %vm391, %v1732, 0
    %1739 = vmatprep.subr.bf16.mxu0 0
    %1740 = vmatpush1.bf16.msra.mxu0 0
    %1741 = vmatprep.subr.bf16.mxu0 0
    %1742 = vmatpush1.bf16.msra.mxu0 0
    %1743 = vmatprep.subr.bf16.mxu0 0
    %1744 = vmatpush1.bf16.msra.mxu0 0
    %1745 = vmatprep.subr.bf16.mxu0 0
    %1746 = vmatpush1.bf16.msra.mxu0 0
    %1747 = vmatprep.subr.bf16.mxu0 0
    %1748 = vmatpush1.bf16.msra.mxu0 0
    %1749 = vmatprep.subr.bf16.mxu0 0
    %1750 = vmatpush1.bf16.msra.mxu0 0
    %1751 = vmatprep.subr.bf16.mxu0 0
    %1752 = vmatpush1.bf16.msra.mxu0 0
    %1753 = vmatprep.subr.bf16.mxu0 0
    %1754 = vmatpush1.bf16.msra.mxu0 %v1737
    %1755 = vmatprep.subr.bf16.mxu0 0
    %1756 = vmatpush2.bf16.msra.mxu0 0
    %1757 = vmatprep.subr.bf16.mxu0 0
    %1758 = vmatpush2.bf16.msra.mxu0 0
    %1759 = vmatprep.subr.bf16.mxu0 0
    %1760 = vmatpush2.bf16.msra.mxu0 0
    %1761 = vmatprep.subr.bf16.mxu0 0
    %1762 = vmatpush2.bf16.msra.mxu0 0
    %1763 = vmatprep.subr.bf16.mxu0 0
    %1764 = vmatpush2.bf16.msra.mxu0 0
    %1765 = vmatprep.subr.bf16.mxu0 0
    %1766 = vmatpush2.bf16.msra.mxu0 0
    %1767 = vmatprep.subr.bf16.mxu0 0
    %1768 = vmatpush2.bf16.msra.mxu0 0
    %1769 = vmatprep.subr.bf16.mxu0 0
    %1770 = vmatpush2.bf16.msra.mxu0 0
    %1771 = vmatprep.mubr.bf16.mxu0 0
    %1772 = vmatmul.mubr.bf16.gmra.mxu0 %v1734
    %v1773 = vpop.f32.mrf.mxu0
    %v1774 = vadd.f32 0.0, %v1773
    %v1775 = vpop.f32.mrf.mxu0
    %v1776 = vpop.f32.mrf.mxu0
    %v1777 = vpop.f32.mrf.mxu0
    %1778 = vdwg.mxu0
    %1779 = vrot.lane.b32.xlu0 %v1604, 64
    %v1780 = vpop.permute.xlu0 %1779
    %v1782 = vsel %vm262, %v1730, 0
    %v1785 = vsel %vm391, %v1780, 0
    %1787 = vmatprep.subr.bf16.mxu0 0
    %1788 = vmatpush1.bf16.msra.mxu0 0
    %1789 = vmatprep.subr.bf16.mxu0 0
    %1790 = vmatpush1.bf16.msra.mxu0 0
    %1791 = vmatprep.subr.bf16.mxu0 0
    %1792 = vmatpush1.bf16.msra.mxu0 0
    %1793 = vmatprep.subr.bf16.mxu0 0
    %1794 = vmatpush1.bf16.msra.mxu0 0
    %1795 = vmatprep.subr.bf16.mxu0 0
    %1796 = vmatpush1.bf16.msra.mxu0 0
    %1797 = vmatprep.subr.bf16.mxu0 0
    %1798 = vmatpush1.bf16.msra.mxu0 0
    %1799 = vmatprep.subr.bf16.mxu0 0
    %1800 = vmatpush1.bf16.msra.mxu0 0
    %1801 = vmatprep.subr.bf16.mxu0 0
    %1802 = vmatpush1.bf16.msra.mxu0 %v1785
    %1803 = vmatprep.subr.bf16.mxu0 0
    %1804 = vmatpush2.bf16.msra.mxu0 0
    %1805 = vmatprep.subr.bf16.mxu0 0
    %1806 = vmatpush2.bf16.msra.mxu0 0
    %1807 = vmatprep.subr.bf16.mxu0 0
    %1808 = vmatpush2.bf16.msra.mxu0 0
    %1809 = vmatprep.subr.bf16.mxu0 0
    %1810 = vmatpush2.bf16.msra.mxu0 0
    %1811 = vmatprep.subr.bf16.mxu0 0
    %1812 = vmatpush2.bf16.msra.mxu0 0
    %1813 = vmatprep.subr.bf16.mxu0 0
    %1814 = vmatpush2.bf16.msra.mxu0 0
    %1815 = vmatprep.subr.bf16.mxu0 0
    %1816 = vmatpush2.bf16.msra.mxu0 0
    %1817 = vmatprep.subr.bf16.mxu0 0
    %1818 = vmatpush2.bf16.msra.mxu0 0
    %1819 = vmatprep.mubr.bf16.mxu0 0
    %1820 = vmatmul.mubr.bf16.gmra.mxu0 %v1782
    %v1821 = vpop.f32.mrf.mxu0
    %v1822 = vadd.f32 0.0, %v1821
    %v1823 = vpop.f32.mrf.mxu0
    %v1824 = vpop.f32.mrf.mxu0
    %v1825 = vpop.f32.mrf.mxu0
    %1826 = vdwg.mxu0
    %1827 = vrot.lane.b32.xlu0 %v1603, 120
    %v1828 = vpop.permute.xlu0 %1827
    %1829 = vrot.lane.b32.xlu0 %v1603, 88
    %v1830 = vpop.permute.xlu0 %1829
    %v1832 = vsel %vm262, %v1828, 0
    %v1835 = vsel %vm262, %v1830, 0
    %1837 = vmatprep.subr.bf16.mxu0 0
    %1838 = vmatpush1.bf16.xpose.msra.mxu0 0
    %1839 = vmatprep.subr.bf16.mxu0 0
    %1840 = vmatpush1.bf16.xpose.msra.mxu0 0
    %1841 = vmatprep.subr.bf16.mxu0 0
    %1842 = vmatpush1.bf16.xpose.msra.mxu0 0
    %1843 = vmatprep.subr.bf16.mxu0 0
    %1844 = vmatpush1.bf16.xpose.msra.mxu0 0
    %1845 = vmatprep.subr.bf16.mxu0 0
    %1846 = vmatpush1.bf16.xpose.msra.mxu0 0
    %1847 = vmatprep.subr.bf16.mxu0 0
    %1848 = vmatpush1.bf16.xpose.msra.mxu0 0
    %1849 = vmatprep.subr.bf16.mxu0 0
    %1850 = vmatpush1.bf16.xpose.msra.mxu0 0
    %1851 = vmatprep.subr.bf16.mxu0 0
    %1852 = vmatpush1.bf16.xpose.msra.mxu0 %v1835
    %1853 = vmatprep.subr.bf16.mxu0 0
    %1854 = vmatpush2.bf16.xpose.msra.mxu0 0
    %1855 = vmatprep.subr.bf16.mxu0 0
    %1856 = vmatpush2.bf16.xpose.msra.mxu0 0
    %1857 = vmatprep.subr.bf16.mxu0 0
    %1858 = vmatpush2.bf16.xpose.msra.mxu0 0
    %1859 = vmatprep.subr.bf16.mxu0 0
    %1860 = vmatpush2.bf16.xpose.msra.mxu0 0
    %1861 = vmatprep.subr.bf16.mxu0 0
    %1862 = vmatpush2.bf16.xpose.msra.mxu0 0
    %1863 = vmatprep.subr.bf16.mxu0 0
    %1864 = vmatpush2.bf16.xpose.msra.mxu0 0
    %1865 = vmatprep.subr.bf16.mxu0 0
    %1866 = vmatpush2.bf16.xpose.msra.mxu0 0
    %1867 = vmatprep.subr.bf16.mxu0 0
    %1868 = vmatpush2.bf16.xpose.msra.mxu0 0
    %1869 = vmatprep.mubr.bf16.mxu0 0
    %1870 = vmatmul.mubr.bf16.gmra.mxu0 %v1832
    %v1871 = vpop.f32.mrf.mxu0
    %v1872 = vadd.f32 0.0, %v1871
    %v1873 = vpop.f32.mrf.mxu0
    %v1874 = vpop.f32.mrf.mxu0
    %v1875 = vpop.f32.mrf.mxu0
    %1876 = vdwg.mxu0
    %1877 = vrot.lane.b32.xlu0 %v1604, 120
    %v1878 = vpop.permute.xlu0 %1877
    %1879 = vrot.lane.b32.xlu0 %v1604, 88
    %v1880 = vpop.permute.xlu0 %1879
    %v1882 = vsel %vm262, %v1878, 0
    %v1885 = vsel %vm262, %v1880, 0
    %1887 = vmatprep.subr.bf16.mxu0 0
    %1888 = vmatpush1.bf16.xpose.msra.mxu0 0
    %1889 = vmatprep.subr.bf16.mxu0 0
    %1890 = vmatpush1.bf16.xpose.msra.mxu0 0
    %1891 = vmatprep.subr.bf16.mxu0 0
    %1892 = vmatpush1.bf16.xpose.msra.mxu0 0
    %1893 = vmatprep.subr.bf16.mxu0 0
    %1894 = vmatpush1.bf16.xpose.msra.mxu0 0
    %1895 = vmatprep.subr.bf16.mxu0 0
    %1896 = vmatpush1.bf16.xpose.msra.mxu0 0
    %1897 = vmatprep.subr.bf16.mxu0 0
    %1898 = vmatpush1.bf16.xpose.msra.mxu0 0
    %1899 = vmatprep.subr.bf16.mxu0 0
    %1900 = vmatpush1.bf16.xpose.msra.mxu0 0
    %1901 = vmatprep.subr.bf16.mxu0 0
    %1902 = vmatpush1.bf16.xpose.msra.mxu0 %v1885
    %1903 = vmatprep.subr.bf16.mxu0 0
    %1904 = vmatpush2.bf16.xpose.msra.mxu0 0
    %1905 = vmatprep.subr.bf16.mxu0 0
    %1906 = vmatpush2.bf16.xpose.msra.mxu0 0
    %1907 = vmatprep.subr.bf16.mxu0 0
    %1908 = vmatpush2.bf16.xpose.msra.mxu0 0
    %1909 = vmatprep.subr.bf16.mxu0 0
    %1910 = vmatpush2.bf16.xpose.msra.mxu0 0
    %1911 = vmatprep.subr.bf16.mxu0 0
    %1912 = vmatpush2.bf16.xpose.msra.mxu0 0
    %1913 = vmatprep.subr.bf16.mxu0 0
    %1914 = vmatpush2.bf16.xpose.msra.mxu0 0
    %1915 = vmatprep.subr.bf16.mxu0 0
    %1916 = vmatpush2.bf16.xpose.msra.mxu0 0
    %1917 = vmatprep.subr.bf16.mxu0 0
    %1918 = vmatpush2.bf16.xpose.msra.mxu0 0
    %1919 = vmatprep.mubr.bf16.mxu0 0
    %1920 = vmatmul.mubr.bf16.gmra.mxu0 %v1882
    %v1921 = vpop.f32.mrf.mxu0
    %v1922 = vadd.f32 0.0, %v1921
    %v1923 = vpop.f32.mrf.mxu0
    %v1924 = vpop.f32.mrf.mxu0
    %v1925 = vpop.f32.mrf.mxu0
    %1926 = vdwg.mxu0
    %v1927 = vmul.f32 %v1872, 0.35355338
    %v1928 = vmul.f32 %v1922, 0.35355338
    %v1929 = vadd.f32 %v1927, %v148
    %v1930 = vadd.f32 %v1928, %v148
    %v1931 = vsel %vm262, %v1929, -inf
    %1932 = vmax.xlane.f32.xlu0 %v1931
    %v1933 = vpop.xlane.xlu0 %1932
    %v1934 = vsel %vm262, %v1930, -inf
    %1935 = vmax.xlane.f32.xlu0 %v1934
    %v1936 = vpop.xlane.xlu0 %1935
    %v1937 = vsub.f32 %v1929, %v1933
    %v1938 = vsub.f32 %v1930, %v1936
    %v1939 = vmul.f32 %v1937, 1.442695
    %v1940 = vpow.pop %v1939
    %v1941 = vmul.f32 %v1938, 1.442695
    %v1942 = vpow.pop %v1941
    %v1943 = vsel %vm262, %v1940, 0.0
    %1944 = vadd.xlane.f32.xlu0 %v1943
    %v1945 = vpop.xlane.xlu0 %1944
    %v1946 = vsel %vm262, %v1942, 0.0
    %1947 = vadd.xlane.f32.xlu0 %v1946
    %v1948 = vpop.xlane.xlu0 %1947
    %v1949 = vrcp.pop %v1945
    %v1950 = vrcp.pop %v1948
    %v1951 = vmul.f32 %v1940, %v1949
    %v1952 = vmul.f32 %v1942, %v1950
    %v1953 = vpack.c.bf16 %v1951, %v1951
    %v1954 = vpack.c.bf16 %v1952, %v1952
    %1955 = vrot.lane.b32.xlu0 %v1603, 56
    %v1956 = vpop.permute.xlu0 %1955
    %v1958 = vsel %vm262, %v1953, 0
    %v1961 = vsel %vm391, %v1956, 0
    %1963 = vmatprep.subr.bf16.mxu0 0
    %1964 = vmatpush1.bf16.msra.mxu0 0
    %1965 = vmatprep.subr.bf16.mxu0 0
    %1966 = vmatpush1.bf16.msra.mxu0 0
    %1967 = vmatprep.subr.bf16.mxu0 0
    %1968 = vmatpush1.bf16.msra.mxu0 0
    %1969 = vmatprep.subr.bf16.mxu0 0
    %1970 = vmatpush1.bf16.msra.mxu0 0
    %1971 = vmatprep.subr.bf16.mxu0 0
    %1972 = vmatpush1.bf16.msra.mxu0 0
    %1973 = vmatprep.subr.bf16.mxu0 0
    %1974 = vmatpush1.bf16.msra.mxu0 0
    %1975 = vmatprep.subr.bf16.mxu0 0
    %1976 = vmatpush1.bf16.msra.mxu0 0
    %1977 = vmatprep.subr.bf16.mxu0 0
    %1978 = vmatpush1.bf16.msra.mxu0 %v1961
    %1979 = vmatprep.subr.bf16.mxu0 0
    %1980 = vmatpush2.bf16.msra.mxu0 0
    %1981 = vmatprep.subr.bf16.mxu0 0
    %1982 = vmatpush2.bf16.msra.mxu0 0
    %1983 = vmatprep.subr.bf16.mxu0 0
    %1984 = vmatpush2.bf16.msra.mxu0 0
    %1985 = vmatprep.subr.bf16.mxu0 0
    %1986 = vmatpush2.bf16.msra.mxu0 0
    %1987 = vmatprep.subr.bf16.mxu0 0
    %1988 = vmatpush2.bf16.msra.mxu0 0
    %1989 = vmatprep.subr.bf16.mxu0 0
    %1990 = vmatpush2.bf16.msra.mxu0 0
    %1991 = vmatprep.subr.bf16.mxu0 0
    %1992 = vmatpush2.bf16.msra.mxu0 0
    %1993 = vmatprep.subr.bf16.mxu0 0
    %1994 = vmatpush2.bf16.msra.mxu0 0
    %1995 = vmatprep.mubr.bf16.mxu0 0
    %1996 = vmatmul.mubr.bf16.gmra.mxu0 %v1958
    %v1997 = vpop.f32.mrf.mxu0
    %v1998 = vadd.f32 0.0, %v1997
    %v1999 = vpop.f32.mrf.mxu0
    %v2000 = vpop.f32.mrf.mxu0
    %v2001 = vpop.f32.mrf.mxu0
    %2002 = vdwg.mxu0
    %2003 = vrot.lane.b32.xlu0 %v1604, 56
    %v2004 = vpop.permute.xlu0 %2003
    %v2006 = vsel %vm262, %v1954, 0
    %v2009 = vsel %vm391, %v2004, 0
    %2011 = vmatprep.subr.bf16.mxu0 0
    %2012 = vmatpush1.bf16.msra.mxu0 0
    %2013 = vmatprep.subr.bf16.mxu0 0
    %2014 = vmatpush1.bf16.msra.mxu0 0
    %2015 = vmatprep.subr.bf16.mxu0 0
    %2016 = vmatpush1.bf16.msra.mxu0 0
    %2017 = vmatprep.subr.bf16.mxu0 0
    %2018 = vmatpush1.bf16.msra.mxu0 0
    %2019 = vmatprep.subr.bf16.mxu0 0
    %2020 = vmatpush1.bf16.msra.mxu0 0
    %2021 = vmatprep.subr.bf16.mxu0 0
    %2022 = vmatpush1.bf16.msra.mxu0 0
    %2023 = vmatprep.subr.bf16.mxu0 0
    %2024 = vmatpush1.bf16.msra.mxu0 0
    %2025 = vmatprep.subr.bf16.mxu0 0
    %2026 = vmatpush1.bf16.msra.mxu0 %v2009
    %2027 = vmatprep.subr.bf16.mxu0 0
    %2028 = vmatpush2.bf16.msra.mxu0 0
    %2029 = vmatprep.subr.bf16.mxu0 0
    %2030 = vmatpush2.bf16.msra.mxu0 0
    %2031 = vmatprep.subr.bf16.mxu0 0
    %2032 = vmatpush2.bf16.msra.mxu0 0
    %2033 = vmatprep.subr.bf16.mxu0 0
    %2034 = vmatpush2.bf16.msra.mxu0 0
    %2035 = vmatprep.subr.bf16.mxu0 0
    %2036 = vmatpush2.bf16.msra.mxu0 0
    %2037 = vmatprep.subr.bf16.mxu0 0
    %2038 = vmatpush2.bf16.msra.mxu0 0
    %2039 = vmatprep.subr.bf16.mxu0 0
    %2040 = vmatpush2.bf16.msra.mxu0 0
    %2041 = vmatprep.subr.bf16.mxu0 0
    %2042 = vmatpush2.bf16.msra.mxu0 0
    %2043 = vmatprep.mubr.bf16.mxu0 0
    %2044 = vmatmul.mubr.bf16.gmra.mxu0 %v2006
    %v2045 = vpop.f32.mrf.mxu0
    %v2046 = vadd.f32 0.0, %v2045
    %v2047 = vpop.f32.mrf.mxu0
    %v2048 = vpop.f32.mrf.mxu0
    %v2049 = vpop.f32.mrf.mxu0
    %2050 = vdwg.mxu0
    %2051 = vrot.lane.b32.xlu0 %v1603, 112
    %v2052 = vpop.permute.xlu0 %2051
    %2053 = vrot.lane.b32.xlu0 %v1603, 80
    %v2054 = vpop.permute.xlu0 %2053
    %v2056 = vsel %vm262, %v2052, 0
    %v2059 = vsel %vm262, %v2054, 0
    %2061 = vmatprep.subr.bf16.mxu0 0
    %2062 = vmatpush1.bf16.xpose.msra.mxu0 0
    %2063 = vmatprep.subr.bf16.mxu0 0
    %2064 = vmatpush1.bf16.xpose.msra.mxu0 0
    %2065 = vmatprep.subr.bf16.mxu0 0
    %2066 = vmatpush1.bf16.xpose.msra.mxu0 0
    %2067 = vmatprep.subr.bf16.mxu0 0
    %2068 = vmatpush1.bf16.xpose.msra.mxu0 0
    %2069 = vmatprep.subr.bf16.mxu0 0
    %2070 = vmatpush1.bf16.xpose.msra.mxu0 0
    %2071 = vmatprep.subr.bf16.mxu0 0
    %2072 = vmatpush1.bf16.xpose.msra.mxu0 0
    %2073 = vmatprep.subr.bf16.mxu0 0
    %2074 = vmatpush1.bf16.xpose.msra.mxu0 0
    %2075 = vmatprep.subr.bf16.mxu0 0
    %2076 = vmatpush1.bf16.xpose.msra.mxu0 %v2059
    %2077 = vmatprep.subr.bf16.mxu0 0
    %2078 = vmatpush2.bf16.xpose.msra.mxu0 0
    %2079 = vmatprep.subr.bf16.mxu0 0
    %2080 = vmatpush2.bf16.xpose.msra.mxu0 0
    %2081 = vmatprep.subr.bf16.mxu0 0
    %2082 = vmatpush2.bf16.xpose.msra.mxu0 0
    %2083 = vmatprep.subr.bf16.mxu0 0
    %2084 = vmatpush2.bf16.xpose.msra.mxu0 0
    %2085 = vmatprep.subr.bf16.mxu0 0
    %2086 = vmatpush2.bf16.xpose.msra.mxu0 0
    %2087 = vmatprep.subr.bf16.mxu0 0
    %2088 = vmatpush2.bf16.xpose.msra.mxu0 0
    %2089 = vmatprep.subr.bf16.mxu0 0
    %2090 = vmatpush2.bf16.xpose.msra.mxu0 0
    %2091 = vmatprep.subr.bf16.mxu0 0
    %2092 = vmatpush2.bf16.xpose.msra.mxu0 0
    %2093 = vmatprep.mubr.bf16.mxu0 0
    %2094 = vmatmul.mubr.bf16.gmra.mxu0 %v2056
    %v2095 = vpop.f32.mrf.mxu0
    %v2096 = vadd.f32 0.0, %v2095
    %v2097 = vpop.f32.mrf.mxu0
    %v2098 = vpop.f32.mrf.mxu0
    %v2099 = vpop.f32.mrf.mxu0
    %2100 = vdwg.mxu0
    %2101 = vrot.lane.b32.xlu0 %v1604, 112
    %v2102 = vpop.permute.xlu0 %2101
    %2103 = vrot.lane.b32.xlu0 %v1604, 80
    %v2104 = vpop.permute.xlu0 %2103
    %v2106 = vsel %vm262, %v2102, 0
    %v2109 = vsel %vm262, %v2104, 0
    %2111 = vmatprep.subr.bf16.mxu0 0
    %2112 = vmatpush1.bf16.xpose.msra.mxu0 0
    %2113 = vmatprep.subr.bf16.mxu0 0
    %2114 = vmatpush1.bf16.xpose.msra.mxu0 0
    %2115 = vmatprep.subr.bf16.mxu0 0
    %2116 = vmatpush1.bf16.xpose.msra.mxu0 0
    %2117 = vmatprep.subr.bf16.mxu0 0
    %2118 = vmatpush1.bf16.xpose.msra.mxu0 0
    %2119 = vmatprep.subr.bf16.mxu0 0
    %2120 = vmatpush1.bf16.xpose.msra.mxu0 0
    %2121 = vmatprep.subr.bf16.mxu0 0
    %2122 = vmatpush1.bf16.xpose.msra.mxu0 0
    %2123 = vmatprep.subr.bf16.mxu0 0
    %2124 = vmatpush1.bf16.xpose.msra.mxu0 0
    %2125 = vmatprep.subr.bf16.mxu0 0
    %2126 = vmatpush1.bf16.xpose.msra.mxu0 %v2109
    %2127 = vmatprep.subr.bf16.mxu0 0
    %2128 = vmatpush2.bf16.xpose.msra.mxu0 0
    %2129 = vmatprep.subr.bf16.mxu0 0
    %2130 = vmatpush2.bf16.xpose.msra.mxu0 0
    %2131 = vmatprep.subr.bf16.mxu0 0
    %2132 = vmatpush2.bf16.xpose.msra.mxu0 0
    %2133 = vmatprep.subr.bf16.mxu0 0
    %2134 = vmatpush2.bf16.xpose.msra.mxu0 0
    %2135 = vmatprep.subr.bf16.mxu0 0
    %2136 = vmatpush2.bf16.xpose.msra.mxu0 0
    %2137 = vmatprep.subr.bf16.mxu0 0
    %2138 = vmatpush2.bf16.xpose.msra.mxu0 0
    %2139 = vmatprep.subr.bf16.mxu0 0
    %2140 = vmatpush2.bf16.xpose.msra.mxu0 0
    %2141 = vmatprep.subr.bf16.mxu0 0
    %2142 = vmatpush2.bf16.xpose.msra.mxu0 0
    %2143 = vmatprep.mubr.bf16.mxu0 0
    %2144 = vmatmul.mubr.bf16.gmra.mxu0 %v2106
    %v2145 = vpop.f32.mrf.mxu0
    %v2146 = vadd.f32 0.0, %v2145
    %v2147 = vpop.f32.mrf.mxu0
    %v2148 = vpop.f32.mrf.mxu0
    %v2149 = vpop.f32.mrf.mxu0
    %2150 = vdwg.mxu0
    %v2151 = vmul.f32 %v2096, 0.35355338
    %v2152 = vmul.f32 %v2146, 0.35355338
    %v2153 = vadd.f32 %v2151, %v148
    %v2154 = vadd.f32 %v2152, %v148
    %v2155 = vsel %vm262, %v2153, -inf
    %2156 = vmax.xlane.f32.xlu0 %v2155
    %v2157 = vpop.xlane.xlu0 %2156
    %v2158 = vsel %vm262, %v2154, -inf
    %2159 = vmax.xlane.f32.xlu0 %v2158
    %v2160 = vpop.xlane.xlu0 %2159
    %v2161 = vsub.f32 %v2153, %v2157
    %v2162 = vsub.f32 %v2154, %v2160
    %v2163 = vmul.f32 %v2161, 1.442695
    %v2164 = vpow.pop %v2163
    %v2165 = vmul.f32 %v2162, 1.442695
    %v2166 = vpow.pop %v2165
    %v2167 = vsel %vm262, %v2164, 0.0
    %2168 = vadd.xlane.f32.xlu0 %v2167
    %v2169 = vpop.xlane.xlu0 %2168
    %v2170 = vsel %vm262, %v2166, 0.0
    %2171 = vadd.xlane.f32.xlu0 %v2170
    %v2172 = vpop.xlane.xlu0 %2171
    %v2173 = vrcp.pop %v2169
    %v2174 = vrcp.pop %v2172
    %v2175 = vmul.f32 %v2164, %v2173
    %v2176 = vmul.f32 %v2166, %v2174
    %v2177 = vpack.c.bf16 %v2175, %v2175
    %v2178 = vpack.c.bf16 %v2176, %v2176
    %2179 = vrot.lane.b32.xlu0 %v1603, 48
    %v2180 = vpop.permute.xlu0 %2179
    %v2182 = vsel %vm262, %v2177, 0
    %v2185 = vsel %vm391, %v2180, 0
    %2187 = vmatprep.subr.bf16.mxu0 0
    %2188 = vmatpush1.bf16.msra.mxu0 0
    %2189 = vmatprep.subr.bf16.mxu0 0
    %2190 = vmatpush1.bf16.msra.mxu0 0
    %2191 = vmatprep.subr.bf16.mxu0 0
    %2192 = vmatpush1.bf16.msra.mxu0 0
    %2193 = vmatprep.subr.bf16.mxu0 0
    %2194 = vmatpush1.bf16.msra.mxu0 0
    %2195 = vmatprep.subr.bf16.mxu0 0
    %2196 = vmatpush1.bf16.msra.mxu0 0
    %2197 = vmatprep.subr.bf16.mxu0 0
    %2198 = vmatpush1.bf16.msra.mxu0 0
    %2199 = vmatprep.subr.bf16.mxu0 0
    %2200 = vmatpush1.bf16.msra.mxu0 0
    %2201 = vmatprep.subr.bf16.mxu0 0
    %2202 = vmatpush1.bf16.msra.mxu0 %v2185
    %2203 = vmatprep.subr.bf16.mxu0 0
    %2204 = vmatpush2.bf16.msra.mxu0 0
    %2205 = vmatprep.subr.bf16.mxu0 0
    %2206 = vmatpush2.bf16.msra.mxu0 0
    %2207 = vmatprep.subr.bf16.mxu0 0
    %2208 = vmatpush2.bf16.msra.mxu0 0
    %2209 = vmatprep.subr.bf16.mxu0 0
    %2210 = vmatpush2.bf16.msra.mxu0 0
    %2211 = vmatprep.subr.bf16.mxu0 0
    %2212 = vmatpush2.bf16.msra.mxu0 0
    %2213 = vmatprep.subr.bf16.mxu0 0
    %2214 = vmatpush2.bf16.msra.mxu0 0
    %2215 = vmatprep.subr.bf16.mxu0 0
    %2216 = vmatpush2.bf16.msra.mxu0 0
    %2217 = vmatprep.subr.bf16.mxu0 0
    %2218 = vmatpush2.bf16.msra.mxu0 0
    %2219 = vmatprep.mubr.bf16.mxu0 0
    %2220 = vmatmul.mubr.bf16.gmra.mxu0 %v2182
    %v2221 = vpop.f32.mrf.mxu0
    %v2222 = vadd.f32 0.0, %v2221
    %v2223 = vpop.f32.mrf.mxu0
    %v2224 = vpop.f32.mrf.mxu0
    %v2225 = vpop.f32.mrf.mxu0
    %2226 = vdwg.mxu0
    %2227 = vrot.lane.b32.xlu0 %v1604, 48
    %v2228 = vpop.permute.xlu0 %2227
    %v2230 = vsel %vm262, %v2178, 0
    %v2233 = vsel %vm391, %v2228, 0
    %2235 = vmatprep.subr.bf16.mxu0 0
    %2236 = vmatpush1.bf16.msra.mxu0 0
    %2237 = vmatprep.subr.bf16.mxu0 0
    %2238 = vmatpush1.bf16.msra.mxu0 0
    %2239 = vmatprep.subr.bf16.mxu0 0
    %2240 = vmatpush1.bf16.msra.mxu0 0
    %2241 = vmatprep.subr.bf16.mxu0 0
    %2242 = vmatpush1.bf16.msra.mxu0 0
    %2243 = vmatprep.subr.bf16.mxu0 0
    %2244 = vmatpush1.bf16.msra.mxu0 0
    %2245 = vmatprep.subr.bf16.mxu0 0
    %2246 = vmatpush1.bf16.msra.mxu0 0
    %2247 = vmatprep.subr.bf16.mxu0 0
    %2248 = vmatpush1.bf16.msra.mxu0 0
    %2249 = vmatprep.subr.bf16.mxu0 0
    %2250 = vmatpush1.bf16.msra.mxu0 %v2233
    %2251 = vmatprep.subr.bf16.mxu0 0
    %2252 = vmatpush2.bf16.msra.mxu0 0
    %2253 = vmatprep.subr.bf16.mxu0 0
    %2254 = vmatpush2.bf16.msra.mxu0 0
    %2255 = vmatprep.subr.bf16.mxu0 0
    %2256 = vmatpush2.bf16.msra.mxu0 0
    %2257 = vmatprep.subr.bf16.mxu0 0
    %2258 = vmatpush2.bf16.msra.mxu0 0
    %2259 = vmatprep.subr.bf16.mxu0 0
    %2260 = vmatpush2.bf16.msra.mxu0 0
    %2261 = vmatprep.subr.bf16.mxu0 0
    %2262 = vmatpush2.bf16.msra.mxu0 0
    %2263 = vmatprep.subr.bf16.mxu0 0
    %2264 = vmatpush2.bf16.msra.mxu0 0
    %2265 = vmatprep.subr.bf16.mxu0 0
    %2266 = vmatpush2.bf16.msra.mxu0 0
    %2267 = vmatprep.mubr.bf16.mxu0 0
    %2268 = vmatmul.mubr.bf16.gmra.mxu0 %v2230
    %v2269 = vpop.f32.mrf.mxu0
    %v2270 = vadd.f32 0.0, %v2269
    %v2271 = vpop.f32.mrf.mxu0
    %v2272 = vpop.f32.mrf.mxu0
    %v2273 = vpop.f32.mrf.mxu0
    %2274 = vdwg.mxu0
    %2275 = vrot.lane.b32.xlu0 %v1603, 104
    %v2276 = vpop.permute.xlu0 %2275
    %2277 = vrot.lane.b32.xlu0 %v1603, 72
    %v2278 = vpop.permute.xlu0 %2277
    %v2280 = vsel %vm262, %v2276, 0
    %v2283 = vsel %vm262, %v2278, 0
    %2285 = vmatprep.subr.bf16.mxu0 0
    %2286 = vmatpush1.bf16.xpose.msra.mxu0 0
    %2287 = vmatprep.subr.bf16.mxu0 0
    %2288 = vmatpush1.bf16.xpose.msra.mxu0 0
    %2289 = vmatprep.subr.bf16.mxu0 0
    %2290 = vmatpush1.bf16.xpose.msra.mxu0 0
    %2291 = vmatprep.subr.bf16.mxu0 0
    %2292 = vmatpush1.bf16.xpose.msra.mxu0 0
    %2293 = vmatprep.subr.bf16.mxu0 0
    %2294 = vmatpush1.bf16.xpose.msra.mxu0 0
    %2295 = vmatprep.subr.bf16.mxu0 0
    %2296 = vmatpush1.bf16.xpose.msra.mxu0 0
    %2297 = vmatprep.subr.bf16.mxu0 0
    %2298 = vmatpush1.bf16.xpose.msra.mxu0 0
    %2299 = vmatprep.subr.bf16.mxu0 0
    %2300 = vmatpush1.bf16.xpose.msra.mxu0 %v2283
    %2301 = vmatprep.subr.bf16.mxu0 0
    %2302 = vmatpush2.bf16.xpose.msra.mxu0 0
    %2303 = vmatprep.subr.bf16.mxu0 0
    %2304 = vmatpush2.bf16.xpose.msra.mxu0 0
    %2305 = vmatprep.subr.bf16.mxu0 0
    %2306 = vmatpush2.bf16.xpose.msra.mxu0 0
    %2307 = vmatprep.subr.bf16.mxu0 0
    %2308 = vmatpush2.bf16.xpose.msra.mxu0 0
    %2309 = vmatprep.subr.bf16.mxu0 0
    %2310 = vmatpush2.bf16.xpose.msra.mxu0 0
    %2311 = vmatprep.subr.bf16.mxu0 0
    %2312 = vmatpush2.bf16.xpose.msra.mxu0 0
    %2313 = vmatprep.subr.bf16.mxu0 0
    %2314 = vmatpush2.bf16.xpose.msra.mxu0 0
    %2315 = vmatprep.subr.bf16.mxu0 0
    %2316 = vmatpush2.bf16.xpose.msra.mxu0 0
    %2317 = vmatprep.mubr.bf16.mxu0 0
    %2318 = vmatmul.mubr.bf16.gmra.mxu0 %v2280
    %v2319 = vpop.f32.mrf.mxu0
    %v2320 = vadd.f32 0.0, %v2319
    %v2321 = vpop.f32.mrf.mxu0
    %v2322 = vpop.f32.mrf.mxu0
    %v2323 = vpop.f32.mrf.mxu0
    %2324 = vdwg.mxu0
    %2325 = vrot.lane.b32.xlu0 %v1604, 104
    %v2326 = vpop.permute.xlu0 %2325
    %2327 = vrot.lane.b32.xlu0 %v1604, 72
    %v2328 = vpop.permute.xlu0 %2327
    %v2330 = vsel %vm262, %v2326, 0
    %v2333 = vsel %vm262, %v2328, 0
    %2335 = vmatprep.subr.bf16.mxu0 0
    %2336 = vmatpush1.bf16.xpose.msra.mxu0 0
    %2337 = vmatprep.subr.bf16.mxu0 0
    %2338 = vmatpush1.bf16.xpose.msra.mxu0 0
    %2339 = vmatprep.subr.bf16.mxu0 0
    %2340 = vmatpush1.bf16.xpose.msra.mxu0 0
    %2341 = vmatprep.subr.bf16.mxu0 0
    %2342 = vmatpush1.bf16.xpose.msra.mxu0 0
    %2343 = vmatprep.subr.bf16.mxu0 0
    %2344 = vmatpush1.bf16.xpose.msra.mxu0 0
    %2345 = vmatprep.subr.bf16.mxu0 0
    %2346 = vmatpush1.bf16.xpose.msra.mxu0 0
    %2347 = vmatprep.subr.bf16.mxu0 0
    %2348 = vmatpush1.bf16.xpose.msra.mxu0 0
    %2349 = vmatprep.subr.bf16.mxu0 0
    %2350 = vmatpush1.bf16.xpose.msra.mxu0 %v2333
    %2351 = vmatprep.subr.bf16.mxu0 0
    %2352 = vmatpush2.bf16.xpose.msra.mxu0 0
    %2353 = vmatprep.subr.bf16.mxu0 0
    %2354 = vmatpush2.bf16.xpose.msra.mxu0 0
    %2355 = vmatprep.subr.bf16.mxu0 0
    %2356 = vmatpush2.bf16.xpose.msra.mxu0 0
    %2357 = vmatprep.subr.bf16.mxu0 0
    %2358 = vmatpush2.bf16.xpose.msra.mxu0 0
    %2359 = vmatprep.subr.bf16.mxu0 0
    %2360 = vmatpush2.bf16.xpose.msra.mxu0 0
    %2361 = vmatprep.subr.bf16.mxu0 0
    %2362 = vmatpush2.bf16.xpose.msra.mxu0 0
    %2363 = vmatprep.subr.bf16.mxu0 0
    %2364 = vmatpush2.bf16.xpose.msra.mxu0 0
    %2365 = vmatprep.subr.bf16.mxu0 0
    %2366 = vmatpush2.bf16.xpose.msra.mxu0 0
    %2367 = vmatprep.mubr.bf16.mxu0 0
    %2368 = vmatmul.mubr.bf16.gmra.mxu0 %v2330
    %v2369 = vpop.f32.mrf.mxu0
    %v2370 = vadd.f32 0.0, %v2369
    %v2371 = vpop.f32.mrf.mxu0
    %v2372 = vpop.f32.mrf.mxu0
    %v2373 = vpop.f32.mrf.mxu0
    %2374 = vdwg.mxu0
    %v2375 = vmul.f32 %v2320, 0.35355338
    %v2376 = vmul.f32 %v2370, 0.35355338
    %v2377 = vadd.f32 %v2375, %v148
    %v2378 = vadd.f32 %v2376, %v148
    %v2379 = vsel %vm262, %v2377, -inf
    %2380 = vmax.xlane.f32.xlu0 %v2379
    %v2381 = vpop.xlane.xlu0 %2380
    %v2382 = vsel %vm262, %v2378, -inf
    %2383 = vmax.xlane.f32.xlu0 %v2382
    %v2384 = vpop.xlane.xlu0 %2383
    %v2385 = vsub.f32 %v2377, %v2381
    %v2386 = vsub.f32 %v2378, %v2384
    %v2387 = vmul.f32 %v2385, 1.442695
    %v2388 = vpow.pop %v2387
    %v2389 = vmul.f32 %v2386, 1.442695
    %v2390 = vpow.pop %v2389
    %v2391 = vsel %vm262, %v2388, 0.0
    %2392 = vadd.xlane.f32.xlu0 %v2391
    %v2393 = vpop.xlane.xlu0 %2392
    %v2394 = vsel %vm262, %v2390, 0.0
    %2395 = vadd.xlane.f32.xlu0 %v2394
    %v2396 = vpop.xlane.xlu0 %2395
    %v2397 = vrcp.pop %v2393
    %v2398 = vrcp.pop %v2396
    %v2399 = vmul.f32 %v2388, %v2397
    %v2400 = vmul.f32 %v2390, %v2398
    %v2401 = vpack.c.bf16 %v2399, %v2399
    %v2402 = vpack.c.bf16 %v2400, %v2400
    %2403 = vrot.lane.b32.xlu0 %v1603, 40
    %v2404 = vpop.permute.xlu0 %2403
    %v2406 = vsel %vm262, %v2401, 0
    %v2409 = vsel %vm391, %v2404, 0
    %2411 = vmatprep.subr.bf16.mxu0 0
    %2412 = vmatpush1.bf16.msra.mxu0 0
    %2413 = vmatprep.subr.bf16.mxu0 0
    %2414 = vmatpush1.bf16.msra.mxu0 0
    %2415 = vmatprep.subr.bf16.mxu0 0
    %2416 = vmatpush1.bf16.msra.mxu0 0
    %2417 = vmatprep.subr.bf16.mxu0 0
    %2418 = vmatpush1.bf16.msra.mxu0 0
    %2419 = vmatprep.subr.bf16.mxu0 0
    %2420 = vmatpush1.bf16.msra.mxu0 0
    %2421 = vmatprep.subr.bf16.mxu0 0
    %2422 = vmatpush1.bf16.msra.mxu0 0
    %2423 = vmatprep.subr.bf16.mxu0 0
    %2424 = vmatpush1.bf16.msra.mxu0 0
    %2425 = vmatprep.subr.bf16.mxu0 0
    %2426 = vmatpush1.bf16.msra.mxu0 %v2409
    %2427 = vmatprep.subr.bf16.mxu0 0
    %2428 = vmatpush2.bf16.msra.mxu0 0
    %2429 = vmatprep.subr.bf16.mxu0 0
    %2430 = vmatpush2.bf16.msra.mxu0 0
    %2431 = vmatprep.subr.bf16.mxu0 0
    %2432 = vmatpush2.bf16.msra.mxu0 0
    %2433 = vmatprep.subr.bf16.mxu0 0
    %2434 = vmatpush2.bf16.msra.mxu0 0
    %2435 = vmatprep.subr.bf16.mxu0 0
    %2436 = vmatpush2.bf16.msra.mxu0 0
    %2437 = vmatprep.subr.bf16.mxu0 0
    %2438 = vmatpush2.bf16.msra.mxu0 0
    %2439 = vmatprep.subr.bf16.mxu0 0
    %2440 = vmatpush2.bf16.msra.mxu0 0
    %2441 = vmatprep.subr.bf16.mxu0 0
    %2442 = vmatpush2.bf16.msra.mxu0 0
    %2443 = vmatprep.mubr.bf16.mxu0 0
    %2444 = vmatmul.mubr.bf16.gmra.mxu0 %v2406
    %v2445 = vpop.f32.mrf.mxu0
    %v2446 = vadd.f32 0.0, %v2445
    %v2447 = vpop.f32.mrf.mxu0
    %v2448 = vpop.f32.mrf.mxu0
    %v2449 = vpop.f32.mrf.mxu0
    %2450 = vdwg.mxu0
    %2451 = vrot.lane.b32.xlu0 %v1604, 40
    %v2452 = vpop.permute.xlu0 %2451
    %v2454 = vsel %vm262, %v2402, 0
    %v2457 = vsel %vm391, %v2452, 0
    %2459 = vmatprep.subr.bf16.mxu0 0
    %2460 = vmatpush1.bf16.msra.mxu0 0
    %2461 = vmatprep.subr.bf16.mxu0 0
    %2462 = vmatpush1.bf16.msra.mxu0 0
    %2463 = vmatprep.subr.bf16.mxu0 0
    %2464 = vmatpush1.bf16.msra.mxu0 0
    %2465 = vmatprep.subr.bf16.mxu0 0
    %2466 = vmatpush1.bf16.msra.mxu0 0
    %2467 = vmatprep.subr.bf16.mxu0 0
    %2468 = vmatpush1.bf16.msra.mxu0 0
    %2469 = vmatprep.subr.bf16.mxu0 0
    %2470 = vmatpush1.bf16.msra.mxu0 0
    %2471 = vmatprep.subr.bf16.mxu0 0
    %2472 = vmatpush1.bf16.msra.mxu0 0
    %2473 = vmatprep.subr.bf16.mxu0 0
    %2474 = vmatpush1.bf16.msra.mxu0 %v2457
    %2475 = vmatprep.subr.bf16.mxu0 0
    %2476 = vmatpush2.bf16.msra.mxu0 0
    %2477 = vmatprep.subr.bf16.mxu0 0
    %2478 = vmatpush2.bf16.msra.mxu0 0
    %2479 = vmatprep.subr.bf16.mxu0 0
    %2480 = vmatpush2.bf16.msra.mxu0 0
    %2481 = vmatprep.subr.bf16.mxu0 0
    %2482 = vmatpush2.bf16.msra.mxu0 0
    %2483 = vmatprep.subr.bf16.mxu0 0
    %2484 = vmatpush2.bf16.msra.mxu0 0
    %2485 = vmatprep.subr.bf16.mxu0 0
    %2486 = vmatpush2.bf16.msra.mxu0 0
    %2487 = vmatprep.subr.bf16.mxu0 0
    %2488 = vmatpush2.bf16.msra.mxu0 0
    %2489 = vmatprep.subr.bf16.mxu0 0
    %2490 = vmatpush2.bf16.msra.mxu0 0
    %2491 = vmatprep.mubr.bf16.mxu0 0
    %2492 = vmatmul.mubr.bf16.gmra.mxu0 %v2454
    %v2493 = vpop.f32.mrf.mxu0
    %v2494 = vadd.f32 0.0, %v2493
    %v2495 = vpop.f32.mrf.mxu0
    %v2496 = vpop.f32.mrf.mxu0
    %v2497 = vpop.f32.mrf.mxu0
    %2498 = vdwg.mxu0
    %2501 = vrot.lane.b32.xlu0 %v1998, 8
    %v2502 = vpop.permute.xlu0 %2501
    %2503 = vrot.lane.b32.xlu0 %v2046, 8
    %v2504 = vpop.permute.xlu0 %2503
    %2509 = vrot.lane.b32.xlu0 %v2222, 16
    %v2510 = vpop.permute.xlu0 %2509
    %2511 = vrot.lane.b32.xlu0 %v2270, 16
    %v2512 = vpop.permute.xlu0 %2511
    %2517 = vrot.lane.b32.xlu0 %v2446, 24
    %v2518 = vpop.permute.xlu0 %2517
    %2519 = vrot.lane.b32.xlu0 %v2494, 24
    %v2520 = vpop.permute.xlu0 %2519
    %v2523 = vsel %vm262, %v1774, %v2502
    %v2524 = vsel %vm262, %v1822, %v2504
    %v2525 = vsel %vm1181, %v2523, %v2510
    %v2526 = vsel %vm1181, %v2524, %v2512
    %v2527 = vsel %vm1184, %v2525, %v2518
    %v2528 = vsel %vm1184, %v2526, %v2520
    %s2529 = scalar_lea.vmem %s3, 16
    %v2530 = vld [vmem:[%s2529] sm:$0xf]
    %v2531 = vld [vmem:[%s2529 + $0x4] sm:$0xf]
    %v2532 = vld [vmem:[%s2529 + $0x8] sm:$0xf]
    %v2533 = vld [vmem:[%s2529 + $0xc] sm:$0xf]
    %v2534 = vpack.c.bf16 %v2528, %v2527
    %v2539 = vunpack.c.l.b16 %v2530
    %v2540 = vunpack.c.l.b16 %v2531
    %v2541 = vunpack.c.l.b16 %v2532
    %v2542 = vunpack.c.l.b16 %v2533
    %v2543 = vpack.c.b16 %v2540, %v2539
    %v2544 = vpack.c.b16 %v2542, %v2541
    %v2548 = vsel %vm151, %v2534, 0
    %2550 = vmatprep.subr.bf16.mxu0 0
    %2551 = vmatpush1.bf16.msra.mxu0 0
    %2552 = vmatprep.subr.bf16.mxu0 0
    %2553 = vmatpush1.bf16.msra.mxu0 0
    %2554 = vmatprep.subr.bf16.mxu0 0
    %2555 = vmatpush1.bf16.msra.mxu0 0
    %2556 = vmatprep.subr.bf16.mxu0 0
    %2557 = vmatpush1.bf16.msra.mxu0 0
    %2558 = vmatprep.subr.bf16.mxu0 0
    %2559 = vmatpush1.bf16.msra.mxu0 0
    %2560 = vmatprep.subr.bf16.mxu0 0
    %2561 = vmatpush1.bf16.msra.mxu0 0
    %2562 = vmatprep.subr.bf16.mxu0 0
    %2563 = vmatpush1.bf16.msra.mxu0 %v2544
    %2564 = vmatprep.subr.bf16.mxu0 0
    %2565 = vmatpush1.bf16.msra.mxu0 %v2543
    %2566 = vmatprep.subr.bf16.mxu0 0
    %2567 = vmatpush2.bf16.msra.mxu0 0
    %2568 = vmatprep.subr.bf16.mxu0 0
    %2569 = vmatpush2.bf16.msra.mxu0 0
    %2570 = vmatprep.subr.bf16.mxu0 0
    %2571 = vmatpush2.bf16.msra.mxu0 0
    %2572 = vmatprep.subr.bf16.mxu0 0
    %2573 = vmatpush2.bf16.msra.mxu0 0
    %2574 = vmatprep.subr.bf16.mxu0 0
    %2575 = vmatpush2.bf16.msra.mxu0 0
    %2576 = vmatprep.subr.bf16.mxu0 0
    %2577 = vmatpush2.bf16.msra.mxu0 0
    %2578 = vmatprep.subr.bf16.mxu0 0
    %2579 = vmatpush2.bf16.msra.mxu0 0
    %2580 = vmatprep.subr.bf16.mxu0 0
    %2581 = vmatpush2.bf16.msra.mxu0 0
    %2582 = vmatprep.mubr.bf16.mxu0 0
    %2583 = vmatmul.mubr.bf16.gmra.mxu0 %v2548
    %v2584 = vpop.f32.mrf.mxu0
    %v2585 = vadd.f32 0.0, %v2584
    %v2586 = vpop.f32.mrf.mxu0
    %v2587 = vpop.f32.mrf.mxu0
    %v2588 = vadd.f32 0.0, %v2587
    %v2589 = vpop.f32.mrf.mxu0
    %2590 = vdwg.mxu0
    %v2591 = vadd.f32 %v1494, %v2585
    %v2592 = vadd.f32 %v1495, %v2588
    %v2593 = vld [vmem:[%s6 + $0xb] sm:$0x1]
    %v2594 = vlaneseq
    %v2595 = vshrl.u32 %v2594, 7
    %v2596 = vsub.s32 0, %v2595
    %v2597 = vrot.slane %v2593, %v2596
    %v2598 = vadd.f32 %v2591, %v2597
    %v2599 = vadd.f32 %v2592, %v2597
    %v2600 = vld [vmem:[%s6 + $0xc] sm:$0x1]
    %v2601 = vld [vmem:[%s6 + $0xd] sm:$0x1]
    %v2602 = vsel %vm151, %v2598, 0.0
    %2603 = vadd.xlane.f32.xlu0 %v2602
    %v2604 = vpop.xlane.xlu0 %2603
    %v2605 = vsel %vm151, %v2599, 0.0
    %2606 = vadd.xlane.f32.xlu0 %v2605
    %v2607 = vpop.xlane.xlu0 %2606
    %v2608 = vmul.f32 %v2604, %v158
    %v2609 = vmul.f32 %v2607, %v158
    %v2610 = vsub.f32 %v2598, %v2608
    %v2611 = vsub.f32 %v2599, %v2609
    %v2612 = vmul.f32 %v2610, %v2610
    %v2613 = vmul.f32 %v2611, %v2611
    %v2614 = vsel %vm151, %v2612, 0.0
    %2615 = vadd.xlane.f32.xlu0 %v2614
    %v2616 = vpop.xlane.xlu0 %2615
    %v2617 = vsel %vm151, %v2613, 0.0
    %2618 = vadd.xlane.f32.xlu0 %v2617
    %v2619 = vpop.xlane.xlu0 %2618
    %v2620 = vmul.f32 %v2616, %v158
    %v2621 = vmul.f32 %v2619, %v158
    %v2622 = vadd.f32 %v2620, 1e-05
    %v2623 = vadd.f32 %v2621, 1e-05
    %v2624 = vrsqrt.pop %v2622
    %v2625 = vrsqrt.pop %v2623
    %v2626 = vmul.f32 %v2610, %v2624
    %v2627 = vmul.f32 %v2611, %v2625
    %v2628 = vlaneseq
    %v2629 = vshrl.u32 %v2628, 7
    %v2630 = vsub.s32 0, %v2629
    %v2631 = vrot.slane %v2600, %v2630
    %v2632 = vmul.f32 %v2626, %v2631
    %v2633 = vmul.f32 %v2627, %v2631
    %v2634 = vlaneseq
    %v2635 = vshrl.u32 %v2634, 7
    %v2636 = vsub.s32 0, %v2635
    %v2637 = vrot.slane %v2601, %v2636
    %v2638 = vadd.f32 %v2632, %v2637
    %v2639 = vadd.f32 %v2633, %v2637
    %s2640 = scalar_lea.vmem %s4, 16
    %v2641 = vld [vmem:[%s2640] sm:$0xf]
    %v2642 = vld [vmem:[%s2640 + $0x4] sm:$0xf]
    %v2643 = vld [vmem:[%s2640 + $0x8] sm:$0xf]
    %v2644 = vld [vmem:[%s2640 + $0xc] sm:$0xf]
    %v2645 = vpack.c.bf16 %v2639, %v2638
    %v2646 = vld [vmem:[%s6 + $0xe] sm:$0x1]
    %v2647 = vlaneseq
    %v2648 = vshrl.u32 %v2647, 7
    %v2649 = vsub.s32 0, %v2648
    %v2650 = vrot.slane %v2646, %v2649
    %v2655 = vunpack.c.l.b16 %v2641
    %v2656 = vunpack.c.l.b16 %v2642
    %v2657 = vunpack.c.l.b16 %v2643
    %v2658 = vunpack.c.l.b16 %v2644
    %v2659 = vpack.c.b16 %v2656, %v2655
    %v2660 = vpack.c.b16 %v2658, %v2657
    %v2664 = vsel %vm151, %v2645, 0
    %2666 = vmatprep.subr.bf16.mxu0 0
    %2667 = vmatpush1.bf16.msra.mxu0 0
    %2668 = vmatprep.subr.bf16.mxu0 0
    %2669 = vmatpush1.bf16.msra.mxu0 0
    %2670 = vmatprep.subr.bf16.mxu0 0
    %2671 = vmatpush1.bf16.msra.mxu0 0
    %2672 = vmatprep.subr.bf16.mxu0 0
    %2673 = vmatpush1.bf16.msra.mxu0 0
    %2674 = vmatprep.subr.bf16.mxu0 0
    %2675 = vmatpush1.bf16.msra.mxu0 0
    %2676 = vmatprep.subr.bf16.mxu0 0
    %2677 = vmatpush1.bf16.msra.mxu0 0
    %2678 = vmatprep.subr.bf16.mxu0 0
    %2679 = vmatpush1.bf16.msra.mxu0 %v2660
    %2680 = vmatprep.subr.bf16.mxu0 0
    %2681 = vmatpush1.bf16.msra.mxu0 %v2659
    %2682 = vmatprep.subr.bf16.mxu0 0
    %2683 = vmatpush2.bf16.msra.mxu0 0
    %2684 = vmatprep.subr.bf16.mxu0 0
    %2685 = vmatpush2.bf16.msra.mxu0 0
    %2686 = vmatprep.subr.bf16.mxu0 0
    %2687 = vmatpush2.bf16.msra.mxu0 0
    %2688 = vmatprep.subr.bf16.mxu0 0
    %2689 = vmatpush2.bf16.msra.mxu0 0
    %2690 = vmatprep.subr.bf16.mxu0 0
    %2691 = vmatpush2.bf16.msra.mxu0 0
    %2692 = vmatprep.subr.bf16.mxu0 0
    %2693 = vmatpush2.bf16.msra.mxu0 0
    %2694 = vmatprep.subr.bf16.mxu0 0
    %2695 = vmatpush2.bf16.msra.mxu0 0
    %2696 = vmatprep.subr.bf16.mxu0 0
    %2697 = vmatpush2.bf16.msra.mxu0 0
    %2698 = vmatprep.mubr.bf16.mxu0 0
    %2699 = vmatmul.mubr.bf16.gmra.mxu0 %v2664
    %v2700 = vpop.f32.mrf.mxu0
    %v2701 = vadd.f32 %v2650, %v2700
    %v2702 = vpop.f32.mrf.mxu0
    %v2703 = vpop.f32.mrf.mxu0
    %v2704 = vadd.f32 %v2650, %v2703
    %v2705 = vpop.f32.mrf.mxu0
    %2706 = vdwg.mxu0
    %v2707 = vmul.f32 %v2701, %v2701
    %v2708 = vmul.f32 %v2704, %v2704
    %v2709 = vmul.f32 %v2701, %v2707
    %v2710 = vmul.f32 %v2704, %v2708
    %v2711 = vmul.f32 %v2709, 0.044715
    %v2712 = vmul.f32 %v2710, 0.044715
    %v2713 = vadd.f32 %v2701, %v2711
    %v2714 = vadd.f32 %v2704, %v2712
    %v2715 = vmul.f32 %v2713, 0.7978846
    %v2716 = vmul.f32 %v2714, 0.7978846
    %v2717 = vtanh.pop %v2715
    %v2718 = vtanh.pop %v2716
    %v2719 = vadd.f32 %v2717, 1.0
    %v2720 = vadd.f32 %v2718, 1.0
    %v2721 = vmul.f32 %v2719, 0.5
    %v2722 = vmul.f32 %v2720, 0.5
    %v2723 = vmul.f32 %v2701, %v2721
    %v2724 = vmul.f32 %v2704, %v2722
    %s2725 = scalar_lea.vmem %s5, 64
    %v2726 = vld [vmem:[%s2725] sm:$0xf]
    %v2727 = vld [vmem:[%s2725 + $0x4] sm:$0xf]
    %v2728 = vld [vmem:[%s2725 + $0x8] sm:$0xf]
    %v2729 = vld [vmem:[%s2725 + $0xc] sm:$0xf]
    %v2730 = vld [vmem:[%s2725 + $0x10] sm:$0xf]
    %v2731 = vld [vmem:[%s2725 + $0x14] sm:$0xf]
    %v2732 = vld [vmem:[%s2725 + $0x18] sm:$0xf]
    %v2733 = vld [vmem:[%s2725 + $0x1c] sm:$0xf]
    %v2734 = vld [vmem:[%s2725 + $0x20] sm:$0xf]
    %v2735 = vld [vmem:[%s2725 + $0x24] sm:$0xf]
    %v2736 = vld [vmem:[%s2725 + $0x28] sm:$0xf]
    %v2737 = vld [vmem:[%s2725 + $0x2c] sm:$0xf]
    %v2738 = vld [vmem:[%s2725 + $0x30] sm:$0xf]
    %v2739 = vld [vmem:[%s2725 + $0x34] sm:$0xf]
    %v2740 = vld [vmem:[%s2725 + $0x38] sm:$0xf]
    %v2741 = vld [vmem:[%s2725 + $0x3c] sm:$0xf]
    %v2742 = vpack.c.bf16 %v2724, %v2723
    %v2759 = vunpack.c.l.b16 %v2726
    %v2760 = vunpack.c.l.b16 %v2727
    %v2761 = vunpack.c.l.b16 %v2728
    %v2762 = vunpack.c.l.b16 %v2729
    %v2763 = vunpack.c.l.b16 %v2730
    %v2764 = vunpack.c.l.b16 %v2731
    %v2765 = vunpack.c.l.b16 %v2732
    %v2766 = vunpack.c.l.b16 %v2733
    %v2767 = vunpack.c.l.b16 %v2734
    %v2768 = vunpack.c.l.b16 %v2735
    %v2769 = vunpack.c.l.b16 %v2736
    %v2770 = vunpack.c.l.b16 %v2737
    %v2771 = vunpack.c.l.b16 %v2738
    %v2772 = vunpack.c.l.b16 %v2739
    %v2773 = vunpack.c.l.b16 %v2740
    %v2774 = vunpack.c.l.b16 %v2741
    %v2775 = vpack.c.b16 %v2760, %v2759
    %v2776 = vpack.c.b16 %v2762, %v2761
    %v2777 = vpack.c.b16 %v2764, %v2763
    %v2778 = vpack.c.b16 %v2766, %v2765
    %v2779 = vpack.c.b16 %v2768, %v2767
    %v2780 = vpack.c.b16 %v2770, %v2769
    %v2781 = vpack.c.b16 %v2772, %v2771
    %v2782 = vpack.c.b16 %v2774, %v2773
    %2791 = vmatprep.subr.bf16.mxu0 0
    %2792 = vmatpush1.bf16.msra.mxu0 %v2782
    %2793 = vmatprep.subr.bf16.mxu0 0
    %2794 = vmatpush1.bf16.msra.mxu0 %v2781
    %2795 = vmatprep.subr.bf16.mxu0 0
    %2796 = vmatpush1.bf16.msra.mxu0 %v2780
    %2797 = vmatprep.subr.bf16.mxu0 0
    %2798 = vmatpush1.bf16.msra.mxu0 %v2779
    %2799 = vmatprep.subr.bf16.mxu0 0
    %2800 = vmatpush1.bf16.msra.mxu0 %v2778
    %2801 = vmatprep.subr.bf16.mxu0 0
    %2802 = vmatpush1.bf16.msra.mxu0 %v2777
    %2803 = vmatprep.subr.bf16.mxu0 0
    %2804 = vmatpush1.bf16.msra.mxu0 %v2776
    %2805 = vmatprep.subr.bf16.mxu0 0
    %2806 = vmatpush1.bf16.msra.mxu0 %v2775
    %2807 = vmatprep.subr.bf16.mxu0 0
    %2808 = vmatpush2.bf16.msra.mxu0 0
    %2809 = vmatprep.subr.bf16.mxu0 0
    %2810 = vmatpush2.bf16.msra.mxu0 0
    %2811 = vmatprep.subr.bf16.mxu0 0
    %2812 = vmatpush2.bf16.msra.mxu0 0
    %2813 = vmatprep.subr.bf16.mxu0 0
    %2814 = vmatpush2.bf16.msra.mxu0 0
    %2815 = vmatprep.subr.bf16.mxu0 0
    %2816 = vmatpush2.bf16.msra.mxu0 0
    %2817 = vmatprep.subr.bf16.mxu0 0
    %2818 = vmatpush2.bf16.msra.mxu0 0
    %2819 = vmatprep.subr.bf16.mxu0 0
    %2820 = vmatpush2.bf16.msra.mxu0 0
    %2821 = vmatprep.subr.bf16.mxu0 0
    %2822 = vmatpush2.bf16.msra.mxu0 0
    %2823 = vmatprep.mubr.bf16.mxu0 0
    %2824 = vmatmul.mubr.bf16.gmra.mxu0 %v2742
    %v2825 = vpop.f32.mrf.mxu0
    %v2826 = vadd.f32 0.0, %v2825
    %v2827 = vpop.f32.mrf.mxu0
    %v2828 = vpop.f32.mrf.mxu0
    %v2829 = vadd.f32 0.0, %v2828
    %v2830 = vpop.f32.mrf.mxu0
    %2831 = vdwg.mxu0
    %v2832 = vadd.f32 %v2598, %v2826
    %v2833 = vadd.f32 %v2599, %v2829
    %v2834 = vld [vmem:[%s6 + $0xf] sm:$0x1]
    %v2835 = vlaneseq
    %v2836 = vshrl.u32 %v2835, 7
    %v2837 = vsub.s32 0, %v2836
    %v2838 = vrot.slane %v2834, %v2837
    %v2839 = vadd.f32 %v2832, %v2838
    %v2840 = vadd.f32 %v2833, %v2838
    %v2841 = vld [vmem:[%s6 + $0x10] sm:$0x1]
    %v2842 = vld [vmem:[%s6 + $0x11] sm:$0x1]
    %v2843 = vsel %vm151, %v2839, 0.0
    %2844 = vadd.xlane.f32.xlu0 %v2843
    %v2845 = vpop.xlane.xlu0 %2844
    %v2846 = vsel %vm151, %v2840, 0.0
    %2847 = vadd.xlane.f32.xlu0 %v2846
    %v2848 = vpop.xlane.xlu0 %2847
    %v2849 = vmul.f32 %v2845, %v158
    %v2850 = vmul.f32 %v2848, %v158
    %v2851 = vsub.f32 %v2839, %v2849
    %v2852 = vsub.f32 %v2840, %v2850
    %v2853 = vmul.f32 %v2851, %v2851
    %v2854 = vmul.f32 %v2852, %v2852
    %v2855 = vsel %vm151, %v2853, 0.0
    %2856 = vadd.xlane.f32.xlu0 %v2855
    %v2857 = vpop.xlane.xlu0 %2856
    %v2858 = vsel %vm151, %v2854, 0.0
    %2859 = vadd.xlane.f32.xlu0 %v2858
    %v2860 = vpop.xlane.xlu0 %2859
    %v2861 = vmul.f32 %v2857, %v158
    %v2862 = vmul.f32 %v2860, %v158
    %v2863 = vadd.f32 %v2861, 1e-05
    %v2864 = vadd.f32 %v2862, 1e-05
    %v2865 = vrsqrt.pop %v2863
    %v2866 = vrsqrt.pop %v2864
    %v2867 = vmul.f32 %v2851, %v2865
    %v2868 = vmul.f32 %v2852, %v2866
    %v2869 = vlaneseq
    %v2870 = vshrl.u32 %v2869, 7
    %v2871 = vsub.s32 0, %v2870
    %v2872 = vrot.slane %v2841, %v2871
    %v2873 = vmul.f32 %v2867, %v2872
    %v2874 = vmul.f32 %v2868, %v2872
    %v2875 = vlaneseq
    %v2876 = vshrl.u32 %v2875, 7
    %v2877 = vsub.s32 0, %v2876
    %v2878 = vrot.slane %v2842, %v2877
    %v2879 = vadd.f32 %v2873, %v2878
    %v2880 = vadd.f32 %v2874, %v2878
    %v2881 = vld [vmem:[%s7] sm:$0xf]
    %v2882 = vld [vmem:[%s7 + $0x4] sm:$0xf]
    %v2883 = vld [vmem:[%s7 + $0x8] sm:$0xf]
    %v2884 = vld [vmem:[%s7 + $0xc] sm:$0xf]
    %v2885 = vpack.c.bf16 %v2880, %v2879
    %v2890 = vunpack.c.l.b16 %v2881
    %v2891 = vunpack.c.l.b16 %v2882
    %v2892 = vunpack.c.l.b16 %v2883
    %v2893 = vunpack.c.l.b16 %v2884
    %v2894 = vpack.c.b16 %v2891, %v2890
    %v2895 = vpack.c.b16 %v2893, %v2892
    %v2899 = vsel %vm151, %v2885, 0
    %2901 = vmatprep.subr.bf16.mxu0 0
    %2902 = vmatpush1.bf16.msra.mxu0 0
    %2903 = vmatprep.subr.bf16.mxu0 0
    %2904 = vmatpush1.bf16.msra.mxu0 0
    %2905 = vmatprep.subr.bf16.mxu0 0
    %2906 = vmatpush1.bf16.msra.mxu0 0
    %2907 = vmatprep.subr.bf16.mxu0 0
    %2908 = vmatpush1.bf16.msra.mxu0 0
    %2909 = vmatprep.subr.bf16.mxu0 0
    %2910 = vmatpush1.bf16.msra.mxu0 0
    %2911 = vmatprep.subr.bf16.mxu0 0
    %2912 = vmatpush1.bf16.msra.mxu0 0
    %2913 = vmatprep.subr.bf16.mxu0 0
    %2914 = vmatpush1.bf16.msra.mxu0 %v2895
    %2915 = vmatprep.subr.bf16.mxu0 0
    %2916 = vmatpush1.bf16.msra.mxu0 %v2894
    %2917 = vmatprep.subr.bf16.mxu0 0
    %2918 = vmatpush2.bf16.msra.mxu0 0
    %2919 = vmatprep.subr.bf16.mxu0 0
    %2920 = vmatpush2.bf16.msra.mxu0 0
    %2921 = vmatprep.subr.bf16.mxu0 0
    %2922 = vmatpush2.bf16.msra.mxu0 0
    %2923 = vmatprep.subr.bf16.mxu0 0
    %2924 = vmatpush2.bf16.msra.mxu0 0
    %2925 = vmatprep.subr.bf16.mxu0 0
    %2926 = vmatpush2.bf16.msra.mxu0 0
    %2927 = vmatprep.subr.bf16.mxu0 0
    %2928 = vmatpush2.bf16.msra.mxu0 0
    %2929 = vmatprep.subr.bf16.mxu0 0
    %2930 = vmatpush2.bf16.msra.mxu0 0
    %2931 = vmatprep.subr.bf16.mxu0 0
    %2932 = vmatpush2.bf16.msra.mxu0 0
    %2933 = vmatprep.mubr.bf16.mxu0 0
    %2934 = vmatmul.mubr.bf16.gmra.mxu0 %v2899
    %v2935 = vpop.f32.mrf.mxu0
    %v2936 = vadd.f32 0.0, %v2935
    %v2937 = vpop.f32.mrf.mxu0
    %v2938 = vpop.f32.mrf.mxu0
    %v2939 = vadd.f32 0.0, %v2938
    %v2940 = vpop.f32.mrf.mxu0
    %2941 = vdwg.mxu0
    %2942 = vst [vmem:[#allocation2] sm:$0xff] %v2936
    %2943 = vst [vmem:[#allocation2 + $0x8] sm:$0xff] %v2939
    // Predicated region
    $region34: #{run_transformer_lm_head.1} parent=1 // pred_check
      _
    $region35: #{run_transformer_lm_head.1} parent=1 // pred_check_branch
      %2945 = sbr.rel (0) target = $region37
    $region36: #{run_transformer_lm_head.1} parent=1 // pred_region
      %s2947 = ssub.s32 256, 256
      %2948 = vsyncadd [#allocation3], %s2947
      %s2949 = sshll.u32 [#allocation2], 4
      %s2950 = int_to_ptr.vmem [resolvable:$true] %s2949
      %2955 = dma.vmem_to_hbm [thread:$0]  %s2950, 256, %s8, [#allocation3], 128, 128, 8
    $region37: #{run_transformer_lm_head.1} parent=1 // pred_fallthru
      _
    // Predicated region
    $region38: #{run_transformer_lm_head.1} parent=1 // pred_check
      _
    $region39: #{run_transformer_lm_head.1} parent=1 // pred_check_branch
      %2957 = sbr.rel (0) target = $region41
    $region40: #{run_transformer_lm_head.1} parent=1 // pred_region
      %2958 = dma.done [#allocation3], 256
    $region41: #{run_transformer_lm_head.1} parent=1 // pred_fallthru
      _
    %2959 = vsyncpa [#allocation3], 1

</llo_original>
